<compile_context>
chip_gen: v6e
topology: v6e:2x2x1
jax: 0.10.0
libtpu: 0.0.40
codegen_flags: <defaults>
</compile_context>

<pallas_src>
import functools

import jax
import jax.numpy as jnp
from jax.experimental import pallas as pl
from jax.experimental.pallas import tpu as pltpu

# ---------------- model hyper-parameters (scaled-down VidMAE) ----------------
EMBED = 32          # embed_dims (orig 384)
DEPTH = 2           # transformer depth (orig 12)
HEADS = 2           # num_heads (orig 6)
HEAD_DIM = EMBED // HEADS
MLP_HIDDEN = 4 * EMBED
NUM_FRAMES = 4      # orig 24
TUBELET = 2
PATCH = 8
IMG = 16
IN_CH = 3
NUM_CLASSES = 10
NUM_CLASSES_PAD = 128                                                  # lane-dense head output
N_TOKENS = (NUM_FRAMES // TUBELET) * (IMG // PATCH) * (IMG // PATCH)   # 8
PATCH_DIM = IN_CH * TUBELET * PATCH * PATCH                            # 384
LN_EPS = 1e-6
EXACT_SOFTMAX = False   # True -> exact divide; False -> EUP approx reciprocal


# ------------------------------ Pallas kernel --------------------------------
def _layernorm(x, g, b):
    # single-pass moments (E[x], E[x^2]) instead of two dependent reduce passes
    mu = jnp.mean(x, axis=-1, keepdims=True)
    ms = jnp.mean(x * x, axis=-1, keepdims=True)
    var = ms - mu * mu
    return (x - mu) * jax.lax.rsqrt(var + LN_EPS) * g + b


def vidmae_fused_kernel(patches_ref, pw_ref, pb_ref, pos_ref,
                        g1_ref, b1_ref, wq_ref, bq_ref, wk_ref, bk_ref,
                        wvo_ref, bvo_ref, bo_ref,
                        g2_ref, b2_ref, w1_ref, bm1_ref, w2_ref, bm2_ref,
                        fng_ref, fnb_ref, fcw_ref, fcb_ref,
                        o_ref, *, depth, num_heads, n_tokens, embed):
    head_dim = embed // num_heads
    scale = float(head_dim) ** -0.5

    # ---- patch embed (Conv3d expressed as one matmul) + positional embed ----
    x = jnp.dot(patches_ref[0], pw_ref[...],
                preferred_element_type=jnp.float32)                 # [N, D]
    x = x + pb_ref[...] + pos_ref[...]

    # Static unroll is fine at depth=2 with all weights VMEM-resident.
    # TODO(synk): at the real config (depth=12, embed=384, ~1568 tokens) this
    #             must become a depth grid axis with streamed/double-buffered
    #             weights and flash-style KV tiling (v7x has only 64 MiB VMEM).
    for d in range(depth):
        # ---------------- MHSA (pre-norm, head-batched) ----------------
        xn = _layernorm(x, g1_ref[d], b1_ref[d])
        xh = jnp.broadcast_to(xn.astype(jnp.bfloat16)[None],
                              (num_heads, n_tokens, embed))          # [H, N, D]

        q = jnp.einsum('hnd,hdk->hnk', xh, wq_ref[d],
                       preferred_element_type=jnp.float32) + bq_ref[d]   # [H,N,hd]
        k = jnp.einsum('hnd,hdk->hnk', xh, wk_ref[d],
                       preferred_element_type=jnp.float32) + bk_ref[d]   # [H,N,hd]
        # V already folded through the output projection: Wvo_h = Wv_h @ Wo_h
        v = jnp.einsum('hnd,hde->hne', xh, wvo_ref[d],
                       preferred_element_type=jnp.float32) + bvo_ref[d]  # [H,N,D]

        s = jnp.einsum('hqc,hkc->hqk', q, k,
                       preferred_element_type=jnp.float32) * scale       # [H,N,N]
        # one row-max / row-sum reduction for the whole head-batched tensor
        s = s - jnp.max(s, axis=-1, keepdims=True)
        e = jnp.exp(s)
        denom = jnp.sum(e, axis=-1, keepdims=True)
        if EXACT_SOFTMAX:
            p = e / denom
        else:
            p = e * pl.reciprocal(denom, approx=True)      # EUP slot, ~free

        pv = jnp.einsum('hqk,hkd->hqd', p.astype(jnp.bfloat16),
                        v.astype(jnp.bfloat16),
                        preferred_element_type=jnp.float32)              # [H,N,D]
        x = x + jnp.sum(pv, axis=0) + bo_ref[d]            # head sum = concat@Wo

        # ---------------- MLP (pre-norm) ----------------
        xn2 = _layernorm(x, g2_ref[d], b2_ref[d])
        h1 = jnp.dot(xn2.astype(jnp.bfloat16), w1_ref[d],
                     preferred_element_type=jnp.float32) + bm1_ref[d]
        # TODO(synk): PyTorch nn.GELU default is the exact erf form; tanh
        #             approximation used here (TPU-friendly, small drift).
        h1 = jax.nn.gelu(h1, approximate=True)
        x = x + jnp.dot(h1.astype(jnp.bfloat16), w2_ref[d],
                        preferred_element_type=jnp.float32) + bm2_ref[d]

    # ---- head: mean-pool over tokens -> fc_norm -> Linear (lane-padded) ----
    pooled = jnp.mean(x, axis=0, keepdims=True)                          # [1, D]
    xf = _layernorm(pooled, fng_ref[...], fnb_ref[...])
    o_ref[0] = jnp.dot(xf.astype(jnp.bfloat16), fcw_ref[...],
                       preferred_element_type=jnp.float32) + fcb_ref[...]


# ------------------------------ pallas wrapper --------------------------------
def _replicated_spec(a):
    nd = a.ndim
    return pl.BlockSpec(a.shape, lambda b, _n=nd: (0,) * _n)


_ARG_KEYS = ('patch_w', 'patch_b', 'pos',
             'g1', 'b1', 'wq', 'bq', 'wk', 'bk', 'wvo', 'bvo', 'bo',
             'g2', 'b2', 'w1', 'bm1', 'w2', 'bm2',
             'fc_norm_g', 'fc_norm_b', 'fc_w', 'fc_b')


def vidmae_forward(x, params, dropout_ratio=0.0):
    # dropout_ratio == 0 -> self.dropout is None in the reference module, and
    # dropout is identity at inference anyway.
    B = x.shape[0]
    patches = patchify(x).astype(jnp.bfloat16)            # [B, N, PATCH_DIM]

    args = [patches] + [params[k] for k in _ARG_KEYS]

    kern = functools.partial(vidmae_fused_kernel, depth=DEPTH,
                             num_heads=HEADS, n_tokens=N_TOKENS, embed=EMBED)

    in_specs = ([pl.BlockSpec((1, N_TOKENS, PATCH_DIM), lambda b: (b, 0, 0))]
                + [_replicated_spec(a) for a in args[1:]])

    out = pl.pallas_call(
        kern,
        out_shape=jax.ShapeDtypeStruct((B, 1, NUM_CLASSES_PAD), jnp.float32),
        grid=(B,),                                   # one batch element / step
        in_specs=in_specs,
        out_specs=pl.BlockSpec((1, 1, NUM_CLASSES_PAD), lambda b: (b, 0, 0)),
        compiler_params=pltpu.CompilerParams(
            dimension_semantics=("parallel",)),      # v7x: one TC per element
    )(*args)

    return out[:, 0, :NUM_CLASSES]


# -------------------------------- glue (JAX) ----------------------------------
def patchify(x):
    # x: [B, C, T, H, W] -> [B, N_tokens, C*tubelet*patch*patch]
    B, C, T, H, W = x.shape
    Tp, Hp, Wp = T // TUBELET, H // PATCH, W // PATCH
    x = x.reshape(B, C, Tp, TUBELET, Hp, PATCH, Wp, PATCH)
    x = x.transpose(0, 2, 4, 6, 1, 3, 5, 7)   # B, Tp, Hp, Wp, C, t, p, p
    return x.reshape(B, Tp * Hp * Wp, C * TUBELET * PATCH * PATCH)


def sincos_pos_embed(n, d):
    pos = jnp.arange(n, dtype=jnp.float32)[:, None]
    dim = jnp.arange(d // 2, dtype=jnp.float32)[None, :]
    omega = 1.0 / (10000.0 ** (dim / (d / 2)))
    ang = pos * omega
    return jnp.concatenate([jnp.sin(ang), jnp.cos(ang)], axis=1)   # [n, d]


def init_params(key):
    ks = iter(jax.random.split(key, 16))

    def nrm(shape):
        return 0.02 * jax.random.normal(next(ks), shape, jnp.float32)

    # Raw (PyTorch-layout) attention weights, then folded to the kernel layout.
    wq_full = nrm((DEPTH, EMBED, EMBED))
    wk_full = nrm((DEPTH, EMBED, EMBED))
    wv_full = nrm((DEPTH, EMBED, EMBED))
    wo_full = nrm((DEPTH, EMBED, EMBED))
    bq_full = jnp.zeros((DEPTH, EMBED), jnp.float32)
    bk_full = jnp.zeros((DEPTH, EMBED), jnp.float32)
    bv_full = jnp.zeros((DEPTH, EMBED), jnp.float32)

    def to_heads(w):   # [depth, D, D] -> [depth, H, D, hd]
        return w.reshape(DEPTH, EMBED, HEADS, HEAD_DIM).transpose(0, 2, 1, 3)

    wq = to_heads(wq_full)
    wk = to_heads(wk_full)
    wv = to_heads(wv_full)                                          # [d,H,D,hd]
    wo_heads = wo_full.reshape(DEPTH, HEADS, HEAD_DIM, EMBED)       # [d,H,hd,D]

    # Offline fold of the per-head V projection into the output projection:
    #   Wvo_h = Wv_h @ Wo_h  ,  bvo_h = bv_h @ Wo_h   (exact algebraic identity)
    wvo = jnp.einsum('dhxk,dhky->dhxy', wv, wo_heads)               # [d,H,D,D]
    bv_heads = bv_full.reshape(DEPTH, HEADS, HEAD_DIM)
    bvo = jnp.einsum('dhk,dhky->dhy', bv_heads, wo_heads)[:, :, None, :]

    bq = bq_full.reshape(DEPTH, HEADS, 1, HEAD_DIM)
    bk = bk_full.reshape(DEPTH, HEADS, 1, HEAD_DIM)

    fc_w = jnp.zeros((EMBED, NUM_CLASSES_PAD), jnp.float32)
    fc_w = fc_w.at[:, :NUM_CLASSES].set(nrm((EMBED, NUM_CLASSES)))

    params = {
        # patch embed (matmul weights in bf16; biases/LN/pos in f32)
        'patch_w': nrm((PATCH_DIM, EMBED)).astype(jnp.bfloat16),
        'patch_b': jnp.zeros((1, EMBED), jnp.float32),
        'pos': sincos_pos_embed(N_TOKENS, EMBED).astype(jnp.float32),
        # transformer blocks, stacked along a leading depth axis
        'g1': jnp.ones((DEPTH, 1, EMBED), jnp.float32),
        'b1': jnp.zeros((DEPTH, 1, EMBED), jnp.float32),
        'wq': wq.astype(jnp.bfloat16), 'bq': bq,
        'wk': wk.astype(jnp.bfloat16), 'bk': bk,
        'wvo': wvo.astype(jnp.bfloat16), 'bvo': bvo,
        'bo': jnp.zeros((DEPTH, 1, EMBED), jnp.float32),
        'g2': jnp.ones((DEPTH, 1, EMBED), jnp.float32),
        'b2': jnp.zeros((DEPTH, 1, EMBED), jnp.float32),
        'w1': nrm((DEPTH, EMBED, MLP_HIDDEN)).astype(jnp.bfloat16),
        'bm1': jnp.zeros((DEPTH, 1, MLP_HIDDEN), jnp.float32),
        'w2': nrm((DEPTH, MLP_HIDDEN, EMBED)).astype(jnp.bfloat16),
        'bm2': jnp.zeros((DEPTH, 1, EMBED), jnp.float32),
        # head (classifier lane-padded to 128; real columns = NUM_CLASSES)
        'fc_norm_g': jnp.ones((1, EMBED), jnp.float32),
        'fc_norm_b': jnp.zeros((1, EMBED), jnp.float32),
        'fc_w': fc_w.astype(jnp.bfloat16),
        'fc_b': jnp.zeros((1, NUM_CLASSES_PAD), jnp.float32),
    }
    return params


if __name__ == "__main__":
    config = {'dropout_ratio': 0.0,
              'num_classes': NUM_CLASSES,
              'vidmae_pretrained_chkpts': None}

    B = 2
    x = jax.random.normal(jax.random.PRNGKey(0),
                          (B, IN_CH, NUM_FRAMES, IMG, IMG), jnp.float32)
    params = init_params(jax.random.PRNGKey(1))

    out = vidmae_forward(x, params, dropout_ratio=config['dropout_ratio'])
    out = jax.block_until_ready(out)

    assert out.shape == (B, NUM_CLASSES), out.shape
    assert jnp.all(jnp.isfinite(out))
    print("KERNEL_OK")
</pallas_src>

<mosaic_0001>
module attributes {stable_mosaic.version = 11 : i64} {
  func.func @vidmae_fused_kernel(%arg0: i32, %arg1: memref<1x8x384xbf16, #tpu.memory_space<vmem>>, %arg2: memref<384x32xbf16, #tpu.memory_space<vmem>>, %arg3: memref<1x32xf32, #tpu.memory_space<vmem>>, %arg4: memref<8x32xf32, #tpu.memory_space<vmem>>, %arg5: memref<2x1x32xf32, #tpu.memory_space<vmem>>, %arg6: memref<2x1x32xf32, #tpu.memory_space<vmem>>, %arg7: memref<2x2x32x16xbf16, #tpu.memory_space<vmem>>, %arg8: memref<2x2x1x16xf32, #tpu.memory_space<vmem>>, %arg9: memref<2x2x32x16xbf16, #tpu.memory_space<vmem>>, %arg10: memref<2x2x1x16xf32, #tpu.memory_space<vmem>>, %arg11: memref<2x2x32x32xbf16, #tpu.memory_space<vmem>>, %arg12: memref<2x2x1x32xf32, #tpu.memory_space<vmem>>, %arg13: memref<2x1x32xf32, #tpu.memory_space<vmem>>, %arg14: memref<2x1x32xf32, #tpu.memory_space<vmem>>, %arg15: memref<2x1x32xf32, #tpu.memory_space<vmem>>, %arg16: memref<2x32x128xbf16, #tpu.memory_space<vmem>>, %arg17: memref<2x1x128xf32, #tpu.memory_space<vmem>>, %arg18: memref<2x128x32xbf16, #tpu.memory_space<vmem>>, %arg19: memref<2x1x32xf32, #tpu.memory_space<vmem>>, %arg20: memref<1x32xf32, #tpu.memory_space<vmem>>, %arg21: memref<1x32xf32, #tpu.memory_space<vmem>>, %arg22: memref<32x128xbf16, #tpu.memory_space<vmem>>, %arg23: memref<1x128xf32, #tpu.memory_space<vmem>>, %arg24: memref<1x1x128xf32, #tpu.memory_space<vmem>>) attributes {dimension_semantics = [#tpu.dimension_semantics<parallel>], iteration_bounds = array<i64: 2>, scalar_prefetch = 0 : i64, scratch_operands = 0 : i64, tpu.core_type = #tpu.core_type<tc>, window_params = [{transform_indices = @transform_0, window_bounds = array<i64: 1, 8, 384>}, {pipeline_mode = #tpu.pipeline_mode<synchronous>, transform_indices = @transform_1, window_bounds = array<i64: 384, 32>}, {pipeline_mode = #tpu.pipeline_mode<synchronous>, transform_indices = @transform_2, window_bounds = array<i64: 1, 32>}, {pipeline_mode = #tpu.pipeline_mode<synchronous>, transform_indices = @transform_3, window_bounds = array<i64: 8, 32>}, {pipeline_mode = #tpu.pipeline_mode<synchronous>, transform_indices = @transform_4, window_bounds = array<i64: 2, 1, 32>}, {pipeline_mode = #tpu.pipeline_mode<synchronous>, transform_indices = @transform_5, window_bounds = array<i64: 2, 1, 32>}, {pipeline_mode = #tpu.pipeline_mode<synchronous>, transform_indices = @transform_6, window_bounds = array<i64: 2, 2, 32, 16>}, {pipeline_mode = #tpu.pipeline_mode<synchronous>, transform_indices = @transform_7, window_bounds = array<i64: 2, 2, 1, 16>}, {pipeline_mode = #tpu.pipeline_mode<synchronous>, transform_indices = @transform_8, window_bounds = array<i64: 2, 2, 32, 16>}, {pipeline_mode = #tpu.pipeline_mode<synchronous>, transform_indices = @transform_9, window_bounds = array<i64: 2, 2, 1, 16>}, {pipeline_mode = #tpu.pipeline_mode<synchronous>, transform_indices = @transform_10, window_bounds = array<i64: 2, 2, 32, 32>}, {pipeline_mode = #tpu.pipeline_mode<synchronous>, transform_indices = @transform_11, window_bounds = array<i64: 2, 2, 1, 32>}, {pipeline_mode = #tpu.pipeline_mode<synchronous>, transform_indices = @transform_12, window_bounds = array<i64: 2, 1, 32>}, {pipeline_mode = #tpu.pipeline_mode<synchronous>, transform_indices = @transform_13, window_bounds = array<i64: 2, 1, 32>}, {pipeline_mode = #tpu.pipeline_mode<synchronous>, transform_indices = @transform_14, window_bounds = array<i64: 2, 1, 32>}, {pipeline_mode = #tpu.pipeline_mode<synchronous>, transform_indices = @transform_15, window_bounds = array<i64: 2, 32, 128>}, {pipeline_mode = #tpu.pipeline_mode<synchronous>, transform_indices = @transform_16, window_bounds = array<i64: 2, 1, 128>}, {pipeline_mode = #tpu.pipeline_mode<synchronous>, transform_indices = @transform_17, window_bounds = array<i64: 2, 128, 32>}, {pipeline_mode = #tpu.pipeline_mode<synchronous>, transform_indices = @transform_18, window_bounds = array<i64: 2, 1, 32>}, {pipeline_mode = #tpu.pipeline_mode<synchronous>, transform_indices = @transform_19, window_bounds = array<i64: 1, 32>}, {pipeline_mode = #tpu.pipeline_mode<synchronous>, transform_indices = @transform_20, window_bounds = array<i64: 1, 32>}, {pipeline_mode = #tpu.pipeline_mode<synchronous>, transform_indices = @transform_21, window_bounds = array<i64: 32, 128>}, {pipeline_mode = #tpu.pipeline_mode<synchronous>, transform_indices = @transform_22, window_bounds = array<i64: 1, 128>}, {transform_indices = @transform_23, window_bounds = array<i64: 1, 1, 128>}]} {
    %c0 = arith.constant 0 : index
    %c0_0 = arith.constant 0 : index
    %c0_1 = arith.constant 0 : index
    %0 = vector.load %arg1[%c0, %c0_0, %c0_1] : memref<1x8x384xbf16, #tpu.memory_space<vmem>>, vector<1x8x384xbf16>
    %1 = vector.shape_cast %0 : vector<1x8x384xbf16> to vector<8x384xbf16>
    %c0_2 = arith.constant 0 : index
    %c0_3 = arith.constant 0 : index
    %2 = vector.load %arg2[%c0_2, %c0_3] : memref<384x32xbf16, #tpu.memory_space<vmem>>, vector<384x32xbf16>
    %cst = arith.constant dense<0.000000e+00> : vector<8x32xf32>
    %3 = tpu.matmul %1, %2, %cst {dimension_numbers = #tpu.dot_dimension_numbers<[1], [0], [0], [1], [0, 0, 1, 1], [], []>} : vector<8x384xbf16>, vector<384x32xbf16>, vector<8x32xf32> -> vector<8x32xf32>
    %c0_4 = arith.constant 0 : index
    %c0_5 = arith.constant 0 : index
    %4 = vector.load %arg3[%c0_4, %c0_5] : memref<1x32xf32, #tpu.memory_space<vmem>>, vector<1x32xf32>
    %5 = vector.broadcast %4 : vector<1x32xf32> to vector<8x32xf32>
    %6 = arith.addf %3, %5 : vector<8x32xf32>
    %c0_6 = arith.constant 0 : index
    %c0_7 = arith.constant 0 : index
    %7 = vector.load %arg4[%c0_6, %c0_7] : memref<8x32xf32, #tpu.memory_space<vmem>>, vector<8x32xf32>
    %8 = arith.addf %6, %7 : vector<8x32xf32>
    %c0_8 = arith.constant 0 : index
    %c0_9 = arith.constant 0 : index
    %c0_10 = arith.constant 0 : index
    %9 = vector.load %arg5[%c0_8, %c0_9, %c0_10] : memref<2x1x32xf32, #tpu.memory_space<vmem>>, vector<1x1x32xf32>
    %10 = vector.shape_cast %9 : vector<1x1x32xf32> to vector<1x32xf32>
    %c0_11 = arith.constant 0 : index
    %c0_12 = arith.constant 0 : index
    %c0_13 = arith.constant 0 : index
    %11 = vector.load %arg6[%c0_11, %c0_12, %c0_13] : memref<2x1x32xf32, #tpu.memory_space<vmem>>, vector<1x1x32xf32>
    %12 = vector.shape_cast %11 : vector<1x1x32xf32> to vector<1x32xf32>
    %cst_14 = arith.constant dense<0.000000e+00> : vector<8xf32>
    %13 = vector.multi_reduction <add>, %8, %cst_14 [1] : vector<8x32xf32> to vector<8xf32>
    %14 = vector.shape_cast %13 : vector<8xf32> to vector<8x1xf32>
    %cst_15 = arith.constant 3.200000e+01 : f32
    %15 = vector.broadcast %cst_15 : f32 to vector<8x1xf32>
    %16 = arith.divf %14, %15 : vector<8x1xf32>
    %17 = arith.mulf %8, %8 : vector<8x32xf32>
    %cst_16 = arith.constant dense<0.000000e+00> : vector<8xf32>
    %18 = vector.multi_reduction <add>, %17, %cst_16 [1] : vector<8x32xf32> to vector<8xf32>
    %19 = vector.shape_cast %18 : vector<8xf32> to vector<8x1xf32>
    %cst_17 = arith.constant 3.200000e+01 : f32
    %20 = vector.broadcast %cst_17 : f32 to vector<8x1xf32>
    %21 = arith.divf %19, %20 : vector<8x1xf32>
    %22 = arith.mulf %16, %16 : vector<8x1xf32>
    %23 = arith.subf %21, %22 : vector<8x1xf32>
    %24 = vector.broadcast %16 : vector<8x1xf32> to vector<8x32xf32>
    %25 = arith.subf %8, %24 : vector<8x32xf32>
    %cst_18 = arith.constant 9.99999997E-7 : f32
    %26 = vector.broadcast %cst_18 : f32 to vector<8x1xf32>
    %27 = arith.addf %23, %26 : vector<8x1xf32>
    %28 = math.rsqrt %27 : vector<8x1xf32>
    %29 = vector.broadcast %28 : vector<8x1xf32> to vector<8x32xf32>
    %30 = arith.mulf %25, %29 : vector<8x32xf32>
    %31 = vector.broadcast %10 : vector<1x32xf32> to vector<8x32xf32>
    %32 = arith.mulf %30, %31 : vector<8x32xf32>
    %33 = vector.broadcast %12 : vector<1x32xf32> to vector<8x32xf32>
    %34 = arith.addf %32, %33 : vector<8x32xf32>
    %35 = arith.truncf %34 : vector<8x32xf32> to vector<8x32xbf16>
    %36 = vector.shape_cast %35 : vector<8x32xbf16> to vector<1x8x32xbf16>
    %37 = vector.shape_cast %36 : vector<1x8x32xbf16> to vector<1x8x32xbf16>
    %38 = vector.broadcast %37 : vector<1x8x32xbf16> to vector<2x8x32xbf16>
    %c0_19 = arith.constant 0 : index
    %c0_20 = arith.constant 0 : index
    %c0_21 = arith.constant 0 : index
    %c0_22 = arith.constant 0 : index
    %39 = vector.load %arg7[%c0_19, %c0_20, %c0_21, %c0_22] : memref<2x2x32x16xbf16, #tpu.memory_space<vmem>>, vector<1x2x32x16xbf16>
    %40 = vector.shape_cast %39 : vector<1x2x32x16xbf16> to vector<2x32x16xbf16>
    "tpu.trace_start"() <{level = 10 : i32, message = "hnd,hdk->hnk"}> : () -> ()
    %cst_23 = arith.constant dense<0.000000e+00> : vector<2x8x16xf32>
    %41 = tpu.matmul %38, %40, %cst_23 {dimension_numbers = #tpu.dot_dimension_numbers<[2], [1], [1], [2], [0, 0, 0, 1, 1, 2], [0], [0]>} : vector<2x8x32xbf16>, vector<2x32x16xbf16>, vector<2x8x16xf32> -> vector<2x8x16xf32>
    "tpu.trace_stop"() : () -> ()
    %c0_24 = arith.constant 0 : index
    %c0_25 = arith.constant 0 : index
    %c0_26 = arith.constant 0 : index
    %c0_27 = arith.constant 0 : index
    %42 = vector.load %arg8[%c0_24, %c0_25, %c0_26, %c0_27] : memref<2x2x1x16xf32, #tpu.memory_space<vmem>>, vector<1x2x1x16xf32>
    %43 = vector.shape_cast %42 : vector<1x2x1x16xf32> to vector<2x1x16xf32>
    %44 = vector.broadcast %43 : vector<2x1x16xf32> to vector<2x8x16xf32>
    %45 = arith.addf %41, %44 : vector<2x8x16xf32>
    %c0_28 = arith.constant 0 : index
    %c0_29 = arith.constant 0 : index
    %c0_30 = arith.constant 0 : index
    %c0_31 = arith.constant 0 : index
    %46 = vector.load %arg9[%c0_28, %c0_29, %c0_30, %c0_31] : memref<2x2x32x16xbf16, #tpu.memory_space<vmem>>, vector<1x2x32x16xbf16>
    %47 = vector.shape_cast %46 : vector<1x2x32x16xbf16> to vector<2x32x16xbf16>
    "tpu.trace_start"() <{level = 10 : i32, message = "hnd,hdk->hnk"}> : () -> ()
    %cst_32 = arith.constant dense<0.000000e+00> : vector<2x8x16xf32>
    %48 = tpu.matmul %38, %47, %cst_32 {dimension_numbers = #tpu.dot_dimension_numbers<[2], [1], [1], [2], [0, 0, 0, 1, 1, 2], [0], [0]>} : vector<2x8x32xbf16>, vector<2x32x16xbf16>, vector<2x8x16xf32> -> vector<2x8x16xf32>
    "tpu.trace_stop"() : () -> ()
    %c0_33 = arith.constant 0 : index
    %c0_34 = arith.constant 0 : index
    %c0_35 = arith.constant 0 : index
    %c0_36 = arith.constant 0 : index
    %49 = vector.load %arg10[%c0_33, %c0_34, %c0_35, %c0_36] : memref<2x2x1x16xf32, #tpu.memory_space<vmem>>, vector<1x2x1x16xf32>
    %50 = vector.shape_cast %49 : vector<1x2x1x16xf32> to vector<2x1x16xf32>
    %51 = vector.broadcast %50 : vector<2x1x16xf32> to vector<2x8x16xf32>
    %52 = arith.addf %48, %51 : vector<2x8x16xf32>
    %c0_37 = arith.constant 0 : index
    %c0_38 = arith.constant 0 : index
    %c0_39 = arith.constant 0 : index
    %c0_40 = arith.constant 0 : index
    %53 = vector.load %arg11[%c0_37, %c0_38, %c0_39, %c0_40] : memref<2x2x32x32xbf16, #tpu.memory_space<vmem>>, vector<1x2x32x32xbf16>
    %54 = vector.shape_cast %53 : vector<1x2x32x32xbf16> to vector<2x32x32xbf16>
    "tpu.trace_start"() <{level = 10 : i32, message = "hnd,hde->hne"}> : () -> ()
    %cst_41 = arith.constant dense<0.000000e+00> : vector<2x8x32xf32>
    %55 = tpu.matmul %38, %54, %cst_41 {dimension_numbers = #tpu.dot_dimension_numbers<[2], [1], [1], [2], [0, 0, 0, 1, 1, 2], [0], [0]>} : vector<2x8x32xbf16>, vector<2x32x32xbf16>, vector<2x8x32xf32> -> vector<2x8x32xf32>
    "tpu.trace_stop"() : () -> ()
    %c0_42 = arith.constant 0 : index
    %c0_43 = arith.constant 0 : index
    %c0_44 = arith.constant 0 : index
    %c0_45 = arith.constant 0 : index
    %56 = vector.load %arg12[%c0_42, %c0_43, %c0_44, %c0_45] : memref<2x2x1x32xf32, #tpu.memory_space<vmem>>, vector<1x2x1x32xf32>
    %57 = vector.shape_cast %56 : vector<1x2x1x32xf32> to vector<2x1x32xf32>
    %58 = vector.broadcast %57 : vector<2x1x32xf32> to vector<2x8x32xf32>
    %59 = arith.addf %55, %58 : vector<2x8x32xf32>
    "tpu.trace_start"() <{level = 10 : i32, message = "hqc,hkc->hqk"}> : () -> ()
    %cst_46 = arith.constant dense<0.000000e+00> : vector<2x8x8xf32>
    %60 = tpu.matmul %45, %52, %cst_46 {dimension_numbers = #tpu.dot_dimension_numbers<[2], [2], [1], [1], [0, 0, 0, 1, 1, 1], [0], [0]>} : vector<2x8x16xf32>, vector<2x8x16xf32>, vector<2x8x8xf32> -> vector<2x8x8xf32>
    "tpu.trace_stop"() : () -> ()
    %cst_47 = arith.constant 2.500000e-01 : f32
    %61 = vector.broadcast %cst_47 : f32 to vector<2x8x8xf32>
    %62 = arith.mulf %60, %61 : vector<2x8x8xf32>
    %cst_48 = arith.constant dense<0xFF800000> : vector<2x8xf32>
    %63 = vector.multi_reduction <maximumf>, %62, %cst_48 [2] : vector<2x8x8xf32> to vector<2x8xf32>
    %64 = vector.shape_cast %63 : vector<2x8xf32> to vector<2x8x1xf32>
    %65 = vector.broadcast %64 : vector<2x8x1xf32> to vector<2x8x8xf32>
    %66 = arith.subf %62, %65 : vector<2x8x8xf32>
    %67 = math.exp %66 : vector<2x8x8xf32>
    %cst_49 = arith.constant dense<0.000000e+00> : vector<2x8xf32>
    %68 = vector.multi_reduction <add>, %67, %cst_49 [2] : vector<2x8x8xf32> to vector<2x8xf32>
    %69 = vector.shape_cast %68 : vector<2x8xf32> to vector<2x8x1xf32>
    %70 = tpu.reciprocal %69 {approx = true} : vector<2x8x1xf32> -> vector<2x8x1xf32>
    %71 = vector.broadcast %70 : vector<2x8x1xf32> to vector<2x8x8xf32>
    %72 = arith.mulf %67, %71 : vector<2x8x8xf32>
    %73 = arith.truncf %72 : vector<2x8x8xf32> to vector<2x8x8xbf16>
    %74 = arith.truncf %59 : vector<2x8x32xf32> to vector<2x8x32xbf16>
    "tpu.trace_start"() <{level = 10 : i32, message = "hqk,hkd->hqd"}> : () -> ()
    %cst_50 = arith.constant dense<0.000000e+00> : vector<2x8x32xf32>
    %75 = tpu.matmul %73, %74, %cst_50 {dimension_numbers = #tpu.dot_dimension_numbers<[2], [1], [1], [2], [0, 0, 0, 1, 1, 2], [0], [0]>} : vector<2x8x8xbf16>, vector<2x8x32xbf16>, vector<2x8x32xf32> -> vector<2x8x32xf32>
    "tpu.trace_stop"() : () -> ()
    %cst_51 = arith.constant dense<0.000000e+00> : vector<8x32xf32>
    %76 = vector.multi_reduction <add>, %75, %cst_51 [0] : vector<2x8x32xf32> to vector<8x32xf32>
    %77 = arith.addf %8, %76 : vector<8x32xf32>
    %c0_52 = arith.constant 0 : index
    %c0_53 = arith.constant 0 : index
    %c0_54 = arith.constant 0 : index
    %78 = vector.load %arg13[%c0_52, %c0_53, %c0_54] : memref<2x1x32xf32, #tpu.memory_space<vmem>>, vector<1x1x32xf32>
    %79 = vector.shape_cast %78 : vector<1x1x32xf32> to vector<1x32xf32>
    %80 = vector.broadcast %79 : vector<1x32xf32> to vector<8x32xf32>
    %81 = arith.addf %77, %80 : vector<8x32xf32>
    %c0_55 = arith.constant 0 : index
    %c0_56 = arith.constant 0 : index
    %c0_57 = arith.constant 0 : index
    %82 = vector.load %arg14[%c0_55, %c0_56, %c0_57] : memref<2x1x32xf32, #tpu.memory_space<vmem>>, vector<1x1x32xf32>
    %83 = vector.shape_cast %82 : vector<1x1x32xf32> to vector<1x32xf32>
    %c0_58 = arith.constant 0 : index
    %c0_59 = arith.constant 0 : index
    %c0_60 = arith.constant 0 : index
    %84 = vector.load %arg15[%c0_58, %c0_59, %c0_60] : memref<2x1x32xf32, #tpu.memory_space<vmem>>, vector<1x1x32xf32>
    %85 = vector.shape_cast %84 : vector<1x1x32xf32> to vector<1x32xf32>
    %cst_61 = arith.constant dense<0.000000e+00> : vector<8xf32>
    %86 = vector.multi_reduction <add>, %81, %cst_61 [1] : vector<8x32xf32> to vector<8xf32>
    %87 = vector.shape_cast %86 : vector<8xf32> to vector<8x1xf32>
    %cst_62 = arith.constant 3.200000e+01 : f32
    %88 = vector.broadcast %cst_62 : f32 to vector<8x1xf32>
    %89 = arith.divf %87, %88 : vector<8x1xf32>
    %90 = arith.mulf %81, %81 : vector<8x32xf32>
    %cst_63 = arith.constant dense<0.000000e+00> : vector<8xf32>
    %91 = vector.multi_reduction <add>, %90, %cst_63 [1] : vector<8x32xf32> to vector<8xf32>
    %92 = vector.shape_cast %91 : vector<8xf32> to vector<8x1xf32>
    %cst_64 = arith.constant 3.200000e+01 : f32
    %93 = vector.broadcast %cst_64 : f32 to vector<8x1xf32>
    %94 = arith.divf %92, %93 : vector<8x1xf32>
    %95 = arith.mulf %89, %89 : vector<8x1xf32>
    %96 = arith.subf %94, %95 : vector<8x1xf32>
    %97 = vector.broadcast %89 : vector<8x1xf32> to vector<8x32xf32>
    %98 = arith.subf %81, %97 : vector<8x32xf32>
    %cst_65 = arith.constant 9.99999997E-7 : f32
    %99 = vector.broadcast %cst_65 : f32 to vector<8x1xf32>
    %100 = arith.addf %96, %99 : vector<8x1xf32>
    %101 = math.rsqrt %100 : vector<8x1xf32>
    %102 = vector.broadcast %101 : vector<8x1xf32> to vector<8x32xf32>
    %103 = arith.mulf %98, %102 : vector<8x32xf32>
    %104 = vector.broadcast %83 : vector<1x32xf32> to vector<8x32xf32>
    %105 = arith.mulf %103, %104 : vector<8x32xf32>
    %106 = vector.broadcast %85 : vector<1x32xf32> to vector<8x32xf32>
    %107 = arith.addf %105, %106 : vector<8x32xf32>
    %108 = arith.truncf %107 : vector<8x32xf32> to vector<8x32xbf16>
    %c0_66 = arith.constant 0 : index
    %c0_67 = arith.constant 0 : index
    %c0_68 = arith.constant 0 : index
    %109 = vector.load %arg16[%c0_66, %c0_67, %c0_68] : memref<2x32x128xbf16, #tpu.memory_space<vmem>>, vector<1x32x128xbf16>
    %110 = vector.shape_cast %109 : vector<1x32x128xbf16> to vector<32x128xbf16>
    %cst_69 = arith.constant dense<0.000000e+00> : vector<8x128xf32>
    %111 = tpu.matmul %108, %110, %cst_69 {dimension_numbers = #tpu.dot_dimension_numbers<[1], [0], [0], [1], [0, 0, 1, 1], [], []>} : vector<8x32xbf16>, vector<32x128xbf16>, vector<8x128xf32> -> vector<8x128xf32>
    %c0_70 = arith.constant 0 : index
    %c0_71 = arith.constant 0 : index
    %c0_72 = arith.constant 0 : index
    %112 = vector.load %arg17[%c0_70, %c0_71, %c0_72] : memref<2x1x128xf32, #tpu.memory_space<vmem>>, vector<1x1x128xf32>
    %113 = vector.shape_cast %112 : vector<1x1x128xf32> to vector<1x128xf32>
    %114 = vector.broadcast %113 : vector<1x128xf32> to vector<8x128xf32>
    %115 = arith.addf %111, %114 : vector<8x128xf32>
    %116 = arith.mulf %115, %115 : vector<8x128xf32>
    %117 = arith.mulf %115, %116 : vector<8x128xf32>
    %cst_73 = arith.constant 4.471500e-02 : f32
    %118 = vector.broadcast %cst_73 : f32 to vector<8x128xf32>
    %119 = arith.mulf %118, %117 : vector<8x128xf32>
    %120 = arith.addf %115, %119 : vector<8x128xf32>
    %cst_74 = arith.constant 0.797884583 : f32
    %121 = vector.broadcast %cst_74 : f32 to vector<8x128xf32>
    %122 = arith.mulf %121, %120 : vector<8x128xf32>
    %123 = math.tanh %122 : vector<8x128xf32>
    %cst_75 = arith.constant 1.000000e+00 : f32
    %124 = vector.broadcast %cst_75 : f32 to vector<8x128xf32>
    %125 = arith.addf %124, %123 : vector<8x128xf32>
    %cst_76 = arith.constant 5.000000e-01 : f32
    %126 = vector.broadcast %cst_76 : f32 to vector<8x128xf32>
    %127 = arith.mulf %126, %125 : vector<8x128xf32>
    %128 = arith.mulf %115, %127 : vector<8x128xf32>
    %129 = arith.truncf %128 : vector<8x128xf32> to vector<8x128xbf16>
    %c0_77 = arith.constant 0 : index
    %c0_78 = arith.constant 0 : index
    %c0_79 = arith.constant 0 : index
    %130 = vector.load %arg18[%c0_77, %c0_78, %c0_79] : memref<2x128x32xbf16, #tpu.memory_space<vmem>>, vector<1x128x32xbf16>
    %131 = vector.shape_cast %130 : vector<1x128x32xbf16> to vector<128x32xbf16>
    %cst_80 = arith.constant dense<0.000000e+00> : vector<8x32xf32>
    %132 = tpu.matmul %129, %131, %cst_80 {dimension_numbers = #tpu.dot_dimension_numbers<[1], [0], [0], [1], [0, 0, 1, 1], [], []>} : vector<8x128xbf16>, vector<128x32xbf16>, vector<8x32xf32> -> vector<8x32xf32>
    %133 = arith.addf %81, %132 : vector<8x32xf32>
    %c0_81 = arith.constant 0 : index
    %c0_82 = arith.constant 0 : index
    %c0_83 = arith.constant 0 : index
    %134 = vector.load %arg19[%c0_81, %c0_82, %c0_83] : memref<2x1x32xf32, #tpu.memory_space<vmem>>, vector<1x1x32xf32>
    %135 = vector.shape_cast %134 : vector<1x1x32xf32> to vector<1x32xf32>
    %136 = vector.broadcast %135 : vector<1x32xf32> to vector<8x32xf32>
    %137 = arith.addf %133, %136 : vector<8x32xf32>
    %c1 = arith.constant 1 : index
    %c0_84 = arith.constant 0 : index
    %c0_85 = arith.constant 0 : index
    %138 = vector.load %arg5[%c1, %c0_84, %c0_85] : memref<2x1x32xf32, #tpu.memory_space<vmem>>, vector<1x1x32xf32>
    %139 = vector.shape_cast %138 : vector<1x1x32xf32> to vector<1x32xf32>
    %c1_86 = arith.constant 1 : index
    %c0_87 = arith.constant 0 : index
    %c0_88 = arith.constant 0 : index
    %140 = vector.load %arg6[%c1_86, %c0_87, %c0_88] : memref<2x1x32xf32, #tpu.memory_space<vmem>>, vector<1x1x32xf32>
    %141 = vector.shape_cast %140 : vector<1x1x32xf32> to vector<1x32xf32>
    %cst_89 = arith.constant dense<0.000000e+00> : vector<8xf32>
    %142 = vector.multi_reduction <add>, %137, %cst_89 [1] : vector<8x32xf32> to vector<8xf32>
    %143 = vector.shape_cast %142 : vector<8xf32> to vector<8x1xf32>
    %cst_90 = arith.constant 3.200000e+01 : f32
    %144 = vector.broadcast %cst_90 : f32 to vector<8x1xf32>
    %145 = arith.divf %143, %144 : vector<8x1xf32>
    %146 = arith.mulf %137, %137 : vector<8x32xf32>
    %cst_91 = arith.constant dense<0.000000e+00> : vector<8xf32>
    %147 = vector.multi_reduction <add>, %146, %cst_91 [1] : vector<8x32xf32> to vector<8xf32>
    %148 = vector.shape_cast %147 : vector<8xf32> to vector<8x1xf32>
    %cst_92 = arith.constant 3.200000e+01 : f32
    %149 = vector.broadcast %cst_92 : f32 to vector<8x1xf32>
    %150 = arith.divf %148, %149 : vector<8x1xf32>
    %151 = arith.mulf %145, %145 : vector<8x1xf32>
    %152 = arith.subf %150, %151 : vector<8x1xf32>
    %153 = vector.broadcast %145 : vector<8x1xf32> to vector<8x32xf32>
    %154 = arith.subf %137, %153 : vector<8x32xf32>
    %cst_93 = arith.constant 9.99999997E-7 : f32
    %155 = vector.broadcast %cst_93 : f32 to vector<8x1xf32>
    %156 = arith.addf %152, %155 : vector<8x1xf32>
    %157 = math.rsqrt %156 : vector<8x1xf32>
    %158 = vector.broadcast %157 : vector<8x1xf32> to vector<8x32xf32>
    %159 = arith.mulf %154, %158 : vector<8x32xf32>
    %160 = vector.broadcast %139 : vector<1x32xf32> to vector<8x32xf32>
    %161 = arith.mulf %159, %160 : vector<8x32xf32>
    %162 = vector.broadcast %141 : vector<1x32xf32> to vector<8x32xf32>
    %163 = arith.addf %161, %162 : vector<8x32xf32>
    %164 = arith.truncf %163 : vector<8x32xf32> to vector<8x32xbf16>
    %165 = vector.shape_cast %164 : vector<8x32xbf16> to vector<1x8x32xbf16>
    %166 = vector.shape_cast %165 : vector<1x8x32xbf16> to vector<1x8x32xbf16>
    %167 = vector.broadcast %166 : vector<1x8x32xbf16> to vector<2x8x32xbf16>
    %c1_94 = arith.constant 1 : index
    %c0_95 = arith.constant 0 : index
    %c0_96 = arith.constant 0 : index
    %c0_97 = arith.constant 0 : index
    %168 = vector.load %arg7[%c1_94, %c0_95, %c0_96, %c0_97] : memref<2x2x32x16xbf16, #tpu.memory_space<vmem>>, vector<1x2x32x16xbf16>
    %169 = vector.shape_cast %168 : vector<1x2x32x16xbf16> to vector<2x32x16xbf16>
    "tpu.trace_start"() <{level = 10 : i32, message = "hnd,hdk->hnk"}> : () -> ()
    %cst_98 = arith.constant dense<0.000000e+00> : vector<2x8x16xf32>
    %170 = tpu.matmul %167, %169, %cst_98 {dimension_numbers = #tpu.dot_dimension_numbers<[2], [1], [1], [2], [0, 0, 0, 1, 1, 2], [0], [0]>} : vector<2x8x32xbf16>, vector<2x32x16xbf16>, vector<2x8x16xf32> -> vector<2x8x16xf32>
    "tpu.trace_stop"() : () -> ()
    %c1_99 = arith.constant 1 : index
    %c0_100 = arith.constant 0 : index
    %c0_101 = arith.constant 0 : index
    %c0_102 = arith.constant 0 : index
    %171 = vector.load %arg8[%c1_99, %c0_100, %c0_101, %c0_102] : memref<2x2x1x16xf32, #tpu.memory_space<vmem>>, vector<1x2x1x16xf32>
    %172 = vector.shape_cast %171 : vector<1x2x1x16xf32> to vector<2x1x16xf32>
    %173 = vector.broadcast %172 : vector<2x1x16xf32> to vector<2x8x16xf32>
    %174 = arith.addf %170, %173 : vector<2x8x16xf32>
    %c1_103 = arith.constant 1 : index
    %c0_104 = arith.constant 0 : index
    %c0_105 = arith.constant 0 : index
    %c0_106 = arith.constant 0 : index
    %175 = vector.load %arg9[%c1_103, %c0_104, %c0_105, %c0_106] : memref<2x2x32x16xbf16, #tpu.memory_space<vmem>>, vector<1x2x32x16xbf16>
    %176 = vector.shape_cast %175 : vector<1x2x32x16xbf16> to vector<2x32x16xbf16>
    "tpu.trace_start"() <{level = 10 : i32, message = "hnd,hdk->hnk"}> : () -> ()
    %cst_107 = arith.constant dense<0.000000e+00> : vector<2x8x16xf32>
    %177 = tpu.matmul %167, %176, %cst_107 {dimension_numbers = #tpu.dot_dimension_numbers<[2], [1], [1], [2], [0, 0, 0, 1, 1, 2], [0], [0]>} : vector<2x8x32xbf16>, vector<2x32x16xbf16>, vector<2x8x16xf32> -> vector<2x8x16xf32>
    "tpu.trace_stop"() : () -> ()
    %c1_108 = arith.constant 1 : index
    %c0_109 = arith.constant 0 : index
    %c0_110 = arith.constant 0 : index
    %c0_111 = arith.constant 0 : index
    %178 = vector.load %arg10[%c1_108, %c0_109, %c0_110, %c0_111] : memref<2x2x1x16xf32, #tpu.memory_space<vmem>>, vector<1x2x1x16xf32>
    %179 = vector.shape_cast %178 : vector<1x2x1x16xf32> to vector<2x1x16xf32>
    %180 = vector.broadcast %179 : vector<2x1x16xf32> to vector<2x8x16xf32>
    %181 = arith.addf %177, %180 : vector<2x8x16xf32>
    %c1_112 = arith.constant 1 : index
    %c0_113 = arith.constant 0 : index
    %c0_114 = arith.constant 0 : index
    %c0_115 = arith.constant 0 : index
    %182 = vector.load %arg11[%c1_112, %c0_113, %c0_114, %c0_115] : memref<2x2x32x32xbf16, #tpu.memory_space<vmem>>, vector<1x2x32x32xbf16>
    %183 = vector.shape_cast %182 : vector<1x2x32x32xbf16> to vector<2x32x32xbf16>
    "tpu.trace_start"() <{level = 10 : i32, message = "hnd,hde->hne"}> : () -> ()
    %cst_116 = arith.constant dense<0.000000e+00> : vector<2x8x32xf32>
    %184 = tpu.matmul %167, %183, %cst_116 {dimension_numbers = #tpu.dot_dimension_numbers<[2], [1], [1], [2], [0, 0, 0, 1, 1, 2], [0], [0]>} : vector<2x8x32xbf16>, vector<2x32x32xbf16>, vector<2x8x32xf32> -> vector<2x8x32xf32>
    "tpu.trace_stop"() : () -> ()
    %c1_117 = arith.constant 1 : index
    %c0_118 = arith.constant 0 : index
    %c0_119 = arith.constant 0 : index
    %c0_120 = arith.constant 0 : index
    %185 = vector.load %arg12[%c1_117, %c0_118, %c0_119, %c0_120] : memref<2x2x1x32xf32, #tpu.memory_space<vmem>>, vector<1x2x1x32xf32>
    %186 = vector.shape_cast %185 : vector<1x2x1x32xf32> to vector<2x1x32xf32>
    %187 = vector.broadcast %186 : vector<2x1x32xf32> to vector<2x8x32xf32>
    %188 = arith.addf %184, %187 : vector<2x8x32xf32>
    "tpu.trace_start"() <{level = 10 : i32, message = "hqc,hkc->hqk"}> : () -> ()
    %cst_121 = arith.constant dense<0.000000e+00> : vector<2x8x8xf32>
    %189 = tpu.matmul %174, %181, %cst_121 {dimension_numbers = #tpu.dot_dimension_numbers<[2], [2], [1], [1], [0, 0, 0, 1, 1, 1], [0], [0]>} : vector<2x8x16xf32>, vector<2x8x16xf32>, vector<2x8x8xf32> -> vector<2x8x8xf32>
    "tpu.trace_stop"() : () -> ()
    %cst_122 = arith.constant 2.500000e-01 : f32
    %190 = vector.broadcast %cst_122 : f32 to vector<2x8x8xf32>
    %191 = arith.mulf %189, %190 : vector<2x8x8xf32>
    %cst_123 = arith.constant dense<0xFF800000> : vector<2x8xf32>
    %192 = vector.multi_reduction <maximumf>, %191, %cst_123 [2] : vector<2x8x8xf32> to vector<2x8xf32>
    %193 = vector.shape_cast %192 : vector<2x8xf32> to vector<2x8x1xf32>
    %194 = vector.broadcast %193 : vector<2x8x1xf32> to vector<2x8x8xf32>
    %195 = arith.subf %191, %194 : vector<2x8x8xf32>
    %196 = math.exp %195 : vector<2x8x8xf32>
    %cst_124 = arith.constant dense<0.000000e+00> : vector<2x8xf32>
    %197 = vector.multi_reduction <add>, %196, %cst_124 [2] : vector<2x8x8xf32> to vector<2x8xf32>
    %198 = vector.shape_cast %197 : vector<2x8xf32> to vector<2x8x1xf32>
    %199 = tpu.reciprocal %198 {approx = true} : vector<2x8x1xf32> -> vector<2x8x1xf32>
    %200 = vector.broadcast %199 : vector<2x8x1xf32> to vector<2x8x8xf32>
    %201 = arith.mulf %196, %200 : vector<2x8x8xf32>
    %202 = arith.truncf %201 : vector<2x8x8xf32> to vector<2x8x8xbf16>
    %203 = arith.truncf %188 : vector<2x8x32xf32> to vector<2x8x32xbf16>
    "tpu.trace_start"() <{level = 10 : i32, message = "hqk,hkd->hqd"}> : () -> ()
    %cst_125 = arith.constant dense<0.000000e+00> : vector<2x8x32xf32>
    %204 = tpu.matmul %202, %203, %cst_125 {dimension_numbers = #tpu.dot_dimension_numbers<[2], [1], [1], [2], [0, 0, 0, 1, 1, 2], [0], [0]>} : vector<2x8x8xbf16>, vector<2x8x32xbf16>, vector<2x8x32xf32> -> vector<2x8x32xf32>
    "tpu.trace_stop"() : () -> ()
    %cst_126 = arith.constant dense<0.000000e+00> : vector<8x32xf32>
    %205 = vector.multi_reduction <add>, %204, %cst_126 [0] : vector<2x8x32xf32> to vector<8x32xf32>
    %206 = arith.addf %137, %205 : vector<8x32xf32>
    %c1_127 = arith.constant 1 : index
    %c0_128 = arith.constant 0 : index
    %c0_129 = arith.constant 0 : index
    %207 = vector.load %arg13[%c1_127, %c0_128, %c0_129] : memref<2x1x32xf32, #tpu.memory_space<vmem>>, vector<1x1x32xf32>
    %208 = vector.shape_cast %207 : vector<1x1x32xf32> to vector<1x32xf32>
    %209 = vector.broadcast %208 : vector<1x32xf32> to vector<8x32xf32>
    %210 = arith.addf %206, %209 : vector<8x32xf32>
    %c1_130 = arith.constant 1 : index
    %c0_131 = arith.constant 0 : index
    %c0_132 = arith.constant 0 : index
    %211 = vector.load %arg14[%c1_130, %c0_131, %c0_132] : memref<2x1x32xf32, #tpu.memory_space<vmem>>, vector<1x1x32xf32>
    %212 = vector.shape_cast %211 : vector<1x1x32xf32> to vector<1x32xf32>
    %c1_133 = arith.constant 1 : index
    %c0_134 = arith.constant 0 : index
    %c0_135 = arith.constant 0 : index
    %213 = vector.load %arg15[%c1_133, %c0_134, %c0_135] : memref<2x1x32xf32, #tpu.memory_space<vmem>>, vector<1x1x32xf32>
    %214 = vector.shape_cast %213 : vector<1x1x32xf32> to vector<1x32xf32>
    %cst_136 = arith.constant dense<0.000000e+00> : vector<8xf32>
    %215 = vector.multi_reduction <add>, %210, %cst_136 [1] : vector<8x32xf32> to vector<8xf32>
    %216 = vector.shape_cast %215 : vector<8xf32> to vector<8x1xf32>
    %cst_137 = arith.constant 3.200000e+01 : f32
    %217 = vector.broadcast %cst_137 : f32 to vector<8x1xf32>
    %218 = arith.divf %216, %217 : vector<8x1xf32>
    %219 = arith.mulf %210, %210 : vector<8x32xf32>
    %cst_138 = arith.constant dense<0.000000e+00> : vector<8xf32>
    %220 = vector.multi_reduction <add>, %219, %cst_138 [1] : vector<8x32xf32> to vector<8xf32>
    %221 = vector.shape_cast %220 : vector<8xf32> to vector<8x1xf32>
    %cst_139 = arith.constant 3.200000e+01 : f32
    %222 = vector.broadcast %cst_139 : f32 to vector<8x1xf32>
    %223 = arith.divf %221, %222 : vector<8x1xf32>
    %224 = arith.mulf %218, %218 : vector<8x1xf32>
    %225 = arith.subf %223, %224 : vector<8x1xf32>
    %226 = vector.broadcast %218 : vector<8x1xf32> to vector<8x32xf32>
    %227 = arith.subf %210, %226 : vector<8x32xf32>
    %cst_140 = arith.constant 9.99999997E-7 : f32
    %228 = vector.broadcast %cst_140 : f32 to vector<8x1xf32>
    %229 = arith.addf %225, %228 : vector<8x1xf32>
    %230 = math.rsqrt %229 : vector<8x1xf32>
    %231 = vector.broadcast %230 : vector<8x1xf32> to vector<8x32xf32>
    %232 = arith.mulf %227, %231 : vector<8x32xf32>
    %233 = vector.broadcast %212 : vector<1x32xf32> to vector<8x32xf32>
    %234 = arith.mulf %232, %233 : vector<8x32xf32>
    %235 = vector.broadcast %214 : vector<1x32xf32> to vector<8x32xf32>
    %236 = arith.addf %234, %235 : vector<8x32xf32>
    %237 = arith.truncf %236 : vector<8x32xf32> to vector<8x32xbf16>
    %c1_141 = arith.constant 1 : index
    %c0_142 = arith.constant 0 : index
    %c0_143 = arith.constant 0 : index
    %238 = vector.load %arg16[%c1_141, %c0_142, %c0_143] : memref<2x32x128xbf16, #tpu.memory_space<vmem>>, vector<1x32x128xbf16>
    %239 = vector.shape_cast %238 : vector<1x32x128xbf16> to vector<32x128xbf16>
    %cst_144 = arith.constant dense<0.000000e+00> : vector<8x128xf32>
    %240 = tpu.matmul %237, %239, %cst_144 {dimension_numbers = #tpu.dot_dimension_numbers<[1], [0], [0], [1], [0, 0, 1, 1], [], []>} : vector<8x32xbf16>, vector<32x128xbf16>, vector<8x128xf32> -> vector<8x128xf32>
    %c1_145 = arith.constant 1 : index
    %c0_146 = arith.constant 0 : index
    %c0_147 = arith.constant 0 : index
    %241 = vector.load %arg17[%c1_145, %c0_146, %c0_147] : memref<2x1x128xf32, #tpu.memory_space<vmem>>, vector<1x1x128xf32>
    %242 = vector.shape_cast %241 : vector<1x1x128xf32> to vector<1x128xf32>
    %243 = vector.broadcast %242 : vector<1x128xf32> to vector<8x128xf32>
    %244 = arith.addf %240, %243 : vector<8x128xf32>
    %245 = arith.mulf %244, %244 : vector<8x128xf32>
    %246 = arith.mulf %244, %245 : vector<8x128xf32>
    %cst_148 = arith.constant 4.471500e-02 : f32
    %247 = vector.broadcast %cst_148 : f32 to vector<8x128xf32>
    %248 = arith.mulf %247, %246 : vector<8x128xf32>
    %249 = arith.addf %244, %248 : vector<8x128xf32>
    %cst_149 = arith.constant 0.797884583 : f32
    %250 = vector.broadcast %cst_149 : f32 to vector<8x128xf32>
    %251 = arith.mulf %250, %249 : vector<8x128xf32>
    %252 = math.tanh %251 : vector<8x128xf32>
    %cst_150 = arith.constant 1.000000e+00 : f32
    %253 = vector.broadcast %cst_150 : f32 to vector<8x128xf32>
    %254 = arith.addf %253, %252 : vector<8x128xf32>
    %cst_151 = arith.constant 5.000000e-01 : f32
    %255 = vector.broadcast %cst_151 : f32 to vector<8x128xf32>
    %256 = arith.mulf %255, %254 : vector<8x128xf32>
    %257 = arith.mulf %244, %256 : vector<8x128xf32>
    %258 = arith.truncf %257 : vector<8x128xf32> to vector<8x128xbf16>
    %c1_152 = arith.constant 1 : index
    %c0_153 = arith.constant 0 : index
    %c0_154 = arith.constant 0 : index
    %259 = vector.load %arg18[%c1_152, %c0_153, %c0_154] : memref<2x128x32xbf16, #tpu.memory_space<vmem>>, vector<1x128x32xbf16>
    %260 = vector.shape_cast %259 : vector<1x128x32xbf16> to vector<128x32xbf16>
    %cst_155 = arith.constant dense<0.000000e+00> : vector<8x32xf32>
    %261 = tpu.matmul %258, %260, %cst_155 {dimension_numbers = #tpu.dot_dimension_numbers<[1], [0], [0], [1], [0, 0, 1, 1], [], []>} : vector<8x128xbf16>, vector<128x32xbf16>, vector<8x32xf32> -> vector<8x32xf32>
    %262 = arith.addf %210, %261 : vector<8x32xf32>
    %c1_156 = arith.constant 1 : index
    %c0_157 = arith.constant 0 : index
    %c0_158 = arith.constant 0 : index
    %263 = vector.load %arg19[%c1_156, %c0_157, %c0_158] : memref<2x1x32xf32, #tpu.memory_space<vmem>>, vector<1x1x32xf32>
    %264 = vector.shape_cast %263 : vector<1x1x32xf32> to vector<1x32xf32>
    %265 = vector.broadcast %264 : vector<1x32xf32> to vector<8x32xf32>
    %266 = arith.addf %262, %265 : vector<8x32xf32>
    %cst_159 = arith.constant dense<0.000000e+00> : vector<32xf32>
    %267 = vector.multi_reduction <add>, %266, %cst_159 [0] : vector<8x32xf32> to vector<32xf32>
    %268 = vector.shape_cast %267 : vector<32xf32> to vector<1x32xf32>
    %cst_160 = arith.constant 8.000000e+00 : f32
    %269 = vector.broadcast %cst_160 : f32 to vector<1x32xf32>
    %270 = arith.divf %268, %269 : vector<1x32xf32>
    %c0_161 = arith.constant 0 : index
    %c0_162 = arith.constant 0 : index
    %271 = vector.load %arg20[%c0_161, %c0_162] : memref<1x32xf32, #tpu.memory_space<vmem>>, vector<1x32xf32>
    %c0_163 = arith.constant 0 : index
    %c0_164 = arith.constant 0 : index
    %272 = vector.load %arg21[%c0_163, %c0_164] : memref<1x32xf32, #tpu.memory_space<vmem>>, vector<1x32xf32>
    %cst_165 = arith.constant dense<0.000000e+00> : vector<1xf32>
    %273 = vector.multi_reduction <add>, %270, %cst_165 [1] : vector<1x32xf32> to vector<1xf32>
    %274 = vector.shape_cast %273 : vector<1xf32> to vector<1x1xf32>
    %cst_166 = arith.constant 3.200000e+01 : f32
    %275 = vector.broadcast %cst_166 : f32 to vector<1x1xf32>
    %276 = arith.divf %274, %275 : vector<1x1xf32>
    %277 = arith.mulf %270, %270 : vector<1x32xf32>
    %cst_167 = arith.constant dense<0.000000e+00> : vector<1xf32>
    %278 = vector.multi_reduction <add>, %277, %cst_167 [1] : vector<1x32xf32> to vector<1xf32>
    %279 = vector.shape_cast %278 : vector<1xf32> to vector<1x1xf32>
    %cst_168 = arith.constant 3.200000e+01 : f32
    %280 = vector.broadcast %cst_168 : f32 to vector<1x1xf32>
    %281 = arith.divf %279, %280 : vector<1x1xf32>
    %282 = arith.mulf %276, %276 : vector<1x1xf32>
    %283 = arith.subf %281, %282 : vector<1x1xf32>
    %284 = vector.broadcast %276 : vector<1x1xf32> to vector<1x32xf32>
    %285 = arith.subf %270, %284 : vector<1x32xf32>
    %cst_169 = arith.constant 9.99999997E-7 : f32
    %286 = vector.broadcast %cst_169 : f32 to vector<1x1xf32>
    %287 = arith.addf %283, %286 : vector<1x1xf32>
    %288 = math.rsqrt %287 : vector<1x1xf32>
    %289 = vector.broadcast %288 : vector<1x1xf32> to vector<1x32xf32>
    %290 = arith.mulf %285, %289 : vector<1x32xf32>
    %291 = arith.mulf %290, %271 : vector<1x32xf32>
    %292 = arith.addf %291, %272 : vector<1x32xf32>
    %293 = arith.truncf %292 : vector<1x32xf32> to vector<1x32xbf16>
    %c0_170 = arith.constant 0 : index
    %c0_171 = arith.constant 0 : index
    %294 = vector.load %arg22[%c0_170, %c0_171] : memref<32x128xbf16, #tpu.memory_space<vmem>>, vector<32x128xbf16>
    %cst_172 = arith.constant dense<0.000000e+00> : vector<1x128xf32>
    %295 = tpu.matmul %293, %294, %cst_172 {dimension_numbers = #tpu.dot_dimension_numbers<[1], [0], [0], [1], [0, 0, 1, 1], [], []>} : vector<1x32xbf16>, vector<32x128xbf16>, vector<1x128xf32> -> vector<1x128xf32>
    %c0_173 = arith.constant 0 : index
    %c0_174 = arith.constant 0 : index
    %296 = vector.load %arg23[%c0_173, %c0_174] : memref<1x128xf32, #tpu.memory_space<vmem>>, vector<1x128xf32>
    %297 = arith.addf %295, %296 : vector<1x128xf32>
    %c0_175 = arith.constant 0 : index
    %c0_176 = arith.constant 0 : index
    %c0_177 = arith.constant 0 : index
    %298 = vector.load %arg24[%c0_175, %c0_176, %c0_177] : memref<1x1x128xf32, #tpu.memory_space<vmem>>, vector<1x1x128xf32>
    %299 = vector.shape_cast %298 : vector<1x1x128xf32> to vector<1x128xf32>
    %300 = vector.shape_cast %297 : vector<1x128xf32> to vector<1x1x128xf32>
    tpu.vector_store %arg24[%c0_175, %c0_176, %c0_177], %300 {strides = array<i32>} : memref<1x1x128xf32, #tpu.memory_space<vmem>>, vector<1x1x128xf32>,
    return
  }
  func.func @transform_0(%arg0: i32) -> (i32, i32, i32) {
    %c0_i32 = arith.constant 0 : i32
    %c0_i32_0 = arith.constant 0 : i32
    %c0_i32_1 = arith.constant 0 : i32
    return %arg0, %c0_i32, %c0_i32_0 : i32, i32, i32
  }
  func.func @transform_1(%arg0: i32) -> (i32, i32) {
    %c0_i32 = arith.constant 0 : i32
    %c0_i32_0 = arith.constant 0 : i32
    %c0_i32_1 = arith.constant 0 : i32
    return %c0_i32, %c0_i32_0 : i32, i32
  }
  func.func @transform_2(%arg0: i32) -> (i32, i32) {
    %c0_i32 = arith.constant 0 : i32
    %c0_i32_0 = arith.constant 0 : i32
    %c0_i32_1 = arith.constant 0 : i32
    return %c0_i32, %c0_i32_0 : i32, i32
  }
  func.func @transform_3(%arg0: i32) -> (i32, i32) {
    %c0_i32 = arith.constant 0 : i32
    %c0_i32_0 = arith.constant 0 : i32
    %c0_i32_1 = arith.constant 0 : i32
    return %c0_i32, %c0_i32_0 : i32, i32
  }
  func.func @transform_4(%arg0: i32) -> (i32, i32, i32) {
    %c0_i32 = arith.constant 0 : i32
    %c0_i32_0 = arith.constant 0 : i32
    %c0_i32_1 = arith.constant 0 : i32
    %c0_i32_2 = arith.constant 0 : i32
    return %c0_i32, %c0_i32_0, %c0_i32_1 : i32, i32, i32
  }
  func.func @transform_5(%arg0: i32) -> (i32, i32, i32) {
    %c0_i32 = arith.constant 0 : i32
    %c0_i32_0 = arith.constant 0 : i32
    %c0_i32_1 = arith.constant 0 : i32
    %c0_i32_2 = arith.constant 0 : i32
    return %c0_i32, %c0_i32_0, %c0_i32_1 : i32, i32, i32
  }
  func.func @transform_6(%arg0: i32) -> (i32, i32, i32, i32) {
    %c0_i32 = arith.constant 0 : i32
    %c0_i32_0 = arith.constant 0 : i32
    %c0_i32_1 = arith.constant 0 : i32
    %c0_i32_2 = arith.constant 0 : i32
    %c0_i32_3 = arith.constant 0 : i32
    return %c0_i32, %c0_i32_0, %c0_i32_1, %c0_i32_2 : i32, i32, i32, i32
  }
  func.func @transform_7(%arg0: i32) -> (i32, i32, i32, i32) {
    %c0_i32 = arith.constant 0 : i32
    %c0_i32_0 = arith.constant 0 : i32
    %c0_i32_1 = arith.constant 0 : i32
    %c0_i32_2 = arith.constant 0 : i32
    %c0_i32_3 = arith.constant 0 : i32
    return %c0_i32, %c0_i32_0, %c0_i32_1, %c0_i32_2 : i32, i32, i32, i32
  }
  func.func @transform_8(%arg0: i32) -> (i32, i32, i32, i32) {
    %c0_i32 = arith.constant 0 : i32
    %c0_i32_0 = arith.constant 0 : i32
    %c0_i32_1 = arith.constant 0 : i32
    %c0_i32_2 = arith.constant 0 : i32
    %c0_i32_3 = arith.constant 0 : i32
    return %c0_i32, %c0_i32_0, %c0_i32_1, %c0_i32_2 : i32, i32, i32, i32
  }
  func.func @transform_9(%arg0: i32) -> (i32, i32, i32, i32) {
    %c0_i32 = arith.constant 0 : i32
    %c0_i32_0 = arith.constant 0 : i32
    %c0_i32_1 = arith.constant 0 : i32
    %c0_i32_2 = arith.constant 0 : i32
    %c0_i32_3 = arith.constant 0 : i32
    return %c0_i32, %c0_i32_0, %c0_i32_1, %c0_i32_2 : i32, i32, i32, i32
  }
  func.func @transform_10(%arg0: i32) -> (i32, i32, i32, i32) {
    %c0_i32 = arith.constant 0 : i32
    %c0_i32_0 = arith.constant 0 : i32
    %c0_i32_1 = arith.constant 0 : i32
    %c0_i32_2 = arith.constant 0 : i32
    %c0_i32_3 = arith.constant 0 : i32
    return %c0_i32, %c0_i32_0, %c0_i32_1, %c0_i32_2 : i32, i32, i32, i32
  }
  func.func @transform_11(%arg0: i32) -> (i32, i32, i32, i32) {
    %c0_i32 = arith.constant 0 : i32
    %c0_i32_0 = arith.constant 0 : i32
    %c0_i32_1 = arith.constant 0 : i32
    %c0_i32_2 = arith.constant 0 : i32
    %c0_i32_3 = arith.constant 0 : i32
    return %c0_i32, %c0_i32_0, %c0_i32_1, %c0_i32_2 : i32, i32, i32, i32
  }
  func.func @transform_12(%arg0: i32) -> (i32, i32, i32) {
    %c0_i32 = arith.constant 0 : i32
    %c0_i32_0 = arith.constant 0 : i32
    %c0_i32_1 = arith.constant 0 : i32
    %c0_i32_2 = arith.constant 0 : i32
    return %c0_i32, %c0_i32_0, %c0_i32_1 : i32, i32, i32
  }
  func.func @transform_13(%arg0: i32) -> (i32, i32, i32) {
    %c0_i32 = arith.constant 0 : i32
    %c0_i32_0 = arith.constant 0 : i32
    %c0_i32_1 = arith.constant 0 : i32
    %c0_i32_2 = arith.constant 0 : i32
    return %c0_i32, %c0_i32_0, %c0_i32_1 : i32, i32, i32
  }
  func.func @transform_14(%arg0: i32) -> (i32, i32, i32) {
    %c0_i32 = arith.constant 0 : i32
    %c0_i32_0 = arith.constant 0 : i32
    %c0_i32_1 = arith.constant 0 : i32
    %c0_i32_2 = arith.constant 0 : i32
    return %c0_i32, %c0_i32_0, %c0_i32_1 : i32, i32, i32
  }
  func.func @transform_15(%arg0: i32) -> (i32, i32, i32) {
    %c0_i32 = arith.constant 0 : i32
    %c0_i32_0 = arith.constant 0 : i32
    %c0_i32_1 = arith.constant 0 : i32
    %c0_i32_2 = arith.constant 0 : i32
    return %c0_i32, %c0_i32_0, %c0_i32_1 : i32, i32, i32
  }
  func.func @transform_16(%arg0: i32) -> (i32, i32, i32) {
    %c0_i32 = arith.constant 0 : i32
    %c0_i32_0 = arith.constant 0 : i32
    %c0_i32_1 = arith.constant 0 : i32
    %c0_i32_2 = arith.constant 0 : i32
    return %c0_i32, %c0_i32_0, %c0_i32_1 : i32, i32, i32
  }
  func.func @transform_17(%arg0: i32) -> (i32, i32, i32) {
    %c0_i32 = arith.constant 0 : i32
    %c0_i32_0 = arith.constant 0 : i32
    %c0_i32_1 = arith.constant 0 : i32
    %c0_i32_2 = arith.constant 0 : i32
    return %c0_i32, %c0_i32_0, %c0_i32_1 : i32, i32, i32
  }
  func.func @transform_18(%arg0: i32) -> (i32, i32, i32) {
    %c0_i32 = arith.constant 0 : i32
    %c0_i32_0 = arith.constant 0 : i32
    %c0_i32_1 = arith.constant 0 : i32
    %c0_i32_2 = arith.constant 0 : i32
    return %c0_i32, %c0_i32_0, %c0_i32_1 : i32, i32, i32
  }
  func.func @transform_19(%arg0: i32) -> (i32, i32) {
    %c0_i32 = arith.constant 0 : i32
    %c0_i32_0 = arith.constant 0 : i32
    %c0_i32_1 = arith.constant 0 : i32
    return %c0_i32, %c0_i32_0 : i32, i32
  }
  func.func @transform_20(%arg0: i32) -> (i32, i32) {
    %c0_i32 = arith.constant 0 : i32
    %c0_i32_0 = arith.constant 0 : i32
    %c0_i32_1 = arith.constant 0 : i32
    return %c0_i32, %c0_i32_0 : i32, i32
  }
  func.func @transform_21(%arg0: i32) -> (i32, i32) {
    %c0_i32 = arith.constant 0 : i32
    %c0_i32_0 = arith.constant 0 : i32
    %c0_i32_1 = arith.constant 0 : i32
    return %c0_i32, %c0_i32_0 : i32, i32
  }
  func.func @transform_22(%arg0: i32) -> (i32, i32) {
    %c0_i32 = arith.constant 0 : i32
    %c0_i32_0 = arith.constant 0 : i32
    %c0_i32_1 = arith.constant 0 : i32
    return %c0_i32, %c0_i32_0 : i32, i32
  }
  func.func @transform_23(%arg0: i32) -> (i32, i32, i32) {
    %c0_i32 = arith.constant 0 : i32
    %c0_i32_0 = arith.constant 0 : i32
    %c0_i32_1 = arith.constant 0 : i32
    return %arg0, %c0_i32, %c0_i32_0 : i32, i32, i32
  }
}

</mosaic_0001>

<llo_original>
// kernel: tpu_custom_call.1
$region0: #{tpu_custom_call.1}
  #allocation0 [shape = 'u32[]', space=smem, size = 0x4, offset = 0x4, fixed_abs, tag = 'smem constant byte address 0x4 - core index']
  #allocation1 [shape = 'u32[144,128]{1,0:T(1,128)}', space=vmem, size = 0x12000, scoped, tag = 'internal scratch']
  %s0 = inlined_call_operand.vmem [shape: bf16[2,8,384], index: 0, kind: input, shape index: {}]
  %s1 = inlined_call_operand.vmem [shape: bf16[384,32], index: 1, kind: input, shape index: {}]
  %s2 = inlined_call_operand.vmem [shape: f32[1,32], index: 2, kind: input, shape index: {}]
  %s3 = inlined_call_operand.vmem [shape: f32[8,32], index: 3, kind: input, shape index: {}]
  %s4 = inlined_call_operand.vmem [shape: f32[2,1,32], index: 4, kind: input, shape index: {}]
  %s5 = inlined_call_operand.vmem [shape: f32[2,1,32], index: 5, kind: input, shape index: {}]
  %s6 = inlined_call_operand.vmem [shape: bf16[2,2,32,16], index: 6, kind: input, shape index: {}]
  %s7 = inlined_call_operand.vmem [shape: f32[2,2,1,16], index: 7, kind: input, shape index: {}]
  %s8 = inlined_call_operand.vmem [shape: bf16[2,2,32,16], index: 8, kind: input, shape index: {}]
  %s9 = inlined_call_operand.vmem [shape: f32[2,2,1,16], index: 9, kind: input, shape index: {}]
  %s10 = inlined_call_operand.vmem [shape: bf16[2,2,32,32], index: 10, kind: input, shape index: {}]
  %s11 = inlined_call_operand.vmem [shape: f32[2,2,1,32], index: 11, kind: input, shape index: {}]
  %s12 = inlined_call_operand.vmem [shape: f32[2,1,32], index: 12, kind: input, shape index: {}]
  %s13 = inlined_call_operand.vmem [shape: f32[2,1,32], index: 13, kind: input, shape index: {}]
  %s14 = inlined_call_operand.vmem [shape: f32[2,1,32], index: 14, kind: input, shape index: {}]
  %s15 = inlined_call_operand.vmem [shape: bf16[2,32,128], index: 15, kind: input, shape index: {}]
  %s16 = inlined_call_operand.vmem [shape: f32[2,1,128], index: 16, kind: input, shape index: {}]
  %s17 = inlined_call_operand.vmem [shape: bf16[2,128,32], index: 17, kind: input, shape index: {}]
  %s18 = inlined_call_operand.vmem [shape: f32[2,1,32], index: 18, kind: input, shape index: {}]
  %s19 = inlined_call_operand.vmem [shape: f32[1,32], index: 19, kind: input, shape index: {}]
  %s20 = inlined_call_operand.vmem [shape: f32[1,32], index: 20, kind: input, shape index: {}]
  %s21 = inlined_call_operand.vmem [shape: bf16[32,128], index: 21, kind: input, shape index: {}]
  %s22 = inlined_call_operand.vmem [shape: f32[1,128], index: 22, kind: input, shape index: {}]
  %s23 = inlined_call_operand.hbm [shape: f32[2,1,128], index: 23, kind: output, shape index: {}]
  %s24 = sld [smem:[#allocation0]]
  $region125: #{tpu_custom_call.1} parent=0
    _
  %s26 = ssub.s32 1, %s24
  %s27 = scalar_select 0, %s26, %s24
  $region1: #{tpu_custom_call.1} parent=0
    #allocation2 [shape = 'u8[1024]{0}', space=vmem, size = 0x400, scoped, tag = 'output window, operand 0']
    #allocation3 [shape = 's32[2]{0}', space=sflag, size = 0x8, scoped, tag = 'scoped memory for tpu_custom_call.1']
    %28 = vsyncpa [#allocation3], 0
    %s29 = scalar_lea.sflag [#allocation3], 1
    %30 = vsyncpa %s29, 0
    loop: start=0, step=1, limit=4
    $region2: #{tpu_custom_call.1} parent=1 // loop_pre_header
      _
    $region3: #{tpu_custom_call.1} parent=1 // loop_header
      %s32 = sphi 0, %s36
      %p33 = scmp.ge.s32.totalorder %s32, 4
      %s42 = sphi 0, %s44
      %s45 = sphi 0, %s42
      %s46 = sphi 0, %s45
      %s62 = sphi 0, %s46
      %s66 = sphi 0, %s66
      %s68 = sphi 0, %s66
      %s69 = sphi 0, %s68
      %s83 = sphi 0, %s69
      %s87 = sphi 0, %s87
      %s89 = sphi 0, %s87
      %s90 = sphi 0, %s89
      %s104 = sphi 0, %s90
      %s108 = sphi 0, %s108
      %s110 = sphi 0, %s108
      %s111 = sphi 0, %s110
      %s125 = sphi 0, %s111
      %s129 = sphi 0, %s129
      %s131 = sphi 0, %s129
      %s132 = sphi 0, %s131
      %s146 = sphi 0, %s132
      %s150 = sphi 0, %s150
      %s152 = sphi 0, %s150
      %s153 = sphi 0, %s152
      %s167 = sphi 0, %s153
      %s171 = sphi 0, %s171
      %s173 = sphi 0, %s171
      %s174 = sphi 0, %s173
      %s188 = sphi 0, %s174
      %s192 = sphi 0, %s192
      %s194 = sphi 0, %s192
      %s195 = sphi 0, %s194
      %s209 = sphi 0, %s195
      %s213 = sphi 0, %s213
      %s215 = sphi 0, %s213
      %s216 = sphi 0, %s215
      %s230 = sphi 0, %s216
      %s234 = sphi 0, %s234
      %s236 = sphi 0, %s234
      %s237 = sphi 0, %s236
      %s251 = sphi 0, %s237
      %s255 = sphi 0, %s255
      %s257 = sphi 0, %s255
      %s258 = sphi 0, %s257
      %s272 = sphi 0, %s258
      %s276 = sphi 0, %s276
      %s278 = sphi 0, %s276
      %s279 = sphi 0, %s278
      %s293 = sphi 0, %s279
      %s297 = sphi 0, %s297
      %s299 = sphi 0, %s297
      %s300 = sphi 0, %s299
      %s314 = sphi 0, %s300
      %s318 = sphi 0, %s318
      %s320 = sphi 0, %s318
      %s321 = sphi 0, %s320
      %s335 = sphi 0, %s321
      %s339 = sphi 0, %s339
      %s341 = sphi 0, %s339
      %s342 = sphi 0, %s341
      %s356 = sphi 0, %s342
      %s360 = sphi 0, %s360
      %s362 = sphi 0, %s360
      %s363 = sphi 0, %s362
      %s377 = sphi 0, %s363
      %s381 = sphi 0, %s381
      %s383 = sphi 0, %s381
      %s384 = sphi 0, %s383
      %s398 = sphi 0, %s384
      %s402 = sphi 0, %s402
      %s404 = sphi 0, %s402
      %s405 = sphi 0, %s404
      %s419 = sphi 0, %s405
      %s423 = sphi 0, %s423
      %s425 = sphi 0, %s423
      %s426 = sphi 0, %s425
      %s440 = sphi 0, %s426
      %s444 = sphi 0, %s444
      %s446 = sphi 0, %s444
      %s447 = sphi 0, %s446
      %s461 = sphi 0, %s447
      %s465 = sphi 0, %s465
      %s467 = sphi 0, %s465
      %s468 = sphi 0, %s467
      %s482 = sphi 0, %s468
      %s486 = sphi 0, %s486
      %s488 = sphi 0, %s486
      %s489 = sphi 0, %s488
      %s503 = sphi 0, %s489
      %s507 = sphi 0, %s507
      %s509 = sphi 0, %s507
      %s510 = sphi 0, %s509
      %s524 = sphi 0, %s510
      %s530 = sphi 0, %s532
      %s533 = sphi 0, %s530
      %s534 = sphi 0, %s533
      %s550 = sphi 0, %s534
    $region4: #{tpu_custom_call.1} parent=1 // loop_header_branch
      %35 = sbr.rel (%p33) target = $region8
    $region5: #{tpu_custom_call.1} parent=1 // loop_body
      %s37 = ssub.s32 %s32, 1
      %s38 = ssub.s32 %s32, 2
      %s39 = sadd.s32 %s32, 1
      %s40 = ssub.s32 %s32, %s39
      %p41 = scmp.eq.s32.totalorder %s40, 0
      %s43 = sadd.s32 %s42, 1
      %s44 = scalar_select %p41, %s42, %s43
      %p47 = pneg %p41
      %p48 = scmp.eq.s32.totalorder %s32, 1
      %p49 = por %p47, %p48
      %p50 = scmp.ne.s32.totalorder %s42, %s45
      %p51 = scmp.eq.s32.totalorder %s32, 0
      %p52 = por %p50, %p51
      %p53 = scmp.ne.s32.totalorder %s42, %s45
      %p54 = scmp.eq.s32.totalorder %s37, 1
      %p55 = por %p53, %p54
      %p56 = scmp.ne.s32.totalorder %s45, %s46
      %p57 = scmp.eq.s32.totalorder %s37, 0
      %p58 = por %p56, %p57
      %p59 = scmp.ne.s32.totalorder %s45, %s46
      %p60 = scmp.eq.s32.totalorder %s38, 1
      %p61 = por %p59, %p60
      %p63 = scmp.ne.s32.totalorder %s46, %s62
      %p64 = scmp.eq.s32.totalorder %s38, 0
      %p65 = por %p63, %p64
      %s67 = sadd.s32 %s66, 1
      %p70 = scmp.eq.s32.totalorder %s32, 1
      %p71 = scmp.ne.s32.totalorder %s66, %s68
      %p72 = scmp.eq.s32.totalorder %s32, 0
      %p73 = por %p71, %p72
      %p74 = scmp.ne.s32.totalorder %s66, %s68
      %p75 = scmp.eq.s32.totalorder %s37, 1
      %p76 = por %p74, %p75
      %p77 = scmp.ne.s32.totalorder %s68, %s69
      %p78 = scmp.eq.s32.totalorder %s37, 0
      %p79 = por %p77, %p78
      %p80 = scmp.ne.s32.totalorder %s68, %s69
      %p81 = scmp.eq.s32.totalorder %s38, 1
      %p82 = por %p80, %p81
      %p84 = scmp.ne.s32.totalorder %s69, %s83
      %p85 = scmp.eq.s32.totalorder %s38, 0
      %p86 = por %p84, %p85
      %s88 = sadd.s32 %s87, 1
      %p91 = scmp.eq.s32.totalorder %s32, 1
      %p92 = scmp.ne.s32.totalorder %s87, %s89
      %p93 = scmp.eq.s32.totalorder %s32, 0
      %p94 = por %p92, %p93
      %p95 = scmp.ne.s32.totalorder %s87, %s89
      %p96 = scmp.eq.s32.totalorder %s37, 1
      %p97 = por %p95, %p96
      %p98 = scmp.ne.s32.totalorder %s89, %s90
      %p99 = scmp.eq.s32.totalorder %s37, 0
      %p100 = por %p98, %p99
      %p101 = scmp.ne.s32.totalorder %s89, %s90
      %p102 = scmp.eq.s32.totalorder %s38, 1
      %p103 = por %p101, %p102
      %p105 = scmp.ne.s32.totalorder %s90, %s104
      %p106 = scmp.eq.s32.totalorder %s38, 0
      %p107 = por %p105, %p106
      %s109 = sadd.s32 %s108, 1
      %p112 = scmp.eq.s32.totalorder %s32, 1
      %p113 = scmp.ne.s32.totalorder %s108, %s110
      %p114 = scmp.eq.s32.totalorder %s32, 0
      %p115 = por %p113, %p114
      %p116 = scmp.ne.s32.totalorder %s108, %s110
      %p117 = scmp.eq.s32.totalorder %s37, 1
      %p118 = por %p116, %p117
      %p119 = scmp.ne.s32.totalorder %s110, %s111
      %p120 = scmp.eq.s32.totalorder %s37, 0
      %p121 = por %p119, %p120
      %p122 = scmp.ne.s32.totalorder %s110, %s111
      %p123 = scmp.eq.s32.totalorder %s38, 1
      %p124 = por %p122, %p123
      %p126 = scmp.ne.s32.totalorder %s111, %s125
      %p127 = scmp.eq.s32.totalorder %s38, 0
      %p128 = por %p126, %p127
      %s130 = sadd.s32 %s129, 1
      %p133 = scmp.eq.s32.totalorder %s32, 1
      %p134 = scmp.ne.s32.totalorder %s129, %s131
      %p135 = scmp.eq.s32.totalorder %s32, 0
      %p136 = por %p134, %p135
      %p137 = scmp.ne.s32.totalorder %s129, %s131
      %p138 = scmp.eq.s32.totalorder %s37, 1
      %p139 = por %p137, %p138
      %p140 = scmp.ne.s32.totalorder %s131, %s132
      %p141 = scmp.eq.s32.totalorder %s37, 0
      %p142 = por %p140, %p141
      %p143 = scmp.ne.s32.totalorder %s131, %s132
      %p144 = scmp.eq.s32.totalorder %s38, 1
      %p145 = por %p143, %p144
      %p147 = scmp.ne.s32.totalorder %s132, %s146
      %p148 = scmp.eq.s32.totalorder %s38, 0
      %p149 = por %p147, %p148
      %s151 = sadd.s32 %s150, 1
      %p154 = scmp.eq.s32.totalorder %s32, 1
      %p155 = scmp.ne.s32.totalorder %s150, %s152
      %p156 = scmp.eq.s32.totalorder %s32, 0
      %p157 = por %p155, %p156
      %p158 = scmp.ne.s32.totalorder %s150, %s152
      %p159 = scmp.eq.s32.totalorder %s37, 1
      %p160 = por %p158, %p159
      %p161 = scmp.ne.s32.totalorder %s152, %s153
      %p162 = scmp.eq.s32.totalorder %s37, 0
      %p163 = por %p161, %p162
      %p164 = scmp.ne.s32.totalorder %s152, %s153
      %p165 = scmp.eq.s32.totalorder %s38, 1
      %p166 = por %p164, %p165
      %p168 = scmp.ne.s32.totalorder %s153, %s167
      %p169 = scmp.eq.s32.totalorder %s38, 0
      %p170 = por %p168, %p169
      %s172 = sadd.s32 %s171, 1
      %p175 = scmp.eq.s32.totalorder %s32, 1
      %p176 = scmp.ne.s32.totalorder %s171, %s173
      %p177 = scmp.eq.s32.totalorder %s32, 0
      %p178 = por %p176, %p177
      %p179 = scmp.ne.s32.totalorder %s171, %s173
      %p180 = scmp.eq.s32.totalorder %s37, 1
      %p181 = por %p179, %p180
      %p182 = scmp.ne.s32.totalorder %s173, %s174
      %p183 = scmp.eq.s32.totalorder %s37, 0
      %p184 = por %p182, %p183
      %p185 = scmp.ne.s32.totalorder %s173, %s174
      %p186 = scmp.eq.s32.totalorder %s38, 1
      %p187 = por %p185, %p186
      %p189 = scmp.ne.s32.totalorder %s174, %s188
      %p190 = scmp.eq.s32.totalorder %s38, 0
      %p191 = por %p189, %p190
      %s193 = sadd.s32 %s192, 1
      %p196 = scmp.eq.s32.totalorder %s32, 1
      %p197 = scmp.ne.s32.totalorder %s192, %s194
      %p198 = scmp.eq.s32.totalorder %s32, 0
      %p199 = por %p197, %p198
      %p200 = scmp.ne.s32.totalorder %s192, %s194
      %p201 = scmp.eq.s32.totalorder %s37, 1
      %p202 = por %p200, %p201
      %p203 = scmp.ne.s32.totalorder %s194, %s195
      %p204 = scmp.eq.s32.totalorder %s37, 0
      %p205 = por %p203, %p204
      %p206 = scmp.ne.s32.totalorder %s194, %s195
      %p207 = scmp.eq.s32.totalorder %s38, 1
      %p208 = por %p206, %p207
      %p210 = scmp.ne.s32.totalorder %s195, %s209
      %p211 = scmp.eq.s32.totalorder %s38, 0
      %p212 = por %p210, %p211
      %s214 = sadd.s32 %s213, 1
      %p217 = scmp.eq.s32.totalorder %s32, 1
      %p218 = scmp.ne.s32.totalorder %s213, %s215
      %p219 = scmp.eq.s32.totalorder %s32, 0
      %p220 = por %p218, %p219
      %p221 = scmp.ne.s32.totalorder %s213, %s215
      %p222 = scmp.eq.s32.totalorder %s37, 1
      %p223 = por %p221, %p222
      %p224 = scmp.ne.s32.totalorder %s215, %s216
      %p225 = scmp.eq.s32.totalorder %s37, 0
      %p226 = por %p224, %p225
      %p227 = scmp.ne.s32.totalorder %s215, %s216
      %p228 = scmp.eq.s32.totalorder %s38, 1
      %p229 = por %p227, %p228
      %p231 = scmp.ne.s32.totalorder %s216, %s230
      %p232 = scmp.eq.s32.totalorder %s38, 0
      %p233 = por %p231, %p232
      %s235 = sadd.s32 %s234, 1
      %p238 = scmp.eq.s32.totalorder %s32, 1
      %p239 = scmp.ne.s32.totalorder %s234, %s236
      %p240 = scmp.eq.s32.totalorder %s32, 0
      %p241 = por %p239, %p240
      %p242 = scmp.ne.s32.totalorder %s234, %s236
      %p243 = scmp.eq.s32.totalorder %s37, 1
      %p244 = por %p242, %p243
      %p245 = scmp.ne.s32.totalorder %s236, %s237
      %p246 = scmp.eq.s32.totalorder %s37, 0
      %p247 = por %p245, %p246
      %p248 = scmp.ne.s32.totalorder %s236, %s237
      %p249 = scmp.eq.s32.totalorder %s38, 1
      %p250 = por %p248, %p249
      %p252 = scmp.ne.s32.totalorder %s237, %s251
      %p253 = scmp.eq.s32.totalorder %s38, 0
      %p254 = por %p252, %p253
      %s256 = sadd.s32 %s255, 1
      %p259 = scmp.eq.s32.totalorder %s32, 1
      %p260 = scmp.ne.s32.totalorder %s255, %s257
      %p261 = scmp.eq.s32.totalorder %s32, 0
      %p262 = por %p260, %p261
      %p263 = scmp.ne.s32.totalorder %s255, %s257
      %p264 = scmp.eq.s32.totalorder %s37, 1
      %p265 = por %p263, %p264
      %p266 = scmp.ne.s32.totalorder %s257, %s258
      %p267 = scmp.eq.s32.totalorder %s37, 0
      %p268 = por %p266, %p267
      %p269 = scmp.ne.s32.totalorder %s257, %s258
      %p270 = scmp.eq.s32.totalorder %s38, 1
      %p271 = por %p269, %p270
      %p273 = scmp.ne.s32.totalorder %s258, %s272
      %p274 = scmp.eq.s32.totalorder %s38, 0
      %p275 = por %p273, %p274
      %s277 = sadd.s32 %s276, 1
      %p280 = scmp.eq.s32.totalorder %s32, 1
      %p281 = scmp.ne.s32.totalorder %s276, %s278
      %p282 = scmp.eq.s32.totalorder %s32, 0
      %p283 = por %p281, %p282
      %p284 = scmp.ne.s32.totalorder %s276, %s278
      %p285 = scmp.eq.s32.totalorder %s37, 1
      %p286 = por %p284, %p285
      %p287 = scmp.ne.s32.totalorder %s278, %s279
      %p288 = scmp.eq.s32.totalorder %s37, 0
      %p289 = por %p287, %p288
      %p290 = scmp.ne.s32.totalorder %s278, %s279
      %p291 = scmp.eq.s32.totalorder %s38, 1
      %p292 = por %p290, %p291
      %p294 = scmp.ne.s32.totalorder %s279, %s293
      %p295 = scmp.eq.s32.totalorder %s38, 0
      %p296 = por %p294, %p295
      %s298 = sadd.s32 %s297, 1
      %p301 = scmp.eq.s32.totalorder %s32, 1
      %p302 = scmp.ne.s32.totalorder %s297, %s299
      %p303 = scmp.eq.s32.totalorder %s32, 0
      %p304 = por %p302, %p303
      %p305 = scmp.ne.s32.totalorder %s297, %s299
      %p306 = scmp.eq.s32.totalorder %s37, 1
      %p307 = por %p305, %p306
      %p308 = scmp.ne.s32.totalorder %s299, %s300
      %p309 = scmp.eq.s32.totalorder %s37, 0
      %p310 = por %p308, %p309
      %p311 = scmp.ne.s32.totalorder %s299, %s300
      %p312 = scmp.eq.s32.totalorder %s38, 1
      %p313 = por %p311, %p312
      %p315 = scmp.ne.s32.totalorder %s300, %s314
      %p316 = scmp.eq.s32.totalorder %s38, 0
      %p317 = por %p315, %p316
      %s319 = sadd.s32 %s318, 1
      %p322 = scmp.eq.s32.totalorder %s32, 1
      %p323 = scmp.ne.s32.totalorder %s318, %s320
      %p324 = scmp.eq.s32.totalorder %s32, 0
      %p325 = por %p323, %p324
      %p326 = scmp.ne.s32.totalorder %s318, %s320
      %p327 = scmp.eq.s32.totalorder %s37, 1
      %p328 = por %p326, %p327
      %p329 = scmp.ne.s32.totalorder %s320, %s321
      %p330 = scmp.eq.s32.totalorder %s37, 0
      %p331 = por %p329, %p330
      %p332 = scmp.ne.s32.totalorder %s320, %s321
      %p333 = scmp.eq.s32.totalorder %s38, 1
      %p334 = por %p332, %p333
      %p336 = scmp.ne.s32.totalorder %s321, %s335
      %p337 = scmp.eq.s32.totalorder %s38, 0
      %p338 = por %p336, %p337
      %s340 = sadd.s32 %s339, 1
      %p343 = scmp.eq.s32.totalorder %s32, 1
      %p344 = scmp.ne.s32.totalorder %s339, %s341
      %p345 = scmp.eq.s32.totalorder %s32, 0
      %p346 = por %p344, %p345
      %p347 = scmp.ne.s32.totalorder %s339, %s341
      %p348 = scmp.eq.s32.totalorder %s37, 1
      %p349 = por %p347, %p348
      %p350 = scmp.ne.s32.totalorder %s341, %s342
      %p351 = scmp.eq.s32.totalorder %s37, 0
      %p352 = por %p350, %p351
      %p353 = scmp.ne.s32.totalorder %s341, %s342
      %p354 = scmp.eq.s32.totalorder %s38, 1
      %p355 = por %p353, %p354
      %p357 = scmp.ne.s32.totalorder %s342, %s356
      %p358 = scmp.eq.s32.totalorder %s38, 0
      %p359 = por %p357, %p358
      %s361 = sadd.s32 %s360, 1
      %p364 = scmp.eq.s32.totalorder %s32, 1
      %p365 = scmp.ne.s32.totalorder %s360, %s362
      %p366 = scmp.eq.s32.totalorder %s32, 0
      %p367 = por %p365, %p366
      %p368 = scmp.ne.s32.totalorder %s360, %s362
      %p369 = scmp.eq.s32.totalorder %s37, 1
      %p370 = por %p368, %p369
      %p371 = scmp.ne.s32.totalorder %s362, %s363
      %p372 = scmp.eq.s32.totalorder %s37, 0
      %p373 = por %p371, %p372
      %p374 = scmp.ne.s32.totalorder %s362, %s363
      %p375 = scmp.eq.s32.totalorder %s38, 1
      %p376 = por %p374, %p375
      %p378 = scmp.ne.s32.totalorder %s363, %s377
      %p379 = scmp.eq.s32.totalorder %s38, 0
      %p380 = por %p378, %p379
      %s382 = sadd.s32 %s381, 1
      %p385 = scmp.eq.s32.totalorder %s32, 1
      %p386 = scmp.ne.s32.totalorder %s381, %s383
      %p387 = scmp.eq.s32.totalorder %s32, 0
      %p388 = por %p386, %p387
      %p389 = scmp.ne.s32.totalorder %s381, %s383
      %p390 = scmp.eq.s32.totalorder %s37, 1
      %p391 = por %p389, %p390
      %p392 = scmp.ne.s32.totalorder %s383, %s384
      %p393 = scmp.eq.s32.totalorder %s37, 0
      %p394 = por %p392, %p393
      %p395 = scmp.ne.s32.totalorder %s383, %s384
      %p396 = scmp.eq.s32.totalorder %s38, 1
      %p397 = por %p395, %p396
      %p399 = scmp.ne.s32.totalorder %s384, %s398
      %p400 = scmp.eq.s32.totalorder %s38, 0
      %p401 = por %p399, %p400
      %s403 = sadd.s32 %s402, 1
      %p406 = scmp.eq.s32.totalorder %s32, 1
      %p407 = scmp.ne.s32.totalorder %s402, %s404
      %p408 = scmp.eq.s32.totalorder %s32, 0
      %p409 = por %p407, %p408
      %p410 = scmp.ne.s32.totalorder %s402, %s404
      %p411 = scmp.eq.s32.totalorder %s37, 1
      %p412 = por %p410, %p411
      %p413 = scmp.ne.s32.totalorder %s404, %s405
      %p414 = scmp.eq.s32.totalorder %s37, 0
      %p415 = por %p413, %p414
      %p416 = scmp.ne.s32.totalorder %s404, %s405
      %p417 = scmp.eq.s32.totalorder %s38, 1
      %p418 = por %p416, %p417
      %p420 = scmp.ne.s32.totalorder %s405, %s419
      %p421 = scmp.eq.s32.totalorder %s38, 0
      %p422 = por %p420, %p421
      %s424 = sadd.s32 %s423, 1
      %p427 = scmp.eq.s32.totalorder %s32, 1
      %p428 = scmp.ne.s32.totalorder %s423, %s425
      %p429 = scmp.eq.s32.totalorder %s32, 0
      %p430 = por %p428, %p429
      %p431 = scmp.ne.s32.totalorder %s423, %s425
      %p432 = scmp.eq.s32.totalorder %s37, 1
      %p433 = por %p431, %p432
      %p434 = scmp.ne.s32.totalorder %s425, %s426
      %p435 = scmp.eq.s32.totalorder %s37, 0
      %p436 = por %p434, %p435
      %p437 = scmp.ne.s32.totalorder %s425, %s426
      %p438 = scmp.eq.s32.totalorder %s38, 1
      %p439 = por %p437, %p438
      %p441 = scmp.ne.s32.totalorder %s426, %s440
      %p442 = scmp.eq.s32.totalorder %s38, 0
      %p443 = por %p441, %p442
      %s445 = sadd.s32 %s444, 1
      %p448 = scmp.eq.s32.totalorder %s32, 1
      %p449 = scmp.ne.s32.totalorder %s444, %s446
      %p450 = scmp.eq.s32.totalorder %s32, 0
      %p451 = por %p449, %p450
      %p452 = scmp.ne.s32.totalorder %s444, %s446
      %p453 = scmp.eq.s32.totalorder %s37, 1
      %p454 = por %p452, %p453
      %p455 = scmp.ne.s32.totalorder %s446, %s447
      %p456 = scmp.eq.s32.totalorder %s37, 0
      %p457 = por %p455, %p456
      %p458 = scmp.ne.s32.totalorder %s446, %s447
      %p459 = scmp.eq.s32.totalorder %s38, 1
      %p460 = por %p458, %p459
      %p462 = scmp.ne.s32.totalorder %s447, %s461
      %p463 = scmp.eq.s32.totalorder %s38, 0
      %p464 = por %p462, %p463
      %s466 = sadd.s32 %s465, 1
      %p469 = scmp.eq.s32.totalorder %s32, 1
      %p470 = scmp.ne.s32.totalorder %s465, %s467
      %p471 = scmp.eq.s32.totalorder %s32, 0
      %p472 = por %p470, %p471
      %p473 = scmp.ne.s32.totalorder %s465, %s467
      %p474 = scmp.eq.s32.totalorder %s37, 1
      %p475 = por %p473, %p474
      %p476 = scmp.ne.s32.totalorder %s467, %s468
      %p477 = scmp.eq.s32.totalorder %s37, 0
      %p478 = por %p476, %p477
      %p479 = scmp.ne.s32.totalorder %s467, %s468
      %p480 = scmp.eq.s32.totalorder %s38, 1
      %p481 = por %p479, %p480
      %p483 = scmp.ne.s32.totalorder %s468, %s482
      %p484 = scmp.eq.s32.totalorder %s38, 0
      %p485 = por %p483, %p484
      %s487 = sadd.s32 %s486, 1
      %p490 = scmp.eq.s32.totalorder %s32, 1
      %p491 = scmp.ne.s32.totalorder %s486, %s488
      %p492 = scmp.eq.s32.totalorder %s32, 0
      %p493 = por %p491, %p492
      %p494 = scmp.ne.s32.totalorder %s486, %s488
      %p495 = scmp.eq.s32.totalorder %s37, 1
      %p496 = por %p494, %p495
      %p497 = scmp.ne.s32.totalorder %s488, %s489
      %p498 = scmp.eq.s32.totalorder %s37, 0
      %p499 = por %p497, %p498
      %p500 = scmp.ne.s32.totalorder %s488, %s489
      %p501 = scmp.eq.s32.totalorder %s38, 1
      %p502 = por %p500, %p501
      %p504 = scmp.ne.s32.totalorder %s489, %s503
      %p505 = scmp.eq.s32.totalorder %s38, 0
      %p506 = por %p504, %p505
      %s508 = sadd.s32 %s507, 1
      %p511 = scmp.eq.s32.totalorder %s32, 1
      %p512 = scmp.ne.s32.totalorder %s507, %s509
      %p513 = scmp.eq.s32.totalorder %s32, 0
      %p514 = por %p512, %p513
      %p515 = scmp.ne.s32.totalorder %s507, %s509
      %p516 = scmp.eq.s32.totalorder %s37, 1
      %p517 = por %p515, %p516
      %p518 = scmp.ne.s32.totalorder %s509, %s510
      %p519 = scmp.eq.s32.totalorder %s37, 0
      %p520 = por %p518, %p519
      %p521 = scmp.ne.s32.totalorder %s509, %s510
      %p522 = scmp.eq.s32.totalorder %s38, 1
      %p523 = por %p521, %p522
      %p525 = scmp.ne.s32.totalorder %s510, %s524
      %p526 = scmp.eq.s32.totalorder %s38, 0
      %p527 = por %p525, %p526
      %s528 = ssub.s32 %s32, %s39
      %p529 = scmp.eq.s32.totalorder %s528, 0
      %s531 = sadd.s32 %s530, 1
      %s532 = scalar_select %p529, %s530, %s531
      %p535 = pneg %p529
      %p536 = scmp.eq.s32.totalorder %s32, 1
      %p537 = por %p535, %p536
      %p538 = scmp.ne.s32.totalorder %s530, %s533
      %p539 = scmp.eq.s32.totalorder %s32, 0
      %p540 = por %p538, %p539
      %p541 = scmp.ne.s32.totalorder %s530, %s533
      %p542 = scmp.eq.s32.totalorder %s37, 1
      %p543 = por %p541, %p542
      %p544 = scmp.ne.s32.totalorder %s533, %s534
      %p545 = scmp.eq.s32.totalorder %s37, 0
      %p546 = por %p544, %p545
      %p547 = scmp.ne.s32.totalorder %s533, %s534
      %p548 = scmp.eq.s32.totalorder %s38, 1
      %p549 = por %p547, %p548
      %p551 = scmp.ne.s32.totalorder %s534, %s550
      %p552 = scmp.eq.s32.totalorder %s38, 0
      %p553 = por %p551, %p552
      %p554 = scmp.le.s32.totalorder 1, %s32
      %p555 = scmp.lt.s32.totalorder %s32, 3
      %p556 = pnand %p554, %p555
      %p557 = pneg %p556
      // Predicated region
      $region9: #{tpu_custom_call.1} parent=5 // pred_check
        _
      $region10: #{tpu_custom_call.1} parent=5 // pred_check_branch
        %559 = sbr.rel (%p556) target = $region12
      $region11: #{tpu_custom_call.1} parent=5 // pred_region
        %s560 = ssub.s32 %s32, 1
        // Predicated region
        $region13: #{tpu_custom_call.1} parent=11 // pred_check
          %p561 = pneg %p79
        $region14: #{tpu_custom_call.1} parent=11 // pred_check_branch
          %563 = sbr.rel (%p561) target = $region16
        $region15: #{tpu_custom_call.1} parent=11 // pred_region
          _
        $region16: #{tpu_custom_call.1} parent=11 // pred_fallthru
          _
        // Predicated region
        $region17: #{tpu_custom_call.1} parent=11 // pred_check
          %p564 = pneg %p100
        $region18: #{tpu_custom_call.1} parent=11 // pred_check_branch
          %566 = sbr.rel (%p564) target = $region20
        $region19: #{tpu_custom_call.1} parent=11 // pred_region
          _
        $region20: #{tpu_custom_call.1} parent=11 // pred_fallthru
          _
        // Predicated region
        $region21: #{tpu_custom_call.1} parent=11 // pred_check
          %p567 = pneg %p121
        $region22: #{tpu_custom_call.1} parent=11 // pred_check_branch
          %569 = sbr.rel (%p567) target = $region24
        $region23: #{tpu_custom_call.1} parent=11 // pred_region
          _
        $region24: #{tpu_custom_call.1} parent=11 // pred_fallthru
          _
        // Predicated region
        $region25: #{tpu_custom_call.1} parent=11 // pred_check
          %p570 = pneg %p142
        $region26: #{tpu_custom_call.1} parent=11 // pred_check_branch
          %572 = sbr.rel (%p570) target = $region28
        $region27: #{tpu_custom_call.1} parent=11 // pred_region
          _
        $region28: #{tpu_custom_call.1} parent=11 // pred_fallthru
          _
        // Predicated region
        $region29: #{tpu_custom_call.1} parent=11 // pred_check
          %p573 = pneg %p163
        $region30: #{tpu_custom_call.1} parent=11 // pred_check_branch
          %575 = sbr.rel (%p573) target = $region32
        $region31: #{tpu_custom_call.1} parent=11 // pred_region
          _
        $region32: #{tpu_custom_call.1} parent=11 // pred_fallthru
          _
        // Predicated region
        $region33: #{tpu_custom_call.1} parent=11 // pred_check
          %p576 = pneg %p184
        $region34: #{tpu_custom_call.1} parent=11 // pred_check_branch
          %578 = sbr.rel (%p576) target = $region36
        $region35: #{tpu_custom_call.1} parent=11 // pred_region
          _
        $region36: #{tpu_custom_call.1} parent=11 // pred_fallthru
          _
        // Predicated region
        $region37: #{tpu_custom_call.1} parent=11 // pred_check
          %p579 = pneg %p205
        $region38: #{tpu_custom_call.1} parent=11 // pred_check_branch
          %581 = sbr.rel (%p579) target = $region40
        $region39: #{tpu_custom_call.1} parent=11 // pred_region
          _
        $region40: #{tpu_custom_call.1} parent=11 // pred_fallthru
          _
        // Predicated region
        $region41: #{tpu_custom_call.1} parent=11 // pred_check
          %p582 = pneg %p226
        $region42: #{tpu_custom_call.1} parent=11 // pred_check_branch
          %584 = sbr.rel (%p582) target = $region44
        $region43: #{tpu_custom_call.1} parent=11 // pred_region
          _
        $region44: #{tpu_custom_call.1} parent=11 // pred_fallthru
          _
        // Predicated region
        $region45: #{tpu_custom_call.1} parent=11 // pred_check
          %p585 = pneg %p247
        $region46: #{tpu_custom_call.1} parent=11 // pred_check_branch
          %587 = sbr.rel (%p585) target = $region48
        $region47: #{tpu_custom_call.1} parent=11 // pred_region
          _
        $region48: #{tpu_custom_call.1} parent=11 // pred_fallthru
          _
        // Predicated region
        $region49: #{tpu_custom_call.1} parent=11 // pred_check
          %p588 = pneg %p268
        $region50: #{tpu_custom_call.1} parent=11 // pred_check_branch
          %590 = sbr.rel (%p588) target = $region52
        $region51: #{tpu_custom_call.1} parent=11 // pred_region
          _
        $region52: #{tpu_custom_call.1} parent=11 // pred_fallthru
          _
        // Predicated region
        $region53: #{tpu_custom_call.1} parent=11 // pred_check
          %p591 = pneg %p289
        $region54: #{tpu_custom_call.1} parent=11 // pred_check_branch
          %593 = sbr.rel (%p591) target = $region56
        $region55: #{tpu_custom_call.1} parent=11 // pred_region
          _
        $region56: #{tpu_custom_call.1} parent=11 // pred_fallthru
          _
        // Predicated region
        $region57: #{tpu_custom_call.1} parent=11 // pred_check
          %p594 = pneg %p310
        $region58: #{tpu_custom_call.1} parent=11 // pred_check_branch
          %596 = sbr.rel (%p594) target = $region60
        $region59: #{tpu_custom_call.1} parent=11 // pred_region
          _
        $region60: #{tpu_custom_call.1} parent=11 // pred_fallthru
          _
        // Predicated region
        $region61: #{tpu_custom_call.1} parent=11 // pred_check
          %p597 = pneg %p331
        $region62: #{tpu_custom_call.1} parent=11 // pred_check_branch
          %599 = sbr.rel (%p597) target = $region64
        $region63: #{tpu_custom_call.1} parent=11 // pred_region
          _
        $region64: #{tpu_custom_call.1} parent=11 // pred_fallthru
          _
        // Predicated region
        $region65: #{tpu_custom_call.1} parent=11 // pred_check
          %p600 = pneg %p352
        $region66: #{tpu_custom_call.1} parent=11 // pred_check_branch
          %602 = sbr.rel (%p600) target = $region68
        $region67: #{tpu_custom_call.1} parent=11 // pred_region
          _
        $region68: #{tpu_custom_call.1} parent=11 // pred_fallthru
          _
        // Predicated region
        $region69: #{tpu_custom_call.1} parent=11 // pred_check
          %p603 = pneg %p373
        $region70: #{tpu_custom_call.1} parent=11 // pred_check_branch
          %605 = sbr.rel (%p603) target = $region72
        $region71: #{tpu_custom_call.1} parent=11 // pred_region
          _
        $region72: #{tpu_custom_call.1} parent=11 // pred_fallthru
          _
        // Predicated region
        $region73: #{tpu_custom_call.1} parent=11 // pred_check
          %p606 = pneg %p394
        $region74: #{tpu_custom_call.1} parent=11 // pred_check_branch
          %608 = sbr.rel (%p606) target = $region76
        $region75: #{tpu_custom_call.1} parent=11 // pred_region
          _
        $region76: #{tpu_custom_call.1} parent=11 // pred_fallthru
          _
        // Predicated region
        $region77: #{tpu_custom_call.1} parent=11 // pred_check
          %p609 = pneg %p415
        $region78: #{tpu_custom_call.1} parent=11 // pred_check_branch
          %611 = sbr.rel (%p609) target = $region80
        $region79: #{tpu_custom_call.1} parent=11 // pred_region
          _
        $region80: #{tpu_custom_call.1} parent=11 // pred_fallthru
          _
        // Predicated region
        $region81: #{tpu_custom_call.1} parent=11 // pred_check
          %p612 = pneg %p436
        $region82: #{tpu_custom_call.1} parent=11 // pred_check_branch
          %614 = sbr.rel (%p612) target = $region84
        $region83: #{tpu_custom_call.1} parent=11 // pred_region
          _
        $region84: #{tpu_custom_call.1} parent=11 // pred_fallthru
          _
        // Predicated region
        $region85: #{tpu_custom_call.1} parent=11 // pred_check
          %p615 = pneg %p457
        $region86: #{tpu_custom_call.1} parent=11 // pred_check_branch
          %617 = sbr.rel (%p615) target = $region88
        $region87: #{tpu_custom_call.1} parent=11 // pred_region
          _
        $region88: #{tpu_custom_call.1} parent=11 // pred_fallthru
          _
        // Predicated region
        $region89: #{tpu_custom_call.1} parent=11 // pred_check
          %p618 = pneg %p478
        $region90: #{tpu_custom_call.1} parent=11 // pred_check_branch
          %620 = sbr.rel (%p618) target = $region92
        $region91: #{tpu_custom_call.1} parent=11 // pred_region
          _
        $region92: #{tpu_custom_call.1} parent=11 // pred_fallthru
          _
        // Predicated region
        $region93: #{tpu_custom_call.1} parent=11 // pred_check
          %p621 = pneg %p499
        $region94: #{tpu_custom_call.1} parent=11 // pred_check_branch
          %623 = sbr.rel (%p621) target = $region96
        $region95: #{tpu_custom_call.1} parent=11 // pred_region
          _
        $region96: #{tpu_custom_call.1} parent=11 // pred_fallthru
          _
        // Predicated region
        $region97: #{tpu_custom_call.1} parent=11 // pred_check
          %p624 = pneg %p520
        $region98: #{tpu_custom_call.1} parent=11 // pred_check_branch
          %626 = sbr.rel (%p624) target = $region100
        $region99: #{tpu_custom_call.1} parent=11 // pred_region
          _
        $region100: #{tpu_custom_call.1} parent=11 // pred_fallthru
          _
      $region12: #{tpu_custom_call.1} parent=5 // pred_fallthru
        _
      %p627 = scmp.lt.s32.totalorder %s32, 2
      // Predicated region
      $region101: #{tpu_custom_call.1} parent=5 // pred_check
        %p628 = pneg %p627
      $region102: #{tpu_custom_call.1} parent=5 // pred_check_branch
        %630 = sbr.rel (%p628) target = $region104
      $region103: #{tpu_custom_call.1} parent=5 // pred_region
        // Predicated region
        $region105: #{tpu_custom_call.1} parent=103 // pred_check
          %p631 = pneg %p52
        $region106: #{tpu_custom_call.1} parent=103 // pred_check_branch
          %633 = sbr.rel (%p631) target = $region108
        $region107: #{tpu_custom_call.1} parent=103 // pred_region
          %p634 = scmp.lt.s32.totalorder %s32, 1
          %s635 = scalar_select %p634, %s32, 1
          %s636 = smul.addr %s635, 3
          %s637 = smul.addr %s636, 4
          %s638 = scalar_lea.vmem %s0, %s637
        $region108: #{tpu_custom_call.1} parent=103 // pred_fallthru
          _
      $region104: #{tpu_custom_call.1} parent=5 // pred_fallthru
        _
      %p639 = scmp.le.s32.totalorder 1, %s32
      %p640 = scmp.lt.s32.totalorder %s32, 3
      %p641 = pnand %p639, %p640
      %p642 = pneg %p641
      // Predicated region
      $region109: #{tpu_custom_call.1} parent=5 // pred_check
        _
      $region110: #{tpu_custom_call.1} parent=5 // pred_check_branch
        %644 = sbr.rel (%p641) target = $region112
      $region111: #{tpu_custom_call.1} parent=5 // pred_region
        %s645 = ssub.s32 %s32, 1
        %p646 = scmp.lt.s32.totalorder %s37, 1
        %s647 = scalar_select %p646, %s37, 1
        %s648 = smul.addr %s647, 3
        %s649 = smul.addr %s648, 4
        %s650 = scalar_lea.vmem %s0, %s649
        %p651 = pneg %p58
        %p652 = pneg %p55
        %p653 = pneg %p79
        %p654 = pneg %p76
        %p655 = pneg %p100
        %p656 = pneg %p97
        %p657 = pneg %p121
        %p658 = pneg %p118
        %p659 = pneg %p142
        %p660 = pneg %p139
        %p661 = pneg %p163
        %p662 = pneg %p160
        %p663 = pneg %p184
        %p664 = pneg %p181
        %p665 = pneg %p205
        %p666 = pneg %p202
        %p667 = pneg %p226
        %p668 = pneg %p223
        %p669 = pneg %p247
        %p670 = pneg %p244
        %p671 = pneg %p268
        %p672 = pneg %p265
        %p673 = pneg %p289
        %p674 = pneg %p286
        %p675 = pneg %p310
        %p676 = pneg %p307
        %p677 = pneg %p331
        %p678 = pneg %p328
        %p679 = pneg %p352
        %p680 = pneg %p349
        %p681 = pneg %p373
        %p682 = pneg %p370
        %p683 = pneg %p394
        %p684 = pneg %p391
        %p685 = pneg %p415
        %p686 = pneg %p412
        %p687 = pneg %p436
        %p688 = pneg %p433
        %p689 = pneg %p457
        %p690 = pneg %p454
        %p691 = pneg %p478
        %p692 = pneg %p475
        %p693 = pneg %p499
        %p694 = pneg %p496
        %p695 = pneg %p520
        %p696 = pneg %p517
        %p697 = pneg %p546
        %p698 = pneg %p543
        %s699 = sand.u32 %s533, 1
        %s700 = scalar_lea.sflag [#allocation3], %s699
        %s701 = sand.u32 %s533, 1
        %s702 = scalar_lea.vmem [#allocation2], %s701
        %p703 = scmp.lt.s32.totalorder %s37, 1
        %s704 = scalar_select %p703, %s37, 1
        %s705 = smul.addr %s704, 3
        %s706 = smul.addr %s705, 4
        %s707 = scalar_lea.vmem %s0, %s706
        %v709 = vld [vmem:[%s707] sm:$0xff]
        %v710 = vld [vmem:[%s707 + $0x8] sm:$0xf]
        %v711 = vld [vmem:[%s1] sm:$0xf]
        %v712 = vld [vmem:[%s1 + $0x4] sm:$0xf]
        %v713 = vld [vmem:[%s1 + $0x8] sm:$0xf]
        %v714 = vld [vmem:[%s1 + $0xc] sm:$0xf]
        %v715 = vld [vmem:[%s1 + $0x10] sm:$0xf]
        %v716 = vld [vmem:[%s1 + $0x14] sm:$0xf]
        %v717 = vld [vmem:[%s1 + $0x18] sm:$0xf]
        %v718 = vld [vmem:[%s1 + $0x1c] sm:$0xf]
        %v719 = vld [vmem:[%s1 + $0x20] sm:$0xf]
        %v720 = vld [vmem:[%s1 + $0x24] sm:$0xf]
        %v721 = vld [vmem:[%s1 + $0x28] sm:$0xf]
        %v722 = vld [vmem:[%s1 + $0x2c] sm:$0xf]
        %v723 = vld [vmem:[%s1 + $0x30] sm:$0xf]
        %v724 = vld [vmem:[%s1 + $0x34] sm:$0xf]
        %v725 = vld [vmem:[%s1 + $0x38] sm:$0xf]
        %v726 = vld [vmem:[%s1 + $0x3c] sm:$0xf]
        %v727 = vld [vmem:[%s1 + $0x40] sm:$0xf]
        %v728 = vld [vmem:[%s1 + $0x44] sm:$0xf]
        %v729 = vld [vmem:[%s1 + $0x48] sm:$0xf]
        %v730 = vld [vmem:[%s1 + $0x4c] sm:$0xf]
        %v731 = vld [vmem:[%s1 + $0x50] sm:$0xf]
        %v732 = vld [vmem:[%s1 + $0x54] sm:$0xf]
        %v733 = vld [vmem:[%s1 + $0x58] sm:$0xf]
        %v734 = vld [vmem:[%s1 + $0x5c] sm:$0xf]
        %v735 = vld [vmem:[%s1 + $0x60] sm:$0xf]
        %v736 = vld [vmem:[%s1 + $0x64] sm:$0xf]
        %v737 = vld [vmem:[%s1 + $0x68] sm:$0xf]
        %v738 = vld [vmem:[%s1 + $0x6c] sm:$0xf]
        %v739 = vld [vmem:[%s1 + $0x70] sm:$0xf]
        %v740 = vld [vmem:[%s1 + $0x74] sm:$0xf]
        %v741 = vld [vmem:[%s1 + $0x78] sm:$0xf]
        %v742 = vld [vmem:[%s1 + $0x7c] sm:$0xf]
        %v743 = vld [vmem:[%s1 + $0x80] sm:$0xf]
        %v744 = vld [vmem:[%s1 + $0x84] sm:$0xf]
        %v745 = vld [vmem:[%s1 + $0x88] sm:$0xf]
        %v746 = vld [vmem:[%s1 + $0x8c] sm:$0xf]
        %v747 = vld [vmem:[%s1 + $0x90] sm:$0xf]
        %v748 = vld [vmem:[%s1 + $0x94] sm:$0xf]
        %v749 = vld [vmem:[%s1 + $0x98] sm:$0xf]
        %v750 = vld [vmem:[%s1 + $0x9c] sm:$0xf]
        %v751 = vld [vmem:[%s1 + $0xa0] sm:$0xf]
        %v752 = vld [vmem:[%s1 + $0xa4] sm:$0xf]
        %v753 = vld [vmem:[%s1 + $0xa8] sm:$0xf]
        %v754 = vld [vmem:[%s1 + $0xac] sm:$0xf]
        %v755 = vld [vmem:[%s1 + $0xb0] sm:$0xf]
        %v756 = vld [vmem:[%s1 + $0xb4] sm:$0xf]
        %v757 = vld [vmem:[%s1 + $0xb8] sm:$0xf]
        %v758 = vld [vmem:[%s1 + $0xbc] sm:$0xf]
        %v759 = vld [vmem:[%s2] sm:$0x1]
        %v761 = vlaneseq
        %v762 = vshrl.u32 %v761, 7
        %v763 = vsub.s32 0, %v762
        %v764 = vrot.slane %v759, %v763
        %v768 = vunpack.c.l.b16 %v709
        %v769 = vunpack.c.h.b16 %v709
        %v770 = vunpack.c.l.b16 %v710
        %v771 = vpack.c.b16 %v768, %v768
        %v772 = vpack.c.b16 %v769, %v769
        %v773 = vpack.c.b16 %v770, %v770
        %v825 = vunpack.c.l.b16 %v711
        %v826 = vunpack.c.l.b16 %v712
        %v827 = vunpack.c.l.b16 %v713
        %v828 = vunpack.c.l.b16 %v714
        %v829 = vunpack.c.l.b16 %v715
        %v830 = vunpack.c.l.b16 %v716
        %v831 = vunpack.c.l.b16 %v717
        %v832 = vunpack.c.l.b16 %v718
        %v833 = vunpack.c.l.b16 %v719
        %v834 = vunpack.c.l.b16 %v720
        %v835 = vunpack.c.l.b16 %v721
        %v836 = vunpack.c.l.b16 %v722
        %v837 = vunpack.c.l.b16 %v723
        %v838 = vunpack.c.l.b16 %v724
        %v839 = vunpack.c.l.b16 %v725
        %v840 = vunpack.c.l.b16 %v726
        %v841 = vunpack.c.l.b16 %v727
        %v842 = vunpack.c.l.b16 %v728
        %v843 = vunpack.c.l.b16 %v729
        %v844 = vunpack.c.l.b16 %v730
        %v845 = vunpack.c.l.b16 %v731
        %v846 = vunpack.c.l.b16 %v732
        %v847 = vunpack.c.l.b16 %v733
        %v848 = vunpack.c.l.b16 %v734
        %v849 = vunpack.c.l.b16 %v735
        %v850 = vunpack.c.l.b16 %v736
        %v851 = vunpack.c.l.b16 %v737
        %v852 = vunpack.c.l.b16 %v738
        %v853 = vunpack.c.l.b16 %v739
        %v854 = vunpack.c.l.b16 %v740
        %v855 = vunpack.c.l.b16 %v741
        %v856 = vunpack.c.l.b16 %v742
        %v857 = vunpack.c.l.b16 %v743
        %v858 = vunpack.c.l.b16 %v744
        %v859 = vunpack.c.l.b16 %v745
        %v860 = vunpack.c.l.b16 %v746
        %v861 = vunpack.c.l.b16 %v747
        %v862 = vunpack.c.l.b16 %v748
        %v863 = vunpack.c.l.b16 %v749
        %v864 = vunpack.c.l.b16 %v750
        %v865 = vunpack.c.l.b16 %v751
        %v866 = vunpack.c.l.b16 %v752
        %v867 = vunpack.c.l.b16 %v753
        %v868 = vunpack.c.l.b16 %v754
        %v869 = vunpack.c.l.b16 %v755
        %v870 = vunpack.c.l.b16 %v756
        %v871 = vunpack.c.l.b16 %v757
        %v872 = vunpack.c.l.b16 %v758
        %v873 = vpack.c.b16 %v826, %v825
        %v874 = vpack.c.b16 %v828, %v827
        %v875 = vpack.c.b16 %v830, %v829
        %v876 = vpack.c.b16 %v832, %v831
        %v877 = vpack.c.b16 %v834, %v833
        %v878 = vpack.c.b16 %v836, %v835
        %v879 = vpack.c.b16 %v838, %v837
        %v880 = vpack.c.b16 %v840, %v839
        %v881 = vpack.c.b16 %v842, %v841
        %v882 = vpack.c.b16 %v844, %v843
        %v883 = vpack.c.b16 %v846, %v845
        %v884 = vpack.c.b16 %v848, %v847
        %v885 = vpack.c.b16 %v850, %v849
        %v886 = vpack.c.b16 %v852, %v851
        %v887 = vpack.c.b16 %v854, %v853
        %v888 = vpack.c.b16 %v856, %v855
        %v889 = vpack.c.b16 %v858, %v857
        %v890 = vpack.c.b16 %v860, %v859
        %v891 = vpack.c.b16 %v862, %v861
        %v892 = vpack.c.b16 %v864, %v863
        %v893 = vpack.c.b16 %v866, %v865
        %v894 = vpack.c.b16 %v868, %v867
        %v895 = vpack.c.b16 %v870, %v869
        %v896 = vpack.c.b16 %v872, %v871
        %921 = vmatprep.subr.bf16.mxu0 0
        %922 = vmatpush1.bf16.msra.mxu0 %v880
        %923 = vmatprep.subr.bf16.mxu0 0
        %924 = vmatpush1.bf16.msra.mxu0 %v879
        %925 = vmatprep.subr.bf16.mxu0 0
        %926 = vmatpush1.bf16.msra.mxu0 %v878
        %927 = vmatprep.subr.bf16.mxu0 0
        %928 = vmatpush1.bf16.msra.mxu0 %v877
        %929 = vmatprep.subr.bf16.mxu0 0
        %930 = vmatpush1.bf16.msra.mxu0 %v876
        %931 = vmatprep.subr.bf16.mxu0 0
        %932 = vmatpush1.bf16.msra.mxu0 %v875
        %933 = vmatprep.subr.bf16.mxu0 0
        %934 = vmatpush1.bf16.msra.mxu0 %v874
        %935 = vmatprep.subr.bf16.mxu0 0
        %936 = vmatpush1.bf16.msra.mxu0 %v873
        %937 = vmatprep.subr.bf16.mxu0 0
        %938 = vmatpush2.bf16.msra.mxu0 %v888
        %939 = vmatprep.subr.bf16.mxu0 0
        %940 = vmatpush2.bf16.msra.mxu0 %v887
        %941 = vmatprep.subr.bf16.mxu0 0
        %942 = vmatpush2.bf16.msra.mxu0 %v886
        %943 = vmatprep.subr.bf16.mxu0 0
        %944 = vmatpush2.bf16.msra.mxu0 %v885
        %945 = vmatprep.subr.bf16.mxu0 0
        %946 = vmatpush2.bf16.msra.mxu0 %v884
        %947 = vmatprep.subr.bf16.mxu0 0
        %948 = vmatpush2.bf16.msra.mxu0 %v883
        %949 = vmatprep.subr.bf16.mxu0 0
        %950 = vmatpush2.bf16.msra.mxu0 %v882
        %951 = vmatprep.subr.bf16.mxu0 0
        %952 = vmatpush2.bf16.msra.mxu0 %v881
        %953 = vmatprep.mubr.bf16.mxu0 %v772
        %954 = vmatmul.mubr.bf16.gmra.mxu0 %v771
        %v955 = vpop.f32.mrf.mxu0
        %v956 = vadd.f32 %v764, %v955
        %v957 = vpop.f32.mrf.mxu0
        %v958 = vpop.f32.mrf.mxu0
        %v959 = vpop.f32.mrf.mxu0
        %960 = vdwg.mxu0
        %961 = vmatprep.subr.bf16.mxu0 0
        %962 = vmatpush1.bf16.msra.mxu0 %v896
        %963 = vmatprep.subr.bf16.mxu0 0
        %964 = vmatpush1.bf16.msra.mxu0 %v895
        %965 = vmatprep.subr.bf16.mxu0 0
        %966 = vmatpush1.bf16.msra.mxu0 %v894
        %967 = vmatprep.subr.bf16.mxu0 0
        %968 = vmatpush1.bf16.msra.mxu0 %v893
        %969 = vmatprep.subr.bf16.mxu0 0
        %970 = vmatpush1.bf16.msra.mxu0 %v892
        %971 = vmatprep.subr.bf16.mxu0 0
        %972 = vmatpush1.bf16.msra.mxu0 %v891
        %973 = vmatprep.subr.bf16.mxu0 0
        %974 = vmatpush1.bf16.msra.mxu0 %v890
        %975 = vmatprep.subr.bf16.mxu0 0
        %976 = vmatpush1.bf16.msra.mxu0 %v889
        %977 = vmatprep.subr.bf16.mxu0 0
        %978 = vmatpush2.bf16.msra.mxu0 0
        %979 = vmatprep.subr.bf16.mxu0 0
        %980 = vmatpush2.bf16.msra.mxu0 0
        %981 = vmatprep.subr.bf16.mxu0 0
        %982 = vmatpush2.bf16.msra.mxu0 0
        %983 = vmatprep.subr.bf16.mxu0 0
        %984 = vmatpush2.bf16.msra.mxu0 0
        %985 = vmatprep.subr.bf16.mxu0 0
        %986 = vmatpush2.bf16.msra.mxu0 0
        %987 = vmatprep.subr.bf16.mxu0 0
        %988 = vmatpush2.bf16.msra.mxu0 0
        %989 = vmatprep.subr.bf16.mxu0 0
        %990 = vmatpush2.bf16.msra.mxu0 0
        %991 = vmatprep.subr.bf16.mxu0 0
        %992 = vmatpush2.bf16.msra.mxu0 0
        %993 = vmatprep.mubr.bf16.mxu0 0
        %994 = vmatmul.mubr.bf16.gmra.mxu0 %v773
        %v995 = vpop.f32.mrf.mxu0
        %v996 = vadd.f32 %v956, %v995
        %v997 = vpop.f32.mrf.mxu0
        %v998 = vpop.f32.mrf.mxu0
        %v999 = vpop.f32.mrf.mxu0
        %1000 = vdwg.mxu0
        %v1001 = vld [vmem:[%s3] sm:$0xff]
        %v1002 = vadd.f32 %v996, %v1001
        %v1003 = vld [vmem:[%s4] sm:$0x1]
        %v1004 = vld [vmem:[%s5] sm:$0x1]
        %vm1005 = vcmask 261120
        %v1006 = vsel %vm1005, %v1002, 0.0
        %1007 = vadd.xlane.f32.xlu0 %v1006
        %v1008 = vpop.xlane.xlu0 %1007
        %v1009 = vrcp.pop 32.0
        %v1010 = vmul.f32 %v1008, %v1009
        %v1011 = vmul.f32 %v1002, %v1002
        %v1012 = vsel %vm1005, %v1011, 0.0
        %1013 = vadd.xlane.f32.xlu0 %v1012
        %v1014 = vpop.xlane.xlu0 %1013
        %v1015 = vmul.f32 %v1014, %v1009
        %v1016 = vmul.f32 %v1010, %v1010
        %v1017 = vsub.f32 %v1015, %v1016
        %v1018 = vsub.f32 %v1002, %v1010
        %v1019 = vadd.f32 %v1017, 1e-06
        %v1020 = vrsqrt.pop %v1019
        %v1021 = vmul.f32 %v1018, %v1020
        %v1023 = vlaneseq
        %v1024 = vshrl.u32 %v1023, 7
        %v1025 = vsub.s32 0, %v1024
        %v1026 = vrot.slane %v1003, %v1025
        %v1028 = vmul.f32 %v1021, %v1026
        %v1030 = vlaneseq
        %v1031 = vshrl.u32 %v1030, 7
        %v1032 = vsub.s32 0, %v1031
        %v1033 = vrot.slane %v1004, %v1032
        %v1035 = vadd.f32 %v1028, %v1033
        %v1036 = vpack.c.bf16 %v1035, %v1035
        %v1037 = vld [vmem:[%s6] sm:$0xf]
        %v1038 = vld [vmem:[%s6 + $0x4] sm:$0xf]
        %v1039 = vld [vmem:[%s6 + $0x8] sm:$0xf]
        %v1040 = vld [vmem:[%s6 + $0xc] sm:$0xf]
        %v1041 = vld [vmem:[%s6 + $0x10] sm:$0xf]
        %v1042 = vld [vmem:[%s6 + $0x14] sm:$0xf]
        %v1043 = vld [vmem:[%s6 + $0x18] sm:$0xf]
        %v1044 = vld [vmem:[%s6 + $0x1c] sm:$0xf]
        %v1045 = vld [vmem:[%s7] sm:$0x1]
        %v1046 = vld [vmem:[%s7 + $0x1] sm:$0x1]
        %v1049 = vlaneseq
        %v1050 = vshrl.u32 %v1049, 7
        %v1051 = vsub.s32 0, %v1050
        %v1052 = vrot.slane %v1045, %v1051
        %v1053 = vlaneseq
        %v1054 = vshrl.u32 %v1053, 7
        %v1055 = vsub.s32 0, %v1054
        %v1056 = vrot.slane %v1046, %v1055
        %v1063 = vunpack.c.l.b16 %v1037
        %v1064 = vunpack.c.l.b16 %v1038
        %v1065 = vunpack.c.l.b16 %v1039
        %v1066 = vunpack.c.l.b16 %v1040
        %v1067 = vpack.c.b16 %v1064, %v1063
        %v1068 = vpack.c.b16 %v1066, %v1065
        %v1072 = vsel %vm1005, %v1036, 0
        %1074 = vmatprep.subr.bf16.mxu0 0
        %1075 = vmatpush1.bf16.msra.mxu0 0
        %1076 = vmatprep.subr.bf16.mxu0 0
        %1077 = vmatpush1.bf16.msra.mxu0 0
        %1078 = vmatprep.subr.bf16.mxu0 0
        %1079 = vmatpush1.bf16.msra.mxu0 0
        %1080 = vmatprep.subr.bf16.mxu0 0
        %1081 = vmatpush1.bf16.msra.mxu0 0
        %1082 = vmatprep.subr.bf16.mxu0 0
        %1083 = vmatpush1.bf16.msra.mxu0 0
        %1084 = vmatprep.subr.bf16.mxu0 0
        %1085 = vmatpush1.bf16.msra.mxu0 0
        %1086 = vmatprep.subr.bf16.mxu0 0
        %1087 = vmatpush1.bf16.msra.mxu0 %v1068
        %1088 = vmatprep.subr.bf16.mxu0 0
        %1089 = vmatpush1.bf16.msra.mxu0 %v1067
        %1090 = vmatprep.subr.bf16.mxu0 0
        %1091 = vmatpush2.bf16.msra.mxu0 0
        %1092 = vmatprep.subr.bf16.mxu0 0
        %1093 = vmatpush2.bf16.msra.mxu0 0
        %1094 = vmatprep.subr.bf16.mxu0 0
        %1095 = vmatpush2.bf16.msra.mxu0 0
        %1096 = vmatprep.subr.bf16.mxu0 0
        %1097 = vmatpush2.bf16.msra.mxu0 0
        %1098 = vmatprep.subr.bf16.mxu0 0
        %1099 = vmatpush2.bf16.msra.mxu0 0
        %1100 = vmatprep.subr.bf16.mxu0 0
        %1101 = vmatpush2.bf16.msra.mxu0 0
        %1102 = vmatprep.subr.bf16.mxu0 0
        %1103 = vmatpush2.bf16.msra.mxu0 0
        %1104 = vmatprep.subr.bf16.mxu0 0
        %1105 = vmatpush2.bf16.msra.mxu0 0
        %1106 = vmatprep.mubr.bf16.mxu0 0
        %1107 = vmatmul.mubr.bf16.gmra.mxu0 %v1072
        %v1108 = vpop.f32.mrf.mxu0
        %v1109 = vadd.f32 %v1052, %v1108
        %v1110 = vpop.f32.mrf.mxu0
        %v1111 = vpop.f32.mrf.mxu0
        %v1112 = vpop.f32.mrf.mxu0
        %1113 = vdwg.mxu0
        %v1118 = vunpack.c.l.b16 %v1041
        %v1119 = vunpack.c.l.b16 %v1042
        %v1120 = vunpack.c.l.b16 %v1043
        %v1121 = vunpack.c.l.b16 %v1044
        %v1122 = vpack.c.b16 %v1119, %v1118
        %v1123 = vpack.c.b16 %v1121, %v1120
        %1126 = vmatprep.subr.bf16.mxu0 0
        %1127 = vmatpush1.bf16.msra.mxu0 0
        %1128 = vmatprep.subr.bf16.mxu0 0
        %1129 = vmatpush1.bf16.msra.mxu0 0
        %1130 = vmatprep.subr.bf16.mxu0 0
        %1131 = vmatpush1.bf16.msra.mxu0 0
        %1132 = vmatprep.subr.bf16.mxu0 0
        %1133 = vmatpush1.bf16.msra.mxu0 0
        %1134 = vmatprep.subr.bf16.mxu0 0
        %1135 = vmatpush1.bf16.msra.mxu0 0
        %1136 = vmatprep.subr.bf16.mxu0 0
        %1137 = vmatpush1.bf16.msra.mxu0 0
        %1138 = vmatprep.subr.bf16.mxu0 0
        %1139 = vmatpush1.bf16.msra.mxu0 %v1123
        %1140 = vmatprep.subr.bf16.mxu0 0
        %1141 = vmatpush1.bf16.msra.mxu0 %v1122
        %1142 = vmatprep.subr.bf16.mxu0 0
        %1143 = vmatpush2.bf16.msra.mxu0 0
        %1144 = vmatprep.subr.bf16.mxu0 0
        %1145 = vmatpush2.bf16.msra.mxu0 0
        %1146 = vmatprep.subr.bf16.mxu0 0
        %1147 = vmatpush2.bf16.msra.mxu0 0
        %1148 = vmatprep.subr.bf16.mxu0 0
        %1149 = vmatpush2.bf16.msra.mxu0 0
        %1150 = vmatprep.subr.bf16.mxu0 0
        %1151 = vmatpush2.bf16.msra.mxu0 0
        %1152 = vmatprep.subr.bf16.mxu0 0
        %1153 = vmatpush2.bf16.msra.mxu0 0
        %1154 = vmatprep.subr.bf16.mxu0 0
        %1155 = vmatpush2.bf16.msra.mxu0 0
        %1156 = vmatprep.subr.bf16.mxu0 0
        %1157 = vmatpush2.bf16.msra.mxu0 0
        %1158 = vmatprep.mubr.bf16.mxu0 0
        %1159 = vmatmul.mubr.bf16.gmra.mxu0 %v1072
        %v1160 = vpop.f32.mrf.mxu0
        %v1161 = vadd.f32 %v1056, %v1160
        %v1162 = vpop.f32.mrf.mxu0
        %v1163 = vpop.f32.mrf.mxu0
        %v1164 = vpop.f32.mrf.mxu0
        %1165 = vdwg.mxu0
        %v1166 = vld [vmem:[%s8] sm:$0xf]
        %v1167 = vld [vmem:[%s8 + $0x4] sm:$0xf]
        %v1168 = vld [vmem:[%s8 + $0x8] sm:$0xf]
        %v1169 = vld [vmem:[%s8 + $0xc] sm:$0xf]
        %v1170 = vld [vmem:[%s8 + $0x10] sm:$0xf]
        %v1171 = vld [vmem:[%s8 + $0x14] sm:$0xf]
        %v1172 = vld [vmem:[%s8 + $0x18] sm:$0xf]
        %v1173 = vld [vmem:[%s8 + $0x1c] sm:$0xf]
        %v1174 = vld [vmem:[%s9] sm:$0x1]
        %v1175 = vld [vmem:[%s9 + $0x1] sm:$0x1]
        %v1178 = vlaneseq
        %v1179 = vshrl.u32 %v1178, 7
        %v1180 = vsub.s32 0, %v1179
        %v1181 = vrot.slane %v1174, %v1180
        %v1182 = vlaneseq
        %v1183 = vshrl.u32 %v1182, 7
        %v1184 = vsub.s32 0, %v1183
        %v1185 = vrot.slane %v1175, %v1184
        %v1192 = vunpack.c.l.b16 %v1166
        %v1193 = vunpack.c.l.b16 %v1167
        %v1194 = vunpack.c.l.b16 %v1168
        %v1195 = vunpack.c.l.b16 %v1169
        %v1196 = vpack.c.b16 %v1193, %v1192
        %v1197 = vpack.c.b16 %v1195, %v1194
        %1200 = vmatprep.subr.bf16.mxu0 0
        %1201 = vmatpush1.bf16.msra.mxu0 0
        %1202 = vmatprep.subr.bf16.mxu0 0
        %1203 = vmatpush1.bf16.msra.mxu0 0
        %1204 = vmatprep.subr.bf16.mxu0 0
        %1205 = vmatpush1.bf16.msra.mxu0 0
        %1206 = vmatprep.subr.bf16.mxu0 0
        %1207 = vmatpush1.bf16.msra.mxu0 0
        %1208 = vmatprep.subr.bf16.mxu0 0
        %1209 = vmatpush1.bf16.msra.mxu0 0
        %1210 = vmatprep.subr.bf16.mxu0 0
        %1211 = vmatpush1.bf16.msra.mxu0 0
        %1212 = vmatprep.subr.bf16.mxu0 0
        %1213 = vmatpush1.bf16.msra.mxu0 %v1197
        %1214 = vmatprep.subr.bf16.mxu0 0
        %1215 = vmatpush1.bf16.msra.mxu0 %v1196
        %1216 = vmatprep.subr.bf16.mxu0 0
        %1217 = vmatpush2.bf16.msra.mxu0 0
        %1218 = vmatprep.subr.bf16.mxu0 0
        %1219 = vmatpush2.bf16.msra.mxu0 0
        %1220 = vmatprep.subr.bf16.mxu0 0
        %1221 = vmatpush2.bf16.msra.mxu0 0
        %1222 = vmatprep.subr.bf16.mxu0 0
        %1223 = vmatpush2.bf16.msra.mxu0 0
        %1224 = vmatprep.subr.bf16.mxu0 0
        %1225 = vmatpush2.bf16.msra.mxu0 0
        %1226 = vmatprep.subr.bf16.mxu0 0
        %1227 = vmatpush2.bf16.msra.mxu0 0
        %1228 = vmatprep.subr.bf16.mxu0 0
        %1229 = vmatpush2.bf16.msra.mxu0 0
        %1230 = vmatprep.subr.bf16.mxu0 0
        %1231 = vmatpush2.bf16.msra.mxu0 0
        %1232 = vmatprep.mubr.bf16.mxu0 0
        %1233 = vmatmul.mubr.bf16.gmra.mxu0 %v1072
        %v1234 = vpop.f32.mrf.mxu0
        %v1235 = vadd.f32 %v1181, %v1234
        %v1236 = vpop.f32.mrf.mxu0
        %v1237 = vpop.f32.mrf.mxu0
        %v1238 = vpop.f32.mrf.mxu0
        %1239 = vdwg.mxu0
        %v1244 = vunpack.c.l.b16 %v1170
        %v1245 = vunpack.c.l.b16 %v1171
        %v1246 = vunpack.c.l.b16 %v1172
        %v1247 = vunpack.c.l.b16 %v1173
        %v1248 = vpack.c.b16 %v1245, %v1244
        %v1249 = vpack.c.b16 %v1247, %v1246
        %1252 = vmatprep.subr.bf16.mxu0 0
        %1253 = vmatpush1.bf16.msra.mxu0 0
        %1254 = vmatprep.subr.bf16.mxu0 0
        %1255 = vmatpush1.bf16.msra.mxu0 0
        %1256 = vmatprep.subr.bf16.mxu0 0
        %1257 = vmatpush1.bf16.msra.mxu0 0
        %1258 = vmatprep.subr.bf16.mxu0 0
        %1259 = vmatpush1.bf16.msra.mxu0 0
        %1260 = vmatprep.subr.bf16.mxu0 0
        %1261 = vmatpush1.bf16.msra.mxu0 0
        %1262 = vmatprep.subr.bf16.mxu0 0
        %1263 = vmatpush1.bf16.msra.mxu0 0
        %1264 = vmatprep.subr.bf16.mxu0 0
        %1265 = vmatpush1.bf16.msra.mxu0 %v1249
        %1266 = vmatprep.subr.bf16.mxu0 0
        %1267 = vmatpush1.bf16.msra.mxu0 %v1248
        %1268 = vmatprep.subr.bf16.mxu0 0
        %1269 = vmatpush2.bf16.msra.mxu0 0
        %1270 = vmatprep.subr.bf16.mxu0 0
        %1271 = vmatpush2.bf16.msra.mxu0 0
        %1272 = vmatprep.subr.bf16.mxu0 0
        %1273 = vmatpush2.bf16.msra.mxu0 0
        %1274 = vmatprep.subr.bf16.mxu0 0
        %1275 = vmatpush2.bf16.msra.mxu0 0
        %1276 = vmatprep.subr.bf16.mxu0 0
        %1277 = vmatpush2.bf16.msra.mxu0 0
        %1278 = vmatprep.subr.bf16.mxu0 0
        %1279 = vmatpush2.bf16.msra.mxu0 0
        %1280 = vmatprep.subr.bf16.mxu0 0
        %1281 = vmatpush2.bf16.msra.mxu0 0
        %1282 = vmatprep.subr.bf16.mxu0 0
        %1283 = vmatpush2.bf16.msra.mxu0 0
        %1284 = vmatprep.mubr.bf16.mxu0 0
        %1285 = vmatmul.mubr.bf16.gmra.mxu0 %v1072
        %v1286 = vpop.f32.mrf.mxu0
        %v1287 = vadd.f32 %v1185, %v1286
        %v1288 = vpop.f32.mrf.mxu0
        %v1289 = vpop.f32.mrf.mxu0
        %v1290 = vpop.f32.mrf.mxu0
        %1291 = vdwg.mxu0
        %v1292 = vld [vmem:[%s10] sm:$0xf]
        %v1293 = vld [vmem:[%s10 + $0x4] sm:$0xf]
        %v1294 = vld [vmem:[%s10 + $0x8] sm:$0xf]
        %v1295 = vld [vmem:[%s10 + $0xc] sm:$0xf]
        %v1296 = vld [vmem:[%s10 + $0x10] sm:$0xf]
        %v1297 = vld [vmem:[%s10 + $0x14] sm:$0xf]
        %v1298 = vld [vmem:[%s10 + $0x18] sm:$0xf]
        %v1299 = vld [vmem:[%s10 + $0x1c] sm:$0xf]
        %v1300 = vld [vmem:[%s11] sm:$0x1]
        %v1301 = vld [vmem:[%s11 + $0x1] sm:$0x1]
        %v1304 = vlaneseq
        %v1305 = vshrl.u32 %v1304, 7
        %v1306 = vsub.s32 0, %v1305
        %v1307 = vrot.slane %v1300, %v1306
        %v1308 = vlaneseq
        %v1309 = vshrl.u32 %v1308, 7
        %v1310 = vsub.s32 0, %v1309
        %v1311 = vrot.slane %v1301, %v1310
        %v1318 = vunpack.c.l.b16 %v1292
        %v1319 = vunpack.c.l.b16 %v1293
        %v1320 = vunpack.c.l.b16 %v1294
        %v1321 = vunpack.c.l.b16 %v1295
        %v1322 = vpack.c.b16 %v1319, %v1318
        %v1323 = vpack.c.b16 %v1321, %v1320
        %1326 = vmatprep.subr.bf16.mxu0 0
        %1327 = vmatpush1.bf16.msra.mxu0 0
        %1328 = vmatprep.subr.bf16.mxu0 0
        %1329 = vmatpush1.bf16.msra.mxu0 0
        %1330 = vmatprep.subr.bf16.mxu0 0
        %1331 = vmatpush1.bf16.msra.mxu0 0
        %1332 = vmatprep.subr.bf16.mxu0 0
        %1333 = vmatpush1.bf16.msra.mxu0 0
        %1334 = vmatprep.subr.bf16.mxu0 0
        %1335 = vmatpush1.bf16.msra.mxu0 0
        %1336 = vmatprep.subr.bf16.mxu0 0
        %1337 = vmatpush1.bf16.msra.mxu0 0
        %1338 = vmatprep.subr.bf16.mxu0 0
        %1339 = vmatpush1.bf16.msra.mxu0 %v1323
        %1340 = vmatprep.subr.bf16.mxu0 0
        %1341 = vmatpush1.bf16.msra.mxu0 %v1322
        %1342 = vmatprep.subr.bf16.mxu0 0
        %1343 = vmatpush2.bf16.msra.mxu0 0
        %1344 = vmatprep.subr.bf16.mxu0 0
        %1345 = vmatpush2.bf16.msra.mxu0 0
        %1346 = vmatprep.subr.bf16.mxu0 0
        %1347 = vmatpush2.bf16.msra.mxu0 0
        %1348 = vmatprep.subr.bf16.mxu0 0
        %1349 = vmatpush2.bf16.msra.mxu0 0
        %1350 = vmatprep.subr.bf16.mxu0 0
        %1351 = vmatpush2.bf16.msra.mxu0 0
        %1352 = vmatprep.subr.bf16.mxu0 0
        %1353 = vmatpush2.bf16.msra.mxu0 0
        %1354 = vmatprep.subr.bf16.mxu0 0
        %1355 = vmatpush2.bf16.msra.mxu0 0
        %1356 = vmatprep.subr.bf16.mxu0 0
        %1357 = vmatpush2.bf16.msra.mxu0 0
        %1358 = vmatprep.mubr.bf16.mxu0 0
        %1359 = vmatmul.mubr.bf16.gmra.mxu0 %v1072
        %v1360 = vpop.f32.mrf.mxu0
        %v1361 = vadd.f32 %v1307, %v1360
        %v1362 = vpop.f32.mrf.mxu0
        %v1363 = vpop.f32.mrf.mxu0
        %v1364 = vpop.f32.mrf.mxu0
        %1365 = vdwg.mxu0
        %v1370 = vunpack.c.l.b16 %v1296
        %v1371 = vunpack.c.l.b16 %v1297
        %v1372 = vunpack.c.l.b16 %v1298
        %v1373 = vunpack.c.l.b16 %v1299
        %v1374 = vpack.c.b16 %v1371, %v1370
        %v1375 = vpack.c.b16 %v1373, %v1372
        %1378 = vmatprep.subr.bf16.mxu0 0
        %1379 = vmatpush1.bf16.msra.mxu0 0
        %1380 = vmatprep.subr.bf16.mxu0 0
        %1381 = vmatpush1.bf16.msra.mxu0 0
        %1382 = vmatprep.subr.bf16.mxu0 0
        %1383 = vmatpush1.bf16.msra.mxu0 0
        %1384 = vmatprep.subr.bf16.mxu0 0
        %1385 = vmatpush1.bf16.msra.mxu0 0
        %1386 = vmatprep.subr.bf16.mxu0 0
        %1387 = vmatpush1.bf16.msra.mxu0 0
        %1388 = vmatprep.subr.bf16.mxu0 0
        %1389 = vmatpush1.bf16.msra.mxu0 0
        %1390 = vmatprep.subr.bf16.mxu0 0
        %1391 = vmatpush1.bf16.msra.mxu0 %v1375
        %1392 = vmatprep.subr.bf16.mxu0 0
        %1393 = vmatpush1.bf16.msra.mxu0 %v1374
        %1394 = vmatprep.subr.bf16.mxu0 0
        %1395 = vmatpush2.bf16.msra.mxu0 0
        %1396 = vmatprep.subr.bf16.mxu0 0
        %1397 = vmatpush2.bf16.msra.mxu0 0
        %1398 = vmatprep.subr.bf16.mxu0 0
        %1399 = vmatpush2.bf16.msra.mxu0 0
        %1400 = vmatprep.subr.bf16.mxu0 0
        %1401 = vmatpush2.bf16.msra.mxu0 0
        %1402 = vmatprep.subr.bf16.mxu0 0
        %1403 = vmatpush2.bf16.msra.mxu0 0
        %1404 = vmatprep.subr.bf16.mxu0 0
        %1405 = vmatpush2.bf16.msra.mxu0 0
        %1406 = vmatprep.subr.bf16.mxu0 0
        %1407 = vmatpush2.bf16.msra.mxu0 0
        %1408 = vmatprep.subr.bf16.mxu0 0
        %1409 = vmatpush2.bf16.msra.mxu0 0
        %1410 = vmatprep.mubr.bf16.mxu0 0
        %1411 = vmatmul.mubr.bf16.gmra.mxu0 %v1072
        %v1412 = vpop.f32.mrf.mxu0
        %v1413 = vadd.f32 %v1311, %v1412
        %v1414 = vpop.f32.mrf.mxu0
        %v1415 = vpop.f32.mrf.mxu0
        %v1416 = vpop.f32.mrf.mxu0
        %1417 = vdwg.mxu0
        %vm1418 = vcmask 130048
        %v1420 = vsel %vm1418, %v1109, 0
        %v1423 = vsel %vm1418, %v1235, 0
        %1425 = vmatprep.subr.mxu0 0.0
        %1426 = vmatpush1.xpose.msra.mxu0 0.0
        %1427 = vmatprep.subr.mxu0 0.0
        %1428 = vmatpush1.xpose.msra.mxu0 0.0
        %1429 = vmatprep.subr.mxu0 0.0
        %1430 = vmatpush1.xpose.msra.mxu0 0.0
        %1431 = vmatprep.subr.mxu0 0.0
        %1432 = vmatpush1.xpose.msra.mxu0 0.0
        %1433 = vmatprep.subr.mxu0 0.0
        %1434 = vmatpush1.xpose.msra.mxu0 0.0
        %1435 = vmatprep.subr.mxu0 0.0
        %1436 = vmatpush1.xpose.msra.mxu0 0.0
        %1437 = vmatprep.subr.mxu0 0.0
        %1438 = vmatpush1.xpose.msra.mxu0 0.0
        %1439 = vmatprep.subr.mxu0 0.0
        %1440 = vmatpush1.xpose.msra.mxu0 0.0
        %1441 = vmatprep.subr.mxu0 0.0
        %1442 = vmatpush1.xpose.msra.mxu0 0.0
        %1443 = vmatprep.subr.mxu0 0.0
        %1444 = vmatpush1.xpose.msra.mxu0 0.0
        %1445 = vmatprep.subr.mxu0 0.0
        %1446 = vmatpush1.xpose.msra.mxu0 0.0
        %1447 = vmatprep.subr.mxu0 0.0
        %1448 = vmatpush1.xpose.msra.mxu0 0.0
        %1449 = vmatprep.subr.mxu0 0.0
        %1450 = vmatpush1.xpose.msra.mxu0 0.0
        %1451 = vmatprep.subr.mxu0 0.0
        %1452 = vmatpush1.xpose.msra.mxu0 0.0
        %1453 = vmatprep.subr.mxu0 0.0
        %1454 = vmatpush1.xpose.msra.mxu0 0.0
        %1455 = vmatprep.subr.mxu0 0.0
        %1456 = vmatpush1.xpose.msra.mxu0 %v1423
        %1457 = vmatprep.subr.mxu0 0.0
        %1458 = vmatpush2.xpose.msra.mxu0 0.0
        %1459 = vmatprep.subr.mxu0 0.0
        %1460 = vmatpush2.xpose.msra.mxu0 0.0
        %1461 = vmatprep.subr.mxu0 0.0
        %1462 = vmatpush2.xpose.msra.mxu0 0.0
        %1463 = vmatprep.subr.mxu0 0.0
        %1464 = vmatpush2.xpose.msra.mxu0 0.0
        %1465 = vmatprep.subr.mxu0 0.0
        %1466 = vmatpush2.xpose.msra.mxu0 0.0
        %1467 = vmatprep.subr.mxu0 0.0
        %1468 = vmatpush2.xpose.msra.mxu0 0.0
        %1469 = vmatprep.subr.mxu0 0.0
        %1470 = vmatpush2.xpose.msra.mxu0 0.0
        %1471 = vmatprep.subr.mxu0 0.0
        %1472 = vmatpush2.xpose.msra.mxu0 0.0
        %1473 = vmatprep.subr.mxu0 0.0
        %1474 = vmatpush2.xpose.msra.mxu0 0.0
        %1475 = vmatprep.subr.mxu0 0.0
        %1476 = vmatpush2.xpose.msra.mxu0 0.0
        %1477 = vmatprep.subr.mxu0 0.0
        %1478 = vmatpush2.xpose.msra.mxu0 0.0
        %1479 = vmatprep.subr.mxu0 0.0
        %1480 = vmatpush2.xpose.msra.mxu0 0.0
        %1481 = vmatprep.subr.mxu0 0.0
        %1482 = vmatpush2.xpose.msra.mxu0 0.0
        %1483 = vmatprep.subr.mxu0 0.0
        %1484 = vmatpush2.xpose.msra.mxu0 0.0
        %1485 = vmatprep.subr.mxu0 0.0
        %1486 = vmatpush2.xpose.msra.mxu0 0.0
        %1487 = vmatprep.subr.mxu0 0.0
        %1488 = vmatpush2.xpose.msra.mxu0 0.0
        %1489 = vmatprep.mubr.f32.mxu0 0.0
        %1490 = vmatmul.mubr.f32.gmra.mxu0 %v1420
        %v1491 = vpop.f32.mrf.mxu0
        %v1492 = vadd.f32 0.0, %v1491
        %v1493 = vpop.f32.mrf.mxu0
        %1494 = vdwg.mxu0
        %v1496 = vsel %vm1418, %v1161, 0
        %v1499 = vsel %vm1418, %v1287, 0
        %1501 = vmatprep.subr.mxu0 0.0
        %1502 = vmatpush1.xpose.msra.mxu0 0.0
        %1503 = vmatprep.subr.mxu0 0.0
        %1504 = vmatpush1.xpose.msra.mxu0 0.0
        %1505 = vmatprep.subr.mxu0 0.0
        %1506 = vmatpush1.xpose.msra.mxu0 0.0
        %1507 = vmatprep.subr.mxu0 0.0
        %1508 = vmatpush1.xpose.msra.mxu0 0.0
        %1509 = vmatprep.subr.mxu0 0.0
        %1510 = vmatpush1.xpose.msra.mxu0 0.0
        %1511 = vmatprep.subr.mxu0 0.0
        %1512 = vmatpush1.xpose.msra.mxu0 0.0
        %1513 = vmatprep.subr.mxu0 0.0
        %1514 = vmatpush1.xpose.msra.mxu0 0.0
        %1515 = vmatprep.subr.mxu0 0.0
        %1516 = vmatpush1.xpose.msra.mxu0 0.0
        %1517 = vmatprep.subr.mxu0 0.0
        %1518 = vmatpush1.xpose.msra.mxu0 0.0
        %1519 = vmatprep.subr.mxu0 0.0
        %1520 = vmatpush1.xpose.msra.mxu0 0.0
        %1521 = vmatprep.subr.mxu0 0.0
        %1522 = vmatpush1.xpose.msra.mxu0 0.0
        %1523 = vmatprep.subr.mxu0 0.0
        %1524 = vmatpush1.xpose.msra.mxu0 0.0
        %1525 = vmatprep.subr.mxu0 0.0
        %1526 = vmatpush1.xpose.msra.mxu0 0.0
        %1527 = vmatprep.subr.mxu0 0.0
        %1528 = vmatpush1.xpose.msra.mxu0 0.0
        %1529 = vmatprep.subr.mxu0 0.0
        %1530 = vmatpush1.xpose.msra.mxu0 0.0
        %1531 = vmatprep.subr.mxu0 0.0
        %1532 = vmatpush1.xpose.msra.mxu0 %v1499
        %1533 = vmatprep.subr.mxu0 0.0
        %1534 = vmatpush2.xpose.msra.mxu0 0.0
        %1535 = vmatprep.subr.mxu0 0.0
        %1536 = vmatpush2.xpose.msra.mxu0 0.0
        %1537 = vmatprep.subr.mxu0 0.0
        %1538 = vmatpush2.xpose.msra.mxu0 0.0
        %1539 = vmatprep.subr.mxu0 0.0
        %1540 = vmatpush2.xpose.msra.mxu0 0.0
        %1541 = vmatprep.subr.mxu0 0.0
        %1542 = vmatpush2.xpose.msra.mxu0 0.0
        %1543 = vmatprep.subr.mxu0 0.0
        %1544 = vmatpush2.xpose.msra.mxu0 0.0
        %1545 = vmatprep.subr.mxu0 0.0
        %1546 = vmatpush2.xpose.msra.mxu0 0.0
        %1547 = vmatprep.subr.mxu0 0.0
        %1548 = vmatpush2.xpose.msra.mxu0 0.0
        %1549 = vmatprep.subr.mxu0 0.0
        %1550 = vmatpush2.xpose.msra.mxu0 0.0
        %1551 = vmatprep.subr.mxu0 0.0
        %1552 = vmatpush2.xpose.msra.mxu0 0.0
        %1553 = vmatprep.subr.mxu0 0.0
        %1554 = vmatpush2.xpose.msra.mxu0 0.0
        %1555 = vmatprep.subr.mxu0 0.0
        %1556 = vmatpush2.xpose.msra.mxu0 0.0
        %1557 = vmatprep.subr.mxu0 0.0
        %1558 = vmatpush2.xpose.msra.mxu0 0.0
        %1559 = vmatprep.subr.mxu0 0.0
        %1560 = vmatpush2.xpose.msra.mxu0 0.0
        %1561 = vmatprep.subr.mxu0 0.0
        %1562 = vmatpush2.xpose.msra.mxu0 0.0
        %1563 = vmatprep.subr.mxu0 0.0
        %1564 = vmatpush2.xpose.msra.mxu0 0.0
        %1565 = vmatprep.mubr.f32.mxu0 0.0
        %1566 = vmatmul.mubr.f32.gmra.mxu0 %v1496
        %v1567 = vpop.f32.mrf.mxu0
        %v1568 = vadd.f32 0.0, %v1567
        %v1569 = vpop.f32.mrf.mxu0
        %1570 = vdwg.mxu0
        %v1571 = vmul.f32 %v1492, 0.25
        %v1572 = vmul.f32 %v1568, 0.25
        %vm1573 = vcmask 64512
        %v1574 = vsel %vm1573, %v1571, -inf
        %1575 = vmax.xlane.f32.xlu0 %v1574
        %v1576 = vpop.xlane.xlu0 %1575
        %v1577 = vsel %vm1573, %v1572, -inf
        %1578 = vmax.xlane.f32.xlu0 %v1577
        %v1579 = vpop.xlane.xlu0 %1578
        %v1580 = vsub.f32 %v1571, %v1576
        %v1581 = vsub.f32 %v1572, %v1579
        %v1582 = vmul.f32 %v1580, 1.442695
        %v1583 = vpow.pop %v1582
        %v1584 = vmul.f32 %v1581, 1.442695
        %v1585 = vpow.pop %v1584
        %v1586 = vsel %vm1573, %v1583, 0.0
        %1587 = vadd.xlane.f32.xlu0 %v1586
        %v1588 = vpop.xlane.xlu0 %1587
        %v1589 = vsel %vm1573, %v1585, 0.0
        %1590 = vadd.xlane.f32.xlu0 %v1589
        %v1591 = vpop.xlane.xlu0 %1590
        %v1592 = vrcp.pop %v1588
        %v1593 = vrcp.pop %v1591
        %v1594 = vmul.f32 %v1583, %v1592
        %v1595 = vmul.f32 %v1585, %v1593
        %v1596 = vpack.c.bf16 %v1594, %v1594
        %v1597 = vpack.c.bf16 %v1595, %v1595
        %v1598 = vpack.c.bf16 %v1361, %v1361
        %v1599 = vpack.c.bf16 %v1413, %v1413
        %v1601 = vsel %vm1573, %v1596, 0
        %vm1603 = vcmask 1043456
        %v1605 = vsel %vm1603, %v1598, 0
        %1607 = vmatprep.subr.bf16.mxu0 0
        %1608 = vmatpush1.bf16.msra.mxu0 0
        %1609 = vmatprep.subr.bf16.mxu0 0
        %1610 = vmatpush1.bf16.msra.mxu0 0
        %1611 = vmatprep.subr.bf16.mxu0 0
        %1612 = vmatpush1.bf16.msra.mxu0 0
        %1613 = vmatprep.subr.bf16.mxu0 0
        %1614 = vmatpush1.bf16.msra.mxu0 0
        %1615 = vmatprep.subr.bf16.mxu0 0
        %1616 = vmatpush1.bf16.msra.mxu0 0
        %1617 = vmatprep.subr.bf16.mxu0 0
        %1618 = vmatpush1.bf16.msra.mxu0 0
        %1619 = vmatprep.subr.bf16.mxu0 0
        %1620 = vmatpush1.bf16.msra.mxu0 0
        %1621 = vmatprep.subr.bf16.mxu0 0
        %1622 = vmatpush1.bf16.msra.mxu0 %v1605
        %1623 = vmatprep.subr.bf16.mxu0 0
        %1624 = vmatpush2.bf16.msra.mxu0 0
        %1625 = vmatprep.subr.bf16.mxu0 0
        %1626 = vmatpush2.bf16.msra.mxu0 0
        %1627 = vmatprep.subr.bf16.mxu0 0
        %1628 = vmatpush2.bf16.msra.mxu0 0
        %1629 = vmatprep.subr.bf16.mxu0 0
        %1630 = vmatpush2.bf16.msra.mxu0 0
        %1631 = vmatprep.subr.bf16.mxu0 0
        %1632 = vmatpush2.bf16.msra.mxu0 0
        %1633 = vmatprep.subr.bf16.mxu0 0
        %1634 = vmatpush2.bf16.msra.mxu0 0
        %1635 = vmatprep.subr.bf16.mxu0 0
        %1636 = vmatpush2.bf16.msra.mxu0 0
        %1637 = vmatprep.subr.bf16.mxu0 0
        %1638 = vmatpush2.bf16.msra.mxu0 0
        %1639 = vmatprep.mubr.bf16.mxu0 0
        %1640 = vmatmul.mubr.bf16.gmra.mxu0 %v1601
        %v1641 = vpop.f32.mrf.mxu0
        %v1642 = vadd.f32 0.0, %v1641
        %v1643 = vpop.f32.mrf.mxu0
        %v1644 = vpop.f32.mrf.mxu0
        %v1645 = vpop.f32.mrf.mxu0
        %1646 = vdwg.mxu0
        %v1648 = vsel %vm1573, %v1597, 0
        %v1651 = vsel %vm1603, %v1599, 0
        %1653 = vmatprep.subr.bf16.mxu0 0
        %1654 = vmatpush1.bf16.msra.mxu0 0
        %1655 = vmatprep.subr.bf16.mxu0 0
        %1656 = vmatpush1.bf16.msra.mxu0 0
        %1657 = vmatprep.subr.bf16.mxu0 0
        %1658 = vmatpush1.bf16.msra.mxu0 0
        %1659 = vmatprep.subr.bf16.mxu0 0
        %1660 = vmatpush1.bf16.msra.mxu0 0
        %1661 = vmatprep.subr.bf16.mxu0 0
        %1662 = vmatpush1.bf16.msra.mxu0 0
        %1663 = vmatprep.subr.bf16.mxu0 0
        %1664 = vmatpush1.bf16.msra.mxu0 0
        %1665 = vmatprep.subr.bf16.mxu0 0
        %1666 = vmatpush1.bf16.msra.mxu0 0
        %1667 = vmatprep.subr.bf16.mxu0 0
        %1668 = vmatpush1.bf16.msra.mxu0 %v1651
        %1669 = vmatprep.subr.bf16.mxu0 0
        %1670 = vmatpush2.bf16.msra.mxu0 0
        %1671 = vmatprep.subr.bf16.mxu0 0
        %1672 = vmatpush2.bf16.msra.mxu0 0
        %1673 = vmatprep.subr.bf16.mxu0 0
        %1674 = vmatpush2.bf16.msra.mxu0 0
        %1675 = vmatprep.subr.bf16.mxu0 0
        %1676 = vmatpush2.bf16.msra.mxu0 0
        %1677 = vmatprep.subr.bf16.mxu0 0
        %1678 = vmatpush2.bf16.msra.mxu0 0
        %1679 = vmatprep.subr.bf16.mxu0 0
        %1680 = vmatpush2.bf16.msra.mxu0 0
        %1681 = vmatprep.subr.bf16.mxu0 0
        %1682 = vmatpush2.bf16.msra.mxu0 0
        %1683 = vmatprep.subr.bf16.mxu0 0
        %1684 = vmatpush2.bf16.msra.mxu0 0
        %1685 = vmatprep.mubr.bf16.mxu0 0
        %1686 = vmatmul.mubr.bf16.gmra.mxu0 %v1648
        %v1687 = vpop.f32.mrf.mxu0
        %v1688 = vadd.f32 0.0, %v1687
        %v1689 = vpop.f32.mrf.mxu0
        %v1690 = vpop.f32.mrf.mxu0
        %v1691 = vpop.f32.mrf.mxu0
        %1692 = vdwg.mxu0
        %v1693 = vsel %vm1005, %v1642, 0.0
        %v1694 = vsel %vm1005, %v1688, 0.0
        %v1695 = vadd.f32 %v1693, %v1694
        %v1696 = vadd.f32 %v1002, %v1695
        %v1697 = vld [vmem:[%s12] sm:$0x1]
        %v1699 = vlaneseq
        %v1700 = vshrl.u32 %v1699, 7
        %v1701 = vsub.s32 0, %v1700
        %v1702 = vrot.slane %v1697, %v1701
        %v1704 = vadd.f32 %v1696, %v1702
        %v1705 = vld [vmem:[%s13] sm:$0x1]
        %v1706 = vld [vmem:[%s14] sm:$0x1]
        %v1707 = vsel %vm1005, %v1704, 0.0
        %1708 = vadd.xlane.f32.xlu0 %v1707
        %v1709 = vpop.xlane.xlu0 %1708
        %v1710 = vmul.f32 %v1709, %v1009
        %v1711 = vmul.f32 %v1704, %v1704
        %v1712 = vsel %vm1005, %v1711, 0.0
        %1713 = vadd.xlane.f32.xlu0 %v1712
        %v1714 = vpop.xlane.xlu0 %1713
        %v1715 = vmul.f32 %v1714, %v1009
        %v1716 = vmul.f32 %v1710, %v1710
        %v1717 = vsub.f32 %v1715, %v1716
        %v1718 = vsub.f32 %v1704, %v1710
        %v1719 = vadd.f32 %v1717, 1e-06
        %v1720 = vrsqrt.pop %v1719
        %v1721 = vmul.f32 %v1718, %v1720
        %v1723 = vlaneseq
        %v1724 = vshrl.u32 %v1723, 7
        %v1725 = vsub.s32 0, %v1724
        %v1726 = vrot.slane %v1705, %v1725
        %v1728 = vmul.f32 %v1721, %v1726
        %v1730 = vlaneseq
        %v1731 = vshrl.u32 %v1730, 7
        %v1732 = vsub.s32 0, %v1731
        %v1733 = vrot.slane %v1706, %v1732
        %v1735 = vadd.f32 %v1728, %v1733
        %v1736 = vpack.c.bf16 %v1735, %v1735
        %v1737 = vld [vmem:[%s15] sm:$0xf]
        %v1738 = vld [vmem:[%s15 + $0x4] sm:$0xf]
        %v1739 = vld [vmem:[%s15 + $0x8] sm:$0xf]
        %v1740 = vld [vmem:[%s15 + $0xc] sm:$0xf]
        %v1741 = vld [vmem:[%s16] sm:$0x1]
        %v1743 = vlaneseq
        %v1744 = vshrl.u32 %v1743, 7
        %v1745 = vsub.s32 0, %v1744
        %v1746 = vrot.slane %v1741, %v1745
        %v1752 = vunpack.c.l.b16 %v1737
        %v1753 = vunpack.c.l.b16 %v1738
        %v1754 = vunpack.c.l.b16 %v1739
        %v1755 = vunpack.c.l.b16 %v1740
        %v1756 = vpack.c.b16 %v1753, %v1752
        %v1757 = vpack.c.b16 %v1755, %v1754
        %v1761 = vsel %vm1005, %v1736, 0
        %1763 = vmatprep.subr.bf16.mxu0 0
        %1764 = vmatpush1.bf16.msra.mxu0 0
        %1765 = vmatprep.subr.bf16.mxu0 0
        %1766 = vmatpush1.bf16.msra.mxu0 0
        %1767 = vmatprep.subr.bf16.mxu0 0
        %1768 = vmatpush1.bf16.msra.mxu0 0
        %1769 = vmatprep.subr.bf16.mxu0 0
        %1770 = vmatpush1.bf16.msra.mxu0 0
        %1771 = vmatprep.subr.bf16.mxu0 0
        %1772 = vmatpush1.bf16.msra.mxu0 0
        %1773 = vmatprep.subr.bf16.mxu0 0
        %1774 = vmatpush1.bf16.msra.mxu0 0
        %1775 = vmatprep.subr.bf16.mxu0 0
        %1776 = vmatpush1.bf16.msra.mxu0 %v1757
        %1777 = vmatprep.subr.bf16.mxu0 0
        %1778 = vmatpush1.bf16.msra.mxu0 %v1756
        %1779 = vmatprep.subr.bf16.mxu0 0
        %1780 = vmatpush2.bf16.msra.mxu0 0
        %1781 = vmatprep.subr.bf16.mxu0 0
        %1782 = vmatpush2.bf16.msra.mxu0 0
        %1783 = vmatprep.subr.bf16.mxu0 0
        %1784 = vmatpush2.bf16.msra.mxu0 0
        %1785 = vmatprep.subr.bf16.mxu0 0
        %1786 = vmatpush2.bf16.msra.mxu0 0
        %1787 = vmatprep.subr.bf16.mxu0 0
        %1788 = vmatpush2.bf16.msra.mxu0 0
        %1789 = vmatprep.subr.bf16.mxu0 0
        %1790 = vmatpush2.bf16.msra.mxu0 0
        %1791 = vmatprep.subr.bf16.mxu0 0
        %1792 = vmatpush2.bf16.msra.mxu0 0
        %1793 = vmatprep.subr.bf16.mxu0 0
        %1794 = vmatpush2.bf16.msra.mxu0 0
        %1795 = vmatprep.mubr.bf16.mxu0 0
        %1796 = vmatmul.mubr.bf16.gmra.mxu0 %v1761
        %v1797 = vpop.f32.mrf.mxu0
        %v1798 = vadd.f32 %v1746, %v1797
        %v1799 = vpop.f32.mrf.mxu0
        %v1800 = vpop.f32.mrf.mxu0
        %v1801 = vpop.f32.mrf.mxu0
        %1802 = vdwg.mxu0
        %v1803 = vmul.f32 %v1798, %v1798
        %v1804 = vmul.f32 %v1798, %v1803
        %v1805 = vmul.f32 %v1804, 0.044715
        %v1806 = vadd.f32 %v1798, %v1805
        %v1807 = vmul.f32 %v1806, 0.7978846
        %v1808 = vtanh.pop %v1807
        %v1809 = vadd.f32 %v1808, 1.0
        %v1810 = vmul.f32 %v1809, 0.5
        %v1811 = vmul.f32 %v1798, %v1810
        %v1812 = vpack.c.bf16 %v1811, %v1811
        %v1813 = vld [vmem:[%s17] sm:$0xf]
        %v1814 = vld [vmem:[%s17 + $0x4] sm:$0xf]
        %v1815 = vld [vmem:[%s17 + $0x8] sm:$0xf]
        %v1816 = vld [vmem:[%s17 + $0xc] sm:$0xf]
        %v1817 = vld [vmem:[%s17 + $0x10] sm:$0xf]
        %v1818 = vld [vmem:[%s17 + $0x14] sm:$0xf]
        %v1819 = vld [vmem:[%s17 + $0x18] sm:$0xf]
        %v1820 = vld [vmem:[%s17 + $0x1c] sm:$0xf]
        %v1821 = vld [vmem:[%s17 + $0x20] sm:$0xf]
        %v1822 = vld [vmem:[%s17 + $0x24] sm:$0xf]
        %v1823 = vld [vmem:[%s17 + $0x28] sm:$0xf]
        %v1824 = vld [vmem:[%s17 + $0x2c] sm:$0xf]
        %v1825 = vld [vmem:[%s17 + $0x30] sm:$0xf]
        %v1826 = vld [vmem:[%s17 + $0x34] sm:$0xf]
        %v1827 = vld [vmem:[%s17 + $0x38] sm:$0xf]
        %v1828 = vld [vmem:[%s17 + $0x3c] sm:$0xf]
        %v1845 = vunpack.c.l.b16 %v1813
        %v1846 = vunpack.c.l.b16 %v1814
        %v1847 = vunpack.c.l.b16 %v1815
        %v1848 = vunpack.c.l.b16 %v1816
        %v1849 = vunpack.c.l.b16 %v1817
        %v1850 = vunpack.c.l.b16 %v1818
        %v1851 = vunpack.c.l.b16 %v1819
        %v1852 = vunpack.c.l.b16 %v1820
        %v1853 = vunpack.c.l.b16 %v1821
        %v1854 = vunpack.c.l.b16 %v1822
        %v1855 = vunpack.c.l.b16 %v1823
        %v1856 = vunpack.c.l.b16 %v1824
        %v1857 = vunpack.c.l.b16 %v1825
        %v1858 = vunpack.c.l.b16 %v1826
        %v1859 = vunpack.c.l.b16 %v1827
        %v1860 = vunpack.c.l.b16 %v1828
        %v1861 = vpack.c.b16 %v1846, %v1845
        %v1862 = vpack.c.b16 %v1848, %v1847
        %v1863 = vpack.c.b16 %v1850, %v1849
        %v1864 = vpack.c.b16 %v1852, %v1851
        %v1865 = vpack.c.b16 %v1854, %v1853
        %v1866 = vpack.c.b16 %v1856, %v1855
        %v1867 = vpack.c.b16 %v1858, %v1857
        %v1868 = vpack.c.b16 %v1860, %v1859
        %1877 = vmatprep.subr.bf16.mxu0 0
        %1878 = vmatpush1.bf16.msra.mxu0 %v1868
        %1879 = vmatprep.subr.bf16.mxu0 0
        %1880 = vmatpush1.bf16.msra.mxu0 %v1867
        %1881 = vmatprep.subr.bf16.mxu0 0
        %1882 = vmatpush1.bf16.msra.mxu0 %v1866
        %1883 = vmatprep.subr.bf16.mxu0 0
        %1884 = vmatpush1.bf16.msra.mxu0 %v1865
        %1885 = vmatprep.subr.bf16.mxu0 0
        %1886 = vmatpush1.bf16.msra.mxu0 %v1864
        %1887 = vmatprep.subr.bf16.mxu0 0
        %1888 = vmatpush1.bf16.msra.mxu0 %v1863
        %1889 = vmatprep.subr.bf16.mxu0 0
        %1890 = vmatpush1.bf16.msra.mxu0 %v1862
        %1891 = vmatprep.subr.bf16.mxu0 0
        %1892 = vmatpush1.bf16.msra.mxu0 %v1861
        %1893 = vmatprep.subr.bf16.mxu0 0
        %1894 = vmatpush2.bf16.msra.mxu0 0
        %1895 = vmatprep.subr.bf16.mxu0 0
        %1896 = vmatpush2.bf16.msra.mxu0 0
        %1897 = vmatprep.subr.bf16.mxu0 0
        %1898 = vmatpush2.bf16.msra.mxu0 0
        %1899 = vmatprep.subr.bf16.mxu0 0
        %1900 = vmatpush2.bf16.msra.mxu0 0
        %1901 = vmatprep.subr.bf16.mxu0 0
        %1902 = vmatpush2.bf16.msra.mxu0 0
        %1903 = vmatprep.subr.bf16.mxu0 0
        %1904 = vmatpush2.bf16.msra.mxu0 0
        %1905 = vmatprep.subr.bf16.mxu0 0
        %1906 = vmatpush2.bf16.msra.mxu0 0
        %1907 = vmatprep.subr.bf16.mxu0 0
        %1908 = vmatpush2.bf16.msra.mxu0 0
        %1909 = vmatprep.mubr.bf16.mxu0 0
        %1910 = vmatmul.mubr.bf16.gmra.mxu0 %v1812
        %v1911 = vpop.f32.mrf.mxu0
        %v1912 = vadd.f32 0.0, %v1911
        %v1913 = vpop.f32.mrf.mxu0
        %v1914 = vpop.f32.mrf.mxu0
        %v1915 = vpop.f32.mrf.mxu0
        %1916 = vdwg.mxu0
        %v1917 = vadd.f32 %v1704, %v1912
        %v1918 = vld [vmem:[%s18] sm:$0x1]
        %v1920 = vlaneseq
        %v1921 = vshrl.u32 %v1920, 7
        %v1922 = vsub.s32 0, %v1921
        %v1923 = vrot.slane %v1918, %v1922
        %v1925 = vadd.f32 %v1917, %v1923
        %s1926 = scalar_lea.vmem %s4, 1
        %v1927 = vld [vmem:[%s1926] sm:$0x1]
        %s1928 = scalar_lea.vmem %s5, 1
        %v1929 = vld [vmem:[%s1928] sm:$0x1]
        %v1930 = vsel %vm1005, %v1925, 0.0
        %1931 = vadd.xlane.f32.xlu0 %v1930
        %v1932 = vpop.xlane.xlu0 %1931
        %v1933 = vmul.f32 %v1932, %v1009
        %v1934 = vmul.f32 %v1925, %v1925
        %v1935 = vsel %vm1005, %v1934, 0.0
        %1936 = vadd.xlane.f32.xlu0 %v1935
        %v1937 = vpop.xlane.xlu0 %1936
        %v1938 = vmul.f32 %v1937, %v1009
        %v1939 = vmul.f32 %v1933, %v1933
        %v1940 = vsub.f32 %v1938, %v1939
        %v1941 = vsub.f32 %v1925, %v1933
        %v1942 = vadd.f32 %v1940, 1e-06
        %v1943 = vrsqrt.pop %v1942
        %v1944 = vmul.f32 %v1941, %v1943
        %v1946 = vlaneseq
        %v1947 = vshrl.u32 %v1946, 7
        %v1948 = vsub.s32 0, %v1947
        %v1949 = vrot.slane %v1927, %v1948
        %v1951 = vmul.f32 %v1944, %v1949
        %v1953 = vlaneseq
        %v1954 = vshrl.u32 %v1953, 7
        %v1955 = vsub.s32 0, %v1954
        %v1956 = vrot.slane %v1929, %v1955
        %v1958 = vadd.f32 %v1951, %v1956
        %v1959 = vpack.c.bf16 %v1958, %v1958
        %s1960 = scalar_lea.vmem %s6, 32
        %v1961 = vld [vmem:[%s1960] sm:$0xf]
        %v1962 = vld [vmem:[%s1960 + $0x4] sm:$0xf]
        %v1963 = vld [vmem:[%s1960 + $0x8] sm:$0xf]
        %v1964 = vld [vmem:[%s1960 + $0xc] sm:$0xf]
        %v1965 = vld [vmem:[%s1960 + $0x10] sm:$0xf]
        %v1966 = vld [vmem:[%s1960 + $0x14] sm:$0xf]
        %v1967 = vld [vmem:[%s1960 + $0x18] sm:$0xf]
        %v1968 = vld [vmem:[%s1960 + $0x1c] sm:$0xf]
        %s1969 = scalar_lea.vmem %s7, 2
        %v1970 = vld [vmem:[%s1969] sm:$0x1]
        %v1971 = vld [vmem:[%s1969 + $0x1] sm:$0x1]
        %v1974 = vlaneseq
        %v1975 = vshrl.u32 %v1974, 7
        %v1976 = vsub.s32 0, %v1975
        %v1977 = vrot.slane %v1970, %v1976
        %v1978 = vlaneseq
        %v1979 = vshrl.u32 %v1978, 7
        %v1980 = vsub.s32 0, %v1979
        %v1981 = vrot.slane %v1971, %v1980
        %v1988 = vunpack.c.l.b16 %v1961
        %v1989 = vunpack.c.l.b16 %v1962
        %v1990 = vunpack.c.l.b16 %v1963
        %v1991 = vunpack.c.l.b16 %v1964
        %v1992 = vpack.c.b16 %v1989, %v1988
        %v1993 = vpack.c.b16 %v1991, %v1990
        %v1997 = vsel %vm1005, %v1959, 0
        %1999 = vmatprep.subr.bf16.mxu0 0
        %2000 = vmatpush1.bf16.msra.mxu0 0
        %2001 = vmatprep.subr.bf16.mxu0 0
        %2002 = vmatpush1.bf16.msra.mxu0 0
        %2003 = vmatprep.subr.bf16.mxu0 0
        %2004 = vmatpush1.bf16.msra.mxu0 0
        %2005 = vmatprep.subr.bf16.mxu0 0
        %2006 = vmatpush1.bf16.msra.mxu0 0
        %2007 = vmatprep.subr.bf16.mxu0 0
        %2008 = vmatpush1.bf16.msra.mxu0 0
        %2009 = vmatprep.subr.bf16.mxu0 0
        %2010 = vmatpush1.bf16.msra.mxu0 0
        %2011 = vmatprep.subr.bf16.mxu0 0
        %2012 = vmatpush1.bf16.msra.mxu0 %v1993
        %2013 = vmatprep.subr.bf16.mxu0 0
        %2014 = vmatpush1.bf16.msra.mxu0 %v1992
        %2015 = vmatprep.subr.bf16.mxu0 0
        %2016 = vmatpush2.bf16.msra.mxu0 0
        %2017 = vmatprep.subr.bf16.mxu0 0
        %2018 = vmatpush2.bf16.msra.mxu0 0
        %2019 = vmatprep.subr.bf16.mxu0 0
        %2020 = vmatpush2.bf16.msra.mxu0 0
        %2021 = vmatprep.subr.bf16.mxu0 0
        %2022 = vmatpush2.bf16.msra.mxu0 0
        %2023 = vmatprep.subr.bf16.mxu0 0
        %2024 = vmatpush2.bf16.msra.mxu0 0
        %2025 = vmatprep.subr.bf16.mxu0 0
        %2026 = vmatpush2.bf16.msra.mxu0 0
        %2027 = vmatprep.subr.bf16.mxu0 0
        %2028 = vmatpush2.bf16.msra.mxu0 0
        %2029 = vmatprep.subr.bf16.mxu0 0
        %2030 = vmatpush2.bf16.msra.mxu0 0
        %2031 = vmatprep.mubr.bf16.mxu0 0
        %2032 = vmatmul.mubr.bf16.gmra.mxu0 %v1997
        %v2033 = vpop.f32.mrf.mxu0
        %v2034 = vadd.f32 %v1977, %v2033
        %v2035 = vpop.f32.mrf.mxu0
        %v2036 = vpop.f32.mrf.mxu0
        %v2037 = vpop.f32.mrf.mxu0
        %2038 = vdwg.mxu0
        %v2043 = vunpack.c.l.b16 %v1965
        %v2044 = vunpack.c.l.b16 %v1966
        %v2045 = vunpack.c.l.b16 %v1967
        %v2046 = vunpack.c.l.b16 %v1968
        %v2047 = vpack.c.b16 %v2044, %v2043
        %v2048 = vpack.c.b16 %v2046, %v2045
        %2051 = vmatprep.subr.bf16.mxu0 0
        %2052 = vmatpush1.bf16.msra.mxu0 0
        %2053 = vmatprep.subr.bf16.mxu0 0
        %2054 = vmatpush1.bf16.msra.mxu0 0
        %2055 = vmatprep.subr.bf16.mxu0 0
        %2056 = vmatpush1.bf16.msra.mxu0 0
        %2057 = vmatprep.subr.bf16.mxu0 0
        %2058 = vmatpush1.bf16.msra.mxu0 0
        %2059 = vmatprep.subr.bf16.mxu0 0
        %2060 = vmatpush1.bf16.msra.mxu0 0
        %2061 = vmatprep.subr.bf16.mxu0 0
        %2062 = vmatpush1.bf16.msra.mxu0 0
        %2063 = vmatprep.subr.bf16.mxu0 0
        %2064 = vmatpush1.bf16.msra.mxu0 %v2048
        %2065 = vmatprep.subr.bf16.mxu0 0
        %2066 = vmatpush1.bf16.msra.mxu0 %v2047
        %2067 = vmatprep.subr.bf16.mxu0 0
        %2068 = vmatpush2.bf16.msra.mxu0 0
        %2069 = vmatprep.subr.bf16.mxu0 0
        %2070 = vmatpush2.bf16.msra.mxu0 0
        %2071 = vmatprep.subr.bf16.mxu0 0
        %2072 = vmatpush2.bf16.msra.mxu0 0
        %2073 = vmatprep.subr.bf16.mxu0 0
        %2074 = vmatpush2.bf16.msra.mxu0 0
        %2075 = vmatprep.subr.bf16.mxu0 0
        %2076 = vmatpush2.bf16.msra.mxu0 0
        %2077 = vmatprep.subr.bf16.mxu0 0
        %2078 = vmatpush2.bf16.msra.mxu0 0
        %2079 = vmatprep.subr.bf16.mxu0 0
        %2080 = vmatpush2.bf16.msra.mxu0 0
        %2081 = vmatprep.subr.bf16.mxu0 0
        %2082 = vmatpush2.bf16.msra.mxu0 0
        %2083 = vmatprep.mubr.bf16.mxu0 0
        %2084 = vmatmul.mubr.bf16.gmra.mxu0 %v1997
        %v2085 = vpop.f32.mrf.mxu0
        %v2086 = vadd.f32 %v1981, %v2085
        %v2087 = vpop.f32.mrf.mxu0
        %v2088 = vpop.f32.mrf.mxu0
        %v2089 = vpop.f32.mrf.mxu0
        %2090 = vdwg.mxu0
        %s2091 = scalar_lea.vmem %s8, 32
        %v2092 = vld [vmem:[%s2091] sm:$0xf]
        %v2093 = vld [vmem:[%s2091 + $0x4] sm:$0xf]
        %v2094 = vld [vmem:[%s2091 + $0x8] sm:$0xf]
        %v2095 = vld [vmem:[%s2091 + $0xc] sm:$0xf]
        %v2096 = vld [vmem:[%s2091 + $0x10] sm:$0xf]
        %v2097 = vld [vmem:[%s2091 + $0x14] sm:$0xf]
        %v2098 = vld [vmem:[%s2091 + $0x18] sm:$0xf]
        %v2099 = vld [vmem:[%s2091 + $0x1c] sm:$0xf]
        %s2100 = scalar_lea.vmem %s9, 2
        %v2101 = vld [vmem:[%s2100] sm:$0x1]
        %v2102 = vld [vmem:[%s2100 + $0x1] sm:$0x1]
        %v2105 = vlaneseq
        %v2106 = vshrl.u32 %v2105, 7
        %v2107 = vsub.s32 0, %v2106
        %v2108 = vrot.slane %v2101, %v2107
        %v2109 = vlaneseq
        %v2110 = vshrl.u32 %v2109, 7
        %v2111 = vsub.s32 0, %v2110
        %v2112 = vrot.slane %v2102, %v2111
        %v2119 = vunpack.c.l.b16 %v2092
        %v2120 = vunpack.c.l.b16 %v2093
        %v2121 = vunpack.c.l.b16 %v2094
        %v2122 = vunpack.c.l.b16 %v2095
        %v2123 = vpack.c.b16 %v2120, %v2119
        %v2124 = vpack.c.b16 %v2122, %v2121
        %2127 = vmatprep.subr.bf16.mxu0 0
        %2128 = vmatpush1.bf16.msra.mxu0 0
        %2129 = vmatprep.subr.bf16.mxu0 0
        %2130 = vmatpush1.bf16.msra.mxu0 0
        %2131 = vmatprep.subr.bf16.mxu0 0
        %2132 = vmatpush1.bf16.msra.mxu0 0
        %2133 = vmatprep.subr.bf16.mxu0 0
        %2134 = vmatpush1.bf16.msra.mxu0 0
        %2135 = vmatprep.subr.bf16.mxu0 0
        %2136 = vmatpush1.bf16.msra.mxu0 0
        %2137 = vmatprep.subr.bf16.mxu0 0
        %2138 = vmatpush1.bf16.msra.mxu0 0
        %2139 = vmatprep.subr.bf16.mxu0 0
        %2140 = vmatpush1.bf16.msra.mxu0 %v2124
        %2141 = vmatprep.subr.bf16.mxu0 0
        %2142 = vmatpush1.bf16.msra.mxu0 %v2123
        %2143 = vmatprep.subr.bf16.mxu0 0
        %2144 = vmatpush2.bf16.msra.mxu0 0
        %2145 = vmatprep.subr.bf16.mxu0 0
        %2146 = vmatpush2.bf16.msra.mxu0 0
        %2147 = vmatprep.subr.bf16.mxu0 0
        %2148 = vmatpush2.bf16.msra.mxu0 0
        %2149 = vmatprep.subr.bf16.mxu0 0
        %2150 = vmatpush2.bf16.msra.mxu0 0
        %2151 = vmatprep.subr.bf16.mxu0 0
        %2152 = vmatpush2.bf16.msra.mxu0 0
        %2153 = vmatprep.subr.bf16.mxu0 0
        %2154 = vmatpush2.bf16.msra.mxu0 0
        %2155 = vmatprep.subr.bf16.mxu0 0
        %2156 = vmatpush2.bf16.msra.mxu0 0
        %2157 = vmatprep.subr.bf16.mxu0 0
        %2158 = vmatpush2.bf16.msra.mxu0 0
        %2159 = vmatprep.mubr.bf16.mxu0 0
        %2160 = vmatmul.mubr.bf16.gmra.mxu0 %v1997
        %v2161 = vpop.f32.mrf.mxu0
        %v2162 = vadd.f32 %v2108, %v2161
        %v2163 = vpop.f32.mrf.mxu0
        %v2164 = vpop.f32.mrf.mxu0
        %v2165 = vpop.f32.mrf.mxu0
        %2166 = vdwg.mxu0
        %v2171 = vunpack.c.l.b16 %v2096
        %v2172 = vunpack.c.l.b16 %v2097
        %v2173 = vunpack.c.l.b16 %v2098
        %v2174 = vunpack.c.l.b16 %v2099
        %v2175 = vpack.c.b16 %v2172, %v2171
        %v2176 = vpack.c.b16 %v2174, %v2173
        %2179 = vmatprep.subr.bf16.mxu0 0
        %2180 = vmatpush1.bf16.msra.mxu0 0
        %2181 = vmatprep.subr.bf16.mxu0 0
        %2182 = vmatpush1.bf16.msra.mxu0 0
        %2183 = vmatprep.subr.bf16.mxu0 0
        %2184 = vmatpush1.bf16.msra.mxu0 0
        %2185 = vmatprep.subr.bf16.mxu0 0
        %2186 = vmatpush1.bf16.msra.mxu0 0
        %2187 = vmatprep.subr.bf16.mxu0 0
        %2188 = vmatpush1.bf16.msra.mxu0 0
        %2189 = vmatprep.subr.bf16.mxu0 0
        %2190 = vmatpush1.bf16.msra.mxu0 0
        %2191 = vmatprep.subr.bf16.mxu0 0
        %2192 = vmatpush1.bf16.msra.mxu0 %v2176
        %2193 = vmatprep.subr.bf16.mxu0 0
        %2194 = vmatpush1.bf16.msra.mxu0 %v2175
        %2195 = vmatprep.subr.bf16.mxu0 0
        %2196 = vmatpush2.bf16.msra.mxu0 0
        %2197 = vmatprep.subr.bf16.mxu0 0
        %2198 = vmatpush2.bf16.msra.mxu0 0
        %2199 = vmatprep.subr.bf16.mxu0 0
        %2200 = vmatpush2.bf16.msra.mxu0 0
        %2201 = vmatprep.subr.bf16.mxu0 0
        %2202 = vmatpush2.bf16.msra.mxu0 0
        %2203 = vmatprep.subr.bf16.mxu0 0
        %2204 = vmatpush2.bf16.msra.mxu0 0
        %2205 = vmatprep.subr.bf16.mxu0 0
        %2206 = vmatpush2.bf16.msra.mxu0 0
        %2207 = vmatprep.subr.bf16.mxu0 0
        %2208 = vmatpush2.bf16.msra.mxu0 0
        %2209 = vmatprep.subr.bf16.mxu0 0
        %2210 = vmatpush2.bf16.msra.mxu0 0
        %2211 = vmatprep.mubr.bf16.mxu0 0
        %2212 = vmatmul.mubr.bf16.gmra.mxu0 %v1997
        %v2213 = vpop.f32.mrf.mxu0
        %v2214 = vadd.f32 %v2112, %v2213
        %v2215 = vpop.f32.mrf.mxu0
        %v2216 = vpop.f32.mrf.mxu0
        %v2217 = vpop.f32.mrf.mxu0
        %2218 = vdwg.mxu0
        %s2219 = scalar_lea.vmem %s10, 32
        %v2220 = vld [vmem:[%s2219] sm:$0xf]
        %v2221 = vld [vmem:[%s2219 + $0x4] sm:$0xf]
        %v2222 = vld [vmem:[%s2219 + $0x8] sm:$0xf]
        %v2223 = vld [vmem:[%s2219 + $0xc] sm:$0xf]
        %v2224 = vld [vmem:[%s2219 + $0x10] sm:$0xf]
        %v2225 = vld [vmem:[%s2219 + $0x14] sm:$0xf]
        %v2226 = vld [vmem:[%s2219 + $0x18] sm:$0xf]
        %v2227 = vld [vmem:[%s2219 + $0x1c] sm:$0xf]
        %s2228 = scalar_lea.vmem %s11, 2
        %v2229 = vld [vmem:[%s2228] sm:$0x1]
        %v2230 = vld [vmem:[%s2228 + $0x1] sm:$0x1]
        %v2233 = vlaneseq
        %v2234 = vshrl.u32 %v2233, 7
        %v2235 = vsub.s32 0, %v2234
        %v2236 = vrot.slane %v2229, %v2235
        %v2237 = vlaneseq
        %v2238 = vshrl.u32 %v2237, 7
        %v2239 = vsub.s32 0, %v2238
        %v2240 = vrot.slane %v2230, %v2239
        %v2247 = vunpack.c.l.b16 %v2220
        %v2248 = vunpack.c.l.b16 %v2221
        %v2249 = vunpack.c.l.b16 %v2222
        %v2250 = vunpack.c.l.b16 %v2223
        %v2251 = vpack.c.b16 %v2248, %v2247
        %v2252 = vpack.c.b16 %v2250, %v2249
        %2255 = vmatprep.subr.bf16.mxu0 0
        %2256 = vmatpush1.bf16.msra.mxu0 0
        %2257 = vmatprep.subr.bf16.mxu0 0
        %2258 = vmatpush1.bf16.msra.mxu0 0
        %2259 = vmatprep.subr.bf16.mxu0 0
        %2260 = vmatpush1.bf16.msra.mxu0 0
        %2261 = vmatprep.subr.bf16.mxu0 0
        %2262 = vmatpush1.bf16.msra.mxu0 0
        %2263 = vmatprep.subr.bf16.mxu0 0
        %2264 = vmatpush1.bf16.msra.mxu0 0
        %2265 = vmatprep.subr.bf16.mxu0 0
        %2266 = vmatpush1.bf16.msra.mxu0 0
        %2267 = vmatprep.subr.bf16.mxu0 0
        %2268 = vmatpush1.bf16.msra.mxu0 %v2252
        %2269 = vmatprep.subr.bf16.mxu0 0
        %2270 = vmatpush1.bf16.msra.mxu0 %v2251
        %2271 = vmatprep.subr.bf16.mxu0 0
        %2272 = vmatpush2.bf16.msra.mxu0 0
        %2273 = vmatprep.subr.bf16.mxu0 0
        %2274 = vmatpush2.bf16.msra.mxu0 0
        %2275 = vmatprep.subr.bf16.mxu0 0
        %2276 = vmatpush2.bf16.msra.mxu0 0
        %2277 = vmatprep.subr.bf16.mxu0 0
        %2278 = vmatpush2.bf16.msra.mxu0 0
        %2279 = vmatprep.subr.bf16.mxu0 0
        %2280 = vmatpush2.bf16.msra.mxu0 0
        %2281 = vmatprep.subr.bf16.mxu0 0
        %2282 = vmatpush2.bf16.msra.mxu0 0
        %2283 = vmatprep.subr.bf16.mxu0 0
        %2284 = vmatpush2.bf16.msra.mxu0 0
        %2285 = vmatprep.subr.bf16.mxu0 0
        %2286 = vmatpush2.bf16.msra.mxu0 0
        %2287 = vmatprep.mubr.bf16.mxu0 0
        %2288 = vmatmul.mubr.bf16.gmra.mxu0 %v1997
        %v2289 = vpop.f32.mrf.mxu0
        %v2290 = vadd.f32 %v2236, %v2289
        %v2291 = vpop.f32.mrf.mxu0
        %v2292 = vpop.f32.mrf.mxu0
        %v2293 = vpop.f32.mrf.mxu0
        %2294 = vdwg.mxu0
        %v2299 = vunpack.c.l.b16 %v2224
        %v2300 = vunpack.c.l.b16 %v2225
        %v2301 = vunpack.c.l.b16 %v2226
        %v2302 = vunpack.c.l.b16 %v2227
        %v2303 = vpack.c.b16 %v2300, %v2299
        %v2304 = vpack.c.b16 %v2302, %v2301
        %2307 = vmatprep.subr.bf16.mxu0 0
        %2308 = vmatpush1.bf16.msra.mxu0 0
        %2309 = vmatprep.subr.bf16.mxu0 0
        %2310 = vmatpush1.bf16.msra.mxu0 0
        %2311 = vmatprep.subr.bf16.mxu0 0
        %2312 = vmatpush1.bf16.msra.mxu0 0
        %2313 = vmatprep.subr.bf16.mxu0 0
        %2314 = vmatpush1.bf16.msra.mxu0 0
        %2315 = vmatprep.subr.bf16.mxu0 0
        %2316 = vmatpush1.bf16.msra.mxu0 0
        %2317 = vmatprep.subr.bf16.mxu0 0
        %2318 = vmatpush1.bf16.msra.mxu0 0
        %2319 = vmatprep.subr.bf16.mxu0 0
        %2320 = vmatpush1.bf16.msra.mxu0 %v2304
        %2321 = vmatprep.subr.bf16.mxu0 0
        %2322 = vmatpush1.bf16.msra.mxu0 %v2303
        %2323 = vmatprep.subr.bf16.mxu0 0
        %2324 = vmatpush2.bf16.msra.mxu0 0
        %2325 = vmatprep.subr.bf16.mxu0 0
        %2326 = vmatpush2.bf16.msra.mxu0 0
        %2327 = vmatprep.subr.bf16.mxu0 0
        %2328 = vmatpush2.bf16.msra.mxu0 0
        %2329 = vmatprep.subr.bf16.mxu0 0
        %2330 = vmatpush2.bf16.msra.mxu0 0
        %2331 = vmatprep.subr.bf16.mxu0 0
        %2332 = vmatpush2.bf16.msra.mxu0 0
        %2333 = vmatprep.subr.bf16.mxu0 0
        %2334 = vmatpush2.bf16.msra.mxu0 0
        %2335 = vmatprep.subr.bf16.mxu0 0
        %2336 = vmatpush2.bf16.msra.mxu0 0
        %2337 = vmatprep.subr.bf16.mxu0 0
        %2338 = vmatpush2.bf16.msra.mxu0 0
        %2339 = vmatprep.mubr.bf16.mxu0 0
        %2340 = vmatmul.mubr.bf16.gmra.mxu0 %v1997
        %v2341 = vpop.f32.mrf.mxu0
        %v2342 = vadd.f32 %v2240, %v2341
        %v2343 = vpop.f32.mrf.mxu0
        %v2344 = vpop.f32.mrf.mxu0
        %v2345 = vpop.f32.mrf.mxu0
        %2346 = vdwg.mxu0
        %v2348 = vsel %vm1418, %v2034, 0
        %v2351 = vsel %vm1418, %v2162, 0
        %2353 = vmatprep.subr.mxu0 0.0
        %2354 = vmatpush1.xpose.msra.mxu0 0.0
        %2355 = vmatprep.subr.mxu0 0.0
        %2356 = vmatpush1.xpose.msra.mxu0 0.0
        %2357 = vmatprep.subr.mxu0 0.0
        %2358 = vmatpush1.xpose.msra.mxu0 0.0
        %2359 = vmatprep.subr.mxu0 0.0
        %2360 = vmatpush1.xpose.msra.mxu0 0.0
        %2361 = vmatprep.subr.mxu0 0.0
        %2362 = vmatpush1.xpose.msra.mxu0 0.0
        %2363 = vmatprep.subr.mxu0 0.0
        %2364 = vmatpush1.xpose.msra.mxu0 0.0
        %2365 = vmatprep.subr.mxu0 0.0
        %2366 = vmatpush1.xpose.msra.mxu0 0.0
        %2367 = vmatprep.subr.mxu0 0.0
        %2368 = vmatpush1.xpose.msra.mxu0 0.0
        %2369 = vmatprep.subr.mxu0 0.0
        %2370 = vmatpush1.xpose.msra.mxu0 0.0
        %2371 = vmatprep.subr.mxu0 0.0
        %2372 = vmatpush1.xpose.msra.mxu0 0.0
        %2373 = vmatprep.subr.mxu0 0.0
        %2374 = vmatpush1.xpose.msra.mxu0 0.0
        %2375 = vmatprep.subr.mxu0 0.0
        %2376 = vmatpush1.xpose.msra.mxu0 0.0
        %2377 = vmatprep.subr.mxu0 0.0
        %2378 = vmatpush1.xpose.msra.mxu0 0.0
        %2379 = vmatprep.subr.mxu0 0.0
        %2380 = vmatpush1.xpose.msra.mxu0 0.0
        %2381 = vmatprep.subr.mxu0 0.0
        %2382 = vmatpush1.xpose.msra.mxu0 0.0
        %2383 = vmatprep.subr.mxu0 0.0
        %2384 = vmatpush1.xpose.msra.mxu0 %v2351
        %2385 = vmatprep.subr.mxu0 0.0
        %2386 = vmatpush2.xpose.msra.mxu0 0.0
        %2387 = vmatprep.subr.mxu0 0.0
        %2388 = vmatpush2.xpose.msra.mxu0 0.0
        %2389 = vmatprep.subr.mxu0 0.0
        %2390 = vmatpush2.xpose.msra.mxu0 0.0
        %2391 = vmatprep.subr.mxu0 0.0
        %2392 = vmatpush2.xpose.msra.mxu0 0.0
        %2393 = vmatprep.subr.mxu0 0.0
        %2394 = vmatpush2.xpose.msra.mxu0 0.0
        %2395 = vmatprep.subr.mxu0 0.0
        %2396 = vmatpush2.xpose.msra.mxu0 0.0
        %2397 = vmatprep.subr.mxu0 0.0
        %2398 = vmatpush2.xpose.msra.mxu0 0.0
        %2399 = vmatprep.subr.mxu0 0.0
        %2400 = vmatpush2.xpose.msra.mxu0 0.0
        %2401 = vmatprep.subr.mxu0 0.0
        %2402 = vmatpush2.xpose.msra.mxu0 0.0
        %2403 = vmatprep.subr.mxu0 0.0
        %2404 = vmatpush2.xpose.msra.mxu0 0.0
        %2405 = vmatprep.subr.mxu0 0.0
        %2406 = vmatpush2.xpose.msra.mxu0 0.0
        %2407 = vmatprep.subr.mxu0 0.0
        %2408 = vmatpush2.xpose.msra.mxu0 0.0
        %2409 = vmatprep.subr.mxu0 0.0
        %2410 = vmatpush2.xpose.msra.mxu0 0.0
        %2411 = vmatprep.subr.mxu0 0.0
        %2412 = vmatpush2.xpose.msra.mxu0 0.0
        %2413 = vmatprep.subr.mxu0 0.0
        %2414 = vmatpush2.xpose.msra.mxu0 0.0
        %2415 = vmatprep.subr.mxu0 0.0
        %2416 = vmatpush2.xpose.msra.mxu0 0.0
        %2417 = vmatprep.mubr.f32.mxu0 0.0
        %2418 = vmatmul.mubr.f32.gmra.mxu0 %v2348
        %v2419 = vpop.f32.mrf.mxu0
        %v2420 = vadd.f32 0.0, %v2419
        %v2421 = vpop.f32.mrf.mxu0
        %2422 = vdwg.mxu0
        %v2424 = vsel %vm1418, %v2086, 0
        %v2427 = vsel %vm1418, %v2214, 0
        %2429 = vmatprep.subr.mxu0 0.0
        %2430 = vmatpush1.xpose.msra.mxu0 0.0
        %2431 = vmatprep.subr.mxu0 0.0
        %2432 = vmatpush1.xpose.msra.mxu0 0.0
        %2433 = vmatprep.subr.mxu0 0.0
        %2434 = vmatpush1.xpose.msra.mxu0 0.0
        %2435 = vmatprep.subr.mxu0 0.0
        %2436 = vmatpush1.xpose.msra.mxu0 0.0
        %2437 = vmatprep.subr.mxu0 0.0
        %2438 = vmatpush1.xpose.msra.mxu0 0.0
        %2439 = vmatprep.subr.mxu0 0.0
        %2440 = vmatpush1.xpose.msra.mxu0 0.0
        %2441 = vmatprep.subr.mxu0 0.0
        %2442 = vmatpush1.xpose.msra.mxu0 0.0
        %2443 = vmatprep.subr.mxu0 0.0
        %2444 = vmatpush1.xpose.msra.mxu0 0.0
        %2445 = vmatprep.subr.mxu0 0.0
        %2446 = vmatpush1.xpose.msra.mxu0 0.0
        %2447 = vmatprep.subr.mxu0 0.0
        %2448 = vmatpush1.xpose.msra.mxu0 0.0
        %2449 = vmatprep.subr.mxu0 0.0
        %2450 = vmatpush1.xpose.msra.mxu0 0.0
        %2451 = vmatprep.subr.mxu0 0.0
        %2452 = vmatpush1.xpose.msra.mxu0 0.0
        %2453 = vmatprep.subr.mxu0 0.0
        %2454 = vmatpush1.xpose.msra.mxu0 0.0
        %2455 = vmatprep.subr.mxu0 0.0
        %2456 = vmatpush1.xpose.msra.mxu0 0.0
        %2457 = vmatprep.subr.mxu0 0.0
        %2458 = vmatpush1.xpose.msra.mxu0 0.0
        %2459 = vmatprep.subr.mxu0 0.0
        %2460 = vmatpush1.xpose.msra.mxu0 %v2427
        %2461 = vmatprep.subr.mxu0 0.0
        %2462 = vmatpush2.xpose.msra.mxu0 0.0
        %2463 = vmatprep.subr.mxu0 0.0
        %2464 = vmatpush2.xpose.msra.mxu0 0.0
        %2465 = vmatprep.subr.mxu0 0.0
        %2466 = vmatpush2.xpose.msra.mxu0 0.0
        %2467 = vmatprep.subr.mxu0 0.0
        %2468 = vmatpush2.xpose.msra.mxu0 0.0
        %2469 = vmatprep.subr.mxu0 0.0
        %2470 = vmatpush2.xpose.msra.mxu0 0.0
        %2471 = vmatprep.subr.mxu0 0.0
        %2472 = vmatpush2.xpose.msra.mxu0 0.0
        %2473 = vmatprep.subr.mxu0 0.0
        %2474 = vmatpush2.xpose.msra.mxu0 0.0
        %2475 = vmatprep.subr.mxu0 0.0
        %2476 = vmatpush2.xpose.msra.mxu0 0.0
        %2477 = vmatprep.subr.mxu0 0.0
        %2478 = vmatpush2.xpose.msra.mxu0 0.0
        %2479 = vmatprep.subr.mxu0 0.0
        %2480 = vmatpush2.xpose.msra.mxu0 0.0
        %2481 = vmatprep.subr.mxu0 0.0
        %2482 = vmatpush2.xpose.msra.mxu0 0.0
        %2483 = vmatprep.subr.mxu0 0.0
        %2484 = vmatpush2.xpose.msra.mxu0 0.0
        %2485 = vmatprep.subr.mxu0 0.0
        %2486 = vmatpush2.xpose.msra.mxu0 0.0
        %2487 = vmatprep.subr.mxu0 0.0
        %2488 = vmatpush2.xpose.msra.mxu0 0.0
        %2489 = vmatprep.subr.mxu0 0.0
        %2490 = vmatpush2.xpose.msra.mxu0 0.0
        %2491 = vmatprep.subr.mxu0 0.0
        %2492 = vmatpush2.xpose.msra.mxu0 0.0
        %2493 = vmatprep.mubr.f32.mxu0 0.0
        %2494 = vmatmul.mubr.f32.gmra.mxu0 %v2424
        %v2495 = vpop.f32.mrf.mxu0
        %v2496 = vadd.f32 0.0, %v2495
        %v2497 = vpop.f32.mrf.mxu0
        %2498 = vdwg.mxu0
        %v2499 = vmul.f32 %v2420, 0.25
        %v2500 = vmul.f32 %v2496, 0.25
        %v2501 = vsel %vm1573, %v2499, -inf
        %2502 = vmax.xlane.f32.xlu0 %v2501
        %v2503 = vpop.xlane.xlu0 %2502
        %v2504 = vsel %vm1573, %v2500, -inf
        %2505 = vmax.xlane.f32.xlu0 %v2504
        %v2506 = vpop.xlane.xlu0 %2505
        %v2507 = vsub.f32 %v2499, %v2503
        %v2508 = vsub.f32 %v2500, %v2506
        %v2509 = vmul.f32 %v2507, 1.442695
        %v2510 = vpow.pop %v2509
        %v2511 = vmul.f32 %v2508, 1.442695
        %v2512 = vpow.pop %v2511
        %v2513 = vsel %vm1573, %v2510, 0.0
        %2514 = vadd.xlane.f32.xlu0 %v2513
        %v2515 = vpop.xlane.xlu0 %2514
        %v2516 = vsel %vm1573, %v2512, 0.0
        %2517 = vadd.xlane.f32.xlu0 %v2516
        %v2518 = vpop.xlane.xlu0 %2517
        %v2519 = vrcp.pop %v2515
        %v2520 = vrcp.pop %v2518
        %v2521 = vmul.f32 %v2510, %v2519
        %v2522 = vmul.f32 %v2512, %v2520
        %v2523 = vpack.c.bf16 %v2521, %v2521
        %v2524 = vpack.c.bf16 %v2522, %v2522
        %v2525 = vpack.c.bf16 %v2290, %v2290
        %v2526 = vpack.c.bf16 %v2342, %v2342
        %v2528 = vsel %vm1573, %v2523, 0
        %v2531 = vsel %vm1603, %v2525, 0
        %2533 = vmatprep.subr.bf16.mxu0 0
        %2534 = vmatpush1.bf16.msra.mxu0 0
        %2535 = vmatprep.subr.bf16.mxu0 0
        %2536 = vmatpush1.bf16.msra.mxu0 0
        %2537 = vmatprep.subr.bf16.mxu0 0
        %2538 = vmatpush1.bf16.msra.mxu0 0
        %2539 = vmatprep.subr.bf16.mxu0 0
        %2540 = vmatpush1.bf16.msra.mxu0 0
        %2541 = vmatprep.subr.bf16.mxu0 0
        %2542 = vmatpush1.bf16.msra.mxu0 0
        %2543 = vmatprep.subr.bf16.mxu0 0
        %2544 = vmatpush1.bf16.msra.mxu0 0
        %2545 = vmatprep.subr.bf16.mxu0 0
        %2546 = vmatpush1.bf16.msra.mxu0 0
        %2547 = vmatprep.subr.bf16.mxu0 0
        %2548 = vmatpush1.bf16.msra.mxu0 %v2531
        %2549 = vmatprep.subr.bf16.mxu0 0
        %2550 = vmatpush2.bf16.msra.mxu0 0
        %2551 = vmatprep.subr.bf16.mxu0 0
        %2552 = vmatpush2.bf16.msra.mxu0 0
        %2553 = vmatprep.subr.bf16.mxu0 0
        %2554 = vmatpush2.bf16.msra.mxu0 0
        %2555 = vmatprep.subr.bf16.mxu0 0
        %2556 = vmatpush2.bf16.msra.mxu0 0
        %2557 = vmatprep.subr.bf16.mxu0 0
        %2558 = vmatpush2.bf16.msra.mxu0 0
        %2559 = vmatprep.subr.bf16.mxu0 0
        %2560 = vmatpush2.bf16.msra.mxu0 0
        %2561 = vmatprep.subr.bf16.mxu0 0
        %2562 = vmatpush2.bf16.msra.mxu0 0
        %2563 = vmatprep.subr.bf16.mxu0 0
        %2564 = vmatpush2.bf16.msra.mxu0 0
        %2565 = vmatprep.mubr.bf16.mxu0 0
        %2566 = vmatmul.mubr.bf16.gmra.mxu0 %v2528
        %v2567 = vpop.f32.mrf.mxu0
        %v2568 = vadd.f32 0.0, %v2567
        %v2569 = vpop.f32.mrf.mxu0
        %v2570 = vpop.f32.mrf.mxu0
        %v2571 = vpop.f32.mrf.mxu0
        %2572 = vdwg.mxu0
        %v2574 = vsel %vm1573, %v2524, 0
        %v2577 = vsel %vm1603, %v2526, 0
        %2579 = vmatprep.subr.bf16.mxu0 0
        %2580 = vmatpush1.bf16.msra.mxu0 0
        %2581 = vmatprep.subr.bf16.mxu0 0
        %2582 = vmatpush1.bf16.msra.mxu0 0
        %2583 = vmatprep.subr.bf16.mxu0 0
        %2584 = vmatpush1.bf16.msra.mxu0 0
        %2585 = vmatprep.subr.bf16.mxu0 0
        %2586 = vmatpush1.bf16.msra.mxu0 0
        %2587 = vmatprep.subr.bf16.mxu0 0
        %2588 = vmatpush1.bf16.msra.mxu0 0
        %2589 = vmatprep.subr.bf16.mxu0 0
        %2590 = vmatpush1.bf16.msra.mxu0 0
        %2591 = vmatprep.subr.bf16.mxu0 0
        %2592 = vmatpush1.bf16.msra.mxu0 0
        %2593 = vmatprep.subr.bf16.mxu0 0
        %2594 = vmatpush1.bf16.msra.mxu0 %v2577
        %2595 = vmatprep.subr.bf16.mxu0 0
        %2596 = vmatpush2.bf16.msra.mxu0 0
        %2597 = vmatprep.subr.bf16.mxu0 0
        %2598 = vmatpush2.bf16.msra.mxu0 0
        %2599 = vmatprep.subr.bf16.mxu0 0
        %2600 = vmatpush2.bf16.msra.mxu0 0
        %2601 = vmatprep.subr.bf16.mxu0 0
        %2602 = vmatpush2.bf16.msra.mxu0 0
        %2603 = vmatprep.subr.bf16.mxu0 0
        %2604 = vmatpush2.bf16.msra.mxu0 0
        %2605 = vmatprep.subr.bf16.mxu0 0
        %2606 = vmatpush2.bf16.msra.mxu0 0
        %2607 = vmatprep.subr.bf16.mxu0 0
        %2608 = vmatpush2.bf16.msra.mxu0 0
        %2609 = vmatprep.subr.bf16.mxu0 0
        %2610 = vmatpush2.bf16.msra.mxu0 0
        %2611 = vmatprep.mubr.bf16.mxu0 0
        %2612 = vmatmul.mubr.bf16.gmra.mxu0 %v2574
        %v2613 = vpop.f32.mrf.mxu0
        %v2614 = vadd.f32 0.0, %v2613
        %v2615 = vpop.f32.mrf.mxu0
        %v2616 = vpop.f32.mrf.mxu0
        %v2617 = vpop.f32.mrf.mxu0
        %2618 = vdwg.mxu0
        %v2619 = vsel %vm1005, %v2568, 0.0
        %v2620 = vsel %vm1005, %v2614, 0.0
        %v2621 = vadd.f32 %v2619, %v2620
        %v2622 = vadd.f32 %v1925, %v2621
        %s2623 = scalar_lea.vmem %s12, 1
        %v2624 = vld [vmem:[%s2623] sm:$0x1]
        %v2626 = vlaneseq
        %v2627 = vshrl.u32 %v2626, 7
        %v2628 = vsub.s32 0, %v2627
        %v2629 = vrot.slane %v2624, %v2628
        %v2631 = vadd.f32 %v2622, %v2629
        %s2632 = scalar_lea.vmem %s13, 1
        %v2633 = vld [vmem:[%s2632] sm:$0x1]
        %s2634 = scalar_lea.vmem %s14, 1
        %v2635 = vld [vmem:[%s2634] sm:$0x1]
        %v2636 = vsel %vm1005, %v2631, 0.0
        %2637 = vadd.xlane.f32.xlu0 %v2636
        %v2638 = vpop.xlane.xlu0 %2637
        %v2639 = vmul.f32 %v2638, %v1009
        %v2640 = vmul.f32 %v2631, %v2631
        %v2641 = vsel %vm1005, %v2640, 0.0
        %2642 = vadd.xlane.f32.xlu0 %v2641
        %v2643 = vpop.xlane.xlu0 %2642
        %v2644 = vmul.f32 %v2643, %v1009
        %v2645 = vmul.f32 %v2639, %v2639
        %v2646 = vsub.f32 %v2644, %v2645
        %v2647 = vsub.f32 %v2631, %v2639
        %v2648 = vadd.f32 %v2646, 1e-06
        %v2649 = vrsqrt.pop %v2648
        %v2650 = vmul.f32 %v2647, %v2649
        %v2652 = vlaneseq
        %v2653 = vshrl.u32 %v2652, 7
        %v2654 = vsub.s32 0, %v2653
        %v2655 = vrot.slane %v2633, %v2654
        %v2657 = vmul.f32 %v2650, %v2655
        %v2659 = vlaneseq
        %v2660 = vshrl.u32 %v2659, 7
        %v2661 = vsub.s32 0, %v2660
        %v2662 = vrot.slane %v2635, %v2661
        %v2664 = vadd.f32 %v2657, %v2662
        %v2665 = vpack.c.bf16 %v2664, %v2664
        %s2666 = scalar_lea.vmem %s15, 16
        %v2667 = vld [vmem:[%s2666] sm:$0xf]
        %v2668 = vld [vmem:[%s2666 + $0x4] sm:$0xf]
        %v2669 = vld [vmem:[%s2666 + $0x8] sm:$0xf]
        %v2670 = vld [vmem:[%s2666 + $0xc] sm:$0xf]
        %s2671 = scalar_lea.vmem %s16, 1
        %v2672 = vld [vmem:[%s2671] sm:$0x1]
        %v2674 = vlaneseq
        %v2675 = vshrl.u32 %v2674, 7
        %v2676 = vsub.s32 0, %v2675
        %v2677 = vrot.slane %v2672, %v2676
        %v2683 = vunpack.c.l.b16 %v2667
        %v2684 = vunpack.c.l.b16 %v2668
        %v2685 = vunpack.c.l.b16 %v2669
        %v2686 = vunpack.c.l.b16 %v2670
        %v2687 = vpack.c.b16 %v2684, %v2683
        %v2688 = vpack.c.b16 %v2686, %v2685
        %v2692 = vsel %vm1005, %v2665, 0
        %2694 = vmatprep.subr.bf16.mxu0 0
        %2695 = vmatpush1.bf16.msra.mxu0 0
        %2696 = vmatprep.subr.bf16.mxu0 0
        %2697 = vmatpush1.bf16.msra.mxu0 0
        %2698 = vmatprep.subr.bf16.mxu0 0
        %2699 = vmatpush1.bf16.msra.mxu0 0
        %2700 = vmatprep.subr.bf16.mxu0 0
        %2701 = vmatpush1.bf16.msra.mxu0 0
        %2702 = vmatprep.subr.bf16.mxu0 0
        %2703 = vmatpush1.bf16.msra.mxu0 0
        %2704 = vmatprep.subr.bf16.mxu0 0
        %2705 = vmatpush1.bf16.msra.mxu0 0
        %2706 = vmatprep.subr.bf16.mxu0 0
        %2707 = vmatpush1.bf16.msra.mxu0 %v2688
        %2708 = vmatprep.subr.bf16.mxu0 0
        %2709 = vmatpush1.bf16.msra.mxu0 %v2687
        %2710 = vmatprep.subr.bf16.mxu0 0
        %2711 = vmatpush2.bf16.msra.mxu0 0
        %2712 = vmatprep.subr.bf16.mxu0 0
        %2713 = vmatpush2.bf16.msra.mxu0 0
        %2714 = vmatprep.subr.bf16.mxu0 0
        %2715 = vmatpush2.bf16.msra.mxu0 0
        %2716 = vmatprep.subr.bf16.mxu0 0
        %2717 = vmatpush2.bf16.msra.mxu0 0
        %2718 = vmatprep.subr.bf16.mxu0 0
        %2719 = vmatpush2.bf16.msra.mxu0 0
        %2720 = vmatprep.subr.bf16.mxu0 0
        %2721 = vmatpush2.bf16.msra.mxu0 0
        %2722 = vmatprep.subr.bf16.mxu0 0
        %2723 = vmatpush2.bf16.msra.mxu0 0
        %2724 = vmatprep.subr.bf16.mxu0 0
        %2725 = vmatpush2.bf16.msra.mxu0 0
        %2726 = vmatprep.mubr.bf16.mxu0 0
        %2727 = vmatmul.mubr.bf16.gmra.mxu0 %v2692
        %v2728 = vpop.f32.mrf.mxu0
        %v2729 = vadd.f32 %v2677, %v2728
        %v2730 = vpop.f32.mrf.mxu0
        %v2731 = vpop.f32.mrf.mxu0
        %v2732 = vpop.f32.mrf.mxu0
        %2733 = vdwg.mxu0
        %v2734 = vmul.f32 %v2729, %v2729
        %v2735 = vmul.f32 %v2729, %v2734
        %v2736 = vmul.f32 %v2735, 0.044715
        %v2737 = vadd.f32 %v2729, %v2736
        %v2738 = vmul.f32 %v2737, 0.7978846
        %v2739 = vtanh.pop %v2738
        %v2740 = vadd.f32 %v2739, 1.0
        %v2741 = vmul.f32 %v2740, 0.5
        %v2742 = vmul.f32 %v2729, %v2741
        %v2743 = vpack.c.bf16 %v2742, %v2742
        %s2744 = scalar_lea.vmem %s17, 64
        %v2745 = vld [vmem:[%s2744] sm:$0xf]
        %v2746 = vld [vmem:[%s2744 + $0x4] sm:$0xf]
        %v2747 = vld [vmem:[%s2744 + $0x8] sm:$0xf]
        %v2748 = vld [vmem:[%s2744 + $0xc] sm:$0xf]
        %v2749 = vld [vmem:[%s2744 + $0x10] sm:$0xf]
        %v2750 = vld [vmem:[%s2744 + $0x14] sm:$0xf]
        %v2751 = vld [vmem:[%s2744 + $0x18] sm:$0xf]
        %v2752 = vld [vmem:[%s2744 + $0x1c] sm:$0xf]
        %v2753 = vld [vmem:[%s2744 + $0x20] sm:$0xf]
        %v2754 = vld [vmem:[%s2744 + $0x24] sm:$0xf]
        %v2755 = vld [vmem:[%s2744 + $0x28] sm:$0xf]
        %v2756 = vld [vmem:[%s2744 + $0x2c] sm:$0xf]
        %v2757 = vld [vmem:[%s2744 + $0x30] sm:$0xf]
        %v2758 = vld [vmem:[%s2744 + $0x34] sm:$0xf]
        %v2759 = vld [vmem:[%s2744 + $0x38] sm:$0xf]
        %v2760 = vld [vmem:[%s2744 + $0x3c] sm:$0xf]
        %v2777 = vunpack.c.l.b16 %v2745
        %v2778 = vunpack.c.l.b16 %v2746
        %v2779 = vunpack.c.l.b16 %v2747
        %v2780 = vunpack.c.l.b16 %v2748
        %v2781 = vunpack.c.l.b16 %v2749
        %v2782 = vunpack.c.l.b16 %v2750
        %v2783 = vunpack.c.l.b16 %v2751
        %v2784 = vunpack.c.l.b16 %v2752
        %v2785 = vunpack.c.l.b16 %v2753
        %v2786 = vunpack.c.l.b16 %v2754
        %v2787 = vunpack.c.l.b16 %v2755
        %v2788 = vunpack.c.l.b16 %v2756
        %v2789 = vunpack.c.l.b16 %v2757
        %v2790 = vunpack.c.l.b16 %v2758
        %v2791 = vunpack.c.l.b16 %v2759
        %v2792 = vunpack.c.l.b16 %v2760
        %v2793 = vpack.c.b16 %v2778, %v2777
        %v2794 = vpack.c.b16 %v2780, %v2779
        %v2795 = vpack.c.b16 %v2782, %v2781
        %v2796 = vpack.c.b16 %v2784, %v2783
        %v2797 = vpack.c.b16 %v2786, %v2785
        %v2798 = vpack.c.b16 %v2788, %v2787
        %v2799 = vpack.c.b16 %v2790, %v2789
        %v2800 = vpack.c.b16 %v2792, %v2791
        %2809 = vmatprep.subr.bf16.mxu0 0
        %2810 = vmatpush1.bf16.msra.mxu0 %v2800
        %2811 = vmatprep.subr.bf16.mxu0 0
        %2812 = vmatpush1.bf16.msra.mxu0 %v2799
        %2813 = vmatprep.subr.bf16.mxu0 0
        %2814 = vmatpush1.bf16.msra.mxu0 %v2798
        %2815 = vmatprep.subr.bf16.mxu0 0
        %2816 = vmatpush1.bf16.msra.mxu0 %v2797
        %2817 = vmatprep.subr.bf16.mxu0 0
        %2818 = vmatpush1.bf16.msra.mxu0 %v2796
        %2819 = vmatprep.subr.bf16.mxu0 0
        %2820 = vmatpush1.bf16.msra.mxu0 %v2795
        %2821 = vmatprep.subr.bf16.mxu0 0
        %2822 = vmatpush1.bf16.msra.mxu0 %v2794
        %2823 = vmatprep.subr.bf16.mxu0 0
        %2824 = vmatpush1.bf16.msra.mxu0 %v2793
        %2825 = vmatprep.subr.bf16.mxu0 0
        %2826 = vmatpush2.bf16.msra.mxu0 0
        %2827 = vmatprep.subr.bf16.mxu0 0
        %2828 = vmatpush2.bf16.msra.mxu0 0
        %2829 = vmatprep.subr.bf16.mxu0 0
        %2830 = vmatpush2.bf16.msra.mxu0 0
        %2831 = vmatprep.subr.bf16.mxu0 0
        %2832 = vmatpush2.bf16.msra.mxu0 0
        %2833 = vmatprep.subr.bf16.mxu0 0
        %2834 = vmatpush2.bf16.msra.mxu0 0
        %2835 = vmatprep.subr.bf16.mxu0 0
        %2836 = vmatpush2.bf16.msra.mxu0 0
        %2837 = vmatprep.subr.bf16.mxu0 0
        %2838 = vmatpush2.bf16.msra.mxu0 0
        %2839 = vmatprep.subr.bf16.mxu0 0
        %2840 = vmatpush2.bf16.msra.mxu0 0
        %2841 = vmatprep.mubr.bf16.mxu0 0
        %2842 = vmatmul.mubr.bf16.gmra.mxu0 %v2743
        %v2843 = vpop.f32.mrf.mxu0
        %v2844 = vadd.f32 0.0, %v2843
        %v2845 = vpop.f32.mrf.mxu0
        %v2846 = vpop.f32.mrf.mxu0
        %v2847 = vpop.f32.mrf.mxu0
        %2848 = vdwg.mxu0
        %v2849 = vadd.f32 %v2631, %v2844
        %s2850 = scalar_lea.vmem %s18, 1
        %v2851 = vld [vmem:[%s2850] sm:$0x1]
        %v2853 = vlaneseq
        %v2854 = vshrl.u32 %v2853, 7
        %v2855 = vsub.s32 0, %v2854
        %v2856 = vrot.slane %v2851, %v2855
        %v2858 = vadd.f32 %v2849, %v2856
        %v2859 = vsel %vm1005, %v2858, 0.0
        %v2860 = vrot.slane %v2859, 4
        %v2861 = vadd.f32 %v2859, %v2860
        %v2862 = vrot.slane %v2861, 2
        %v2863 = vadd.f32 %v2861, %v2862
        %v2864 = vrot.slane %v2863, 1
        %v2865 = vadd.f32 %v2863, %v2864
        %v2866 = vrcp.pop 8.0
        %v2867 = vmul.f32 %v2865, %v2866
        %v2868 = vld [vmem:[%s19] sm:$0x1]
        %v2869 = vld [vmem:[%s20] sm:$0x1]
        %v2870 = vsel %vm1005, %v2867, 0.0
        %2871 = vadd.xlane.f32.xlu0 %v2870
        %v2872 = vpop.xlane.xlu0 %2871
        %v2873 = vmul.f32 %v2872, %v1009
        %v2874 = vmul.f32 %v2867, %v2867
        %v2875 = vsel %vm1005, %v2874, 0.0
        %2876 = vadd.xlane.f32.xlu0 %v2875
        %v2877 = vpop.xlane.xlu0 %2876
        %v2878 = vmul.f32 %v2877, %v1009
        %v2879 = vmul.f32 %v2873, %v2873
        %v2880 = vsub.f32 %v2878, %v2879
        %v2881 = vsub.f32 %v2867, %v2873
        %v2882 = vadd.f32 %v2880, 1e-06
        %v2883 = vrsqrt.pop %v2882
        %v2884 = vmul.f32 %v2881, %v2883
        %v2885 = vmul.f32 %v2884, %v2868
        %v2886 = vadd.f32 %v2885, %v2869
        %v2887 = vpack.c.bf16 %v2886, %v2886
        %v2888 = vld [vmem:[%s21] sm:$0xf]
        %v2889 = vld [vmem:[%s21 + $0x4] sm:$0xf]
        %v2890 = vld [vmem:[%s21 + $0x8] sm:$0xf]
        %v2891 = vld [vmem:[%s21 + $0xc] sm:$0xf]
        %v2892 = vld [vmem:[%s22] sm:$0x1]
        %v2897 = vunpack.c.l.b16 %v2888
        %v2898 = vunpack.c.l.b16 %v2889
        %v2899 = vunpack.c.l.b16 %v2890
        %v2900 = vunpack.c.l.b16 %v2891
        %v2901 = vpack.c.b16 %v2898, %v2897
        %v2902 = vpack.c.b16 %v2900, %v2899
        %v2906 = vsel %vm1005, %v2887, 0
        %2908 = vmatprep.subr.bf16.mxu0 0
        %2909 = vmatpush1.bf16.msra.mxu0 0
        %2910 = vmatprep.subr.bf16.mxu0 0
        %2911 = vmatpush1.bf16.msra.mxu0 0
        %2912 = vmatprep.subr.bf16.mxu0 0
        %2913 = vmatpush1.bf16.msra.mxu0 0
        %2914 = vmatprep.subr.bf16.mxu0 0
        %2915 = vmatpush1.bf16.msra.mxu0 0
        %2916 = vmatprep.subr.bf16.mxu0 0
        %2917 = vmatpush1.bf16.msra.mxu0 0
        %2918 = vmatprep.subr.bf16.mxu0 0
        %2919 = vmatpush1.bf16.msra.mxu0 0
        %2920 = vmatprep.subr.bf16.mxu0 0
        %2921 = vmatpush1.bf16.msra.mxu0 %v2902
        %2922 = vmatprep.subr.bf16.mxu0 0
        %2923 = vmatpush1.bf16.msra.mxu0 %v2901
        %2924 = vmatprep.subr.bf16.mxu0 0
        %2925 = vmatpush2.bf16.msra.mxu0 0
        %2926 = vmatprep.subr.bf16.mxu0 0
        %2927 = vmatpush2.bf16.msra.mxu0 0
        %2928 = vmatprep.subr.bf16.mxu0 0
        %2929 = vmatpush2.bf16.msra.mxu0 0
        %2930 = vmatprep.subr.bf16.mxu0 0
        %2931 = vmatpush2.bf16.msra.mxu0 0
        %2932 = vmatprep.subr.bf16.mxu0 0
        %2933 = vmatpush2.bf16.msra.mxu0 0
        %2934 = vmatprep.subr.bf16.mxu0 0
        %2935 = vmatpush2.bf16.msra.mxu0 0
        %2936 = vmatprep.subr.bf16.mxu0 0
        %2937 = vmatpush2.bf16.msra.mxu0 0
        %2938 = vmatprep.subr.bf16.mxu0 0
        %2939 = vmatpush2.bf16.msra.mxu0 0
        %2940 = vmatprep.mubr.bf16.mxu0 0
        %2941 = vmatmul.mubr.bf16.gmra.mxu0 %v2906
        %v2942 = vpop.f32.mrf.mxu0
        %v2943 = vadd.f32 %v2892, %v2942
        %v2944 = vpop.f32.mrf.mxu0
        %v2945 = vpop.f32.mrf.mxu0
        %v2946 = vpop.f32.mrf.mxu0
        %2947 = vdwg.mxu0
        %2948 = vst [vmem:[%s702] sm:$0x1] %v2943
        %s2949 = sand.u32 %s533, 1
        %s2950 = scalar_lea.sflag [#allocation3], %s2949
        %s2951 = sand.u32 %s533, 1
        %s2952 = scalar_lea.vmem [#allocation2], %s2951
        // Predicated region
        $region113: #{tpu_custom_call.1} parent=111 // pred_check
          %p2953 = pneg %p543
        $region114: #{tpu_custom_call.1} parent=111 // pred_check_branch
          %2955 = sbr.rel (%p2953) target = $region116
        $region115: #{tpu_custom_call.1} parent=111 // pred_region
          %s2957 = ssub.s32 16, 16
          %2958 = vsyncadd %s2950, %s2957
          %s2959 = smul.addr %s37, 16
          %s2960 = scalar_lea.hbm %s23, %s2959
          %s2962 = sshll.u32 %s2952, 4
          %s2963 = int_to_ptr.vmem [resolvable:$true] %s2962
          %2965 = dma.vmem_to_hbm [thread:$0]  %s2963, 16, %s2960, %s2950
        $region116: #{tpu_custom_call.1} parent=111 // pred_fallthru
          _
      $region112: #{tpu_custom_call.1} parent=5 // pred_fallthru
        _
      %p2966 = scmp.le.s32.totalorder 2, %s32
      // Predicated region
      $region117: #{tpu_custom_call.1} parent=5 // pred_check
        %p2967 = pneg %p2966
      $region118: #{tpu_custom_call.1} parent=5 // pred_check_branch
        %2969 = sbr.rel (%p2967) target = $region120
      $region119: #{tpu_custom_call.1} parent=5 // pred_region
        %s2970 = ssub.s32 %s32, 2
        // Predicated region
        $region121: #{tpu_custom_call.1} parent=119 // pred_check
          %p2971 = pneg %p549
        $region122: #{tpu_custom_call.1} parent=119 // pred_check_branch
          %2973 = sbr.rel (%p2971) target = $region124
        $region123: #{tpu_custom_call.1} parent=119 // pred_region
          %s2974 = sand.u32 %s534, 1
          %s2975 = scalar_lea.sflag [#allocation3], %s2974
          %s2976 = sand.u32 %s534, 1
          %s2977 = scalar_lea.vmem [#allocation2], %s2976
          %2978 = dma.done %s2975, 16
        $region124: #{tpu_custom_call.1} parent=119 // pred_fallthru
          _
      $region120: #{tpu_custom_call.1} parent=5 // pred_fallthru
        _
    $region6: #{tpu_custom_call.1} parent=1 // loop_footer
      %s36 = sadd.s32 1, %s32
    $region7: #{tpu_custom_call.1} parent=1 // loop_footer_branch
      %31 = sbr.rel target = $region3
    $region8: #{tpu_custom_call.1} parent=1 // loop_exit
      _
    %2979 = vsyncpa [#allocation3], 1
    %s2980 = scalar_lea.sflag [#allocation3], 1
    %2981 = vsyncpa %s2980, 1

</llo_original>
